<compile_context>
chip_gen: v5e
topology: v5e:2x2
jax: 0.10.0
libtpu: 0.0.40
codegen_flags: <defaults>
</compile_context>

<pallas_src>
import functools

import jax
import jax.numpy as jnp
from jax import lax
from jax.experimental import pallas as pl
from jax.experimental.pallas import tpu as pltpu


# ----------------------------- fused layer kernel ----------------------------

def _basic_layer_kernel(*refs, n_blocks, has_proj, stride, h_out, w_out):
    """All basic blocks of one layer, fused, on NHWC data resident in VMEM.

    refs (in order):
      x        : (N, H+2, W+2, Cin)        zero-padded layer input
      per block b:
        w1 (9, Cin_b, Cout), b1 (1, Cout)  conv1 weight (BN1 scale folded), bias
        w2 (9, Cout,  Cout), b2 (1, Cout)  conv2 weight (BN2 scale folded), bias
        [ws (Cin_b, Cout), bs (1, Cout)]   projection shortcut (block 0 only)
      out      : (Cout, N*Ho*Wo)           lane-dense output slab
      pad_ref  : VMEM scratch (N, Ho+2, Wo+2, Cout)
    """
    x_ref = refs[0]
    o_ref, pad_ref = refs[-2], refs[-1]
    wrefs = refs[1:-2]

    n = x_ref.shape[0]
    c_in0 = x_ref.shape[-1]
    c_out = pad_ref.shape[-1]
    m = n * h_out * w_out

    # Zero the padded-activation scratch ONCE per layer; only its interior is
    # ever rewritten below, so the 1-pixel zero border persists for every conv.
    pad_ref[...] = jnp.zeros_like(pad_ref)

    def tap(src_ref, kh, kw, s):
        """(N, Ho, Wo, C) window of `src_ref` at tap offset (kh, kw), stride s.

        Stride-1 taps are plain static slices.  Strided taps keep the stride on
        the sublane (W) dim only — the canonical strided-load case — and handle
        the row (H) stride with a trivial major-dim reshape + static index.
        """
        if s == 1:
            return src_ref[:, kh:kh + h_out, kw:kw + w_out, :]
        t = src_ref[:, pl.ds(kh, s * h_out, 1), pl.ds(kw, w_out, s), :]
        return t.reshape(n, h_out, s, w_out, t.shape[-1])[:, :, 0, :, :]

    def conv3x3(src_ref, w_ref, b_ref, s, relu):
        """3x3 conv (+folded BN) as 9 accumulating MXU passes, one per tap.

        No im2col patch matrix and no lane-concat of sub-128-lane slices: each
        tap window is hit with its own (Cin, Cout) weight slab and accumulated
        in f32 on the MXU.
        """
        c_in = w_ref.shape[1]
        acc = None
        for kh in range(3):
            for kw in range(3):
                t = tap(src_ref, kh, kw, s).reshape(m, c_in)
                d = jnp.dot(t, w_ref[kh * 3 + kw],
                            preferred_element_type=jnp.float32)
                acc = d if acc is None else acc + d
        acc = acc + b_ref[...]
        return jnp.maximum(acc, 0.0) if relu else acc

    idx = 0
    res = None                       # previous block output, kept as a value
    for b in range(n_blocks):
        s = stride if b == 0 else 1
        src = x_ref if b == 0 else pad_ref

        w1, b1, w2, b2 = wrefs[idx:idx + 4]
        idx += 4
        if has_proj[b]:
            ws, bs = wrefs[idx:idx + 2]
            idx += 2

        # ---- shortcut branch: identity, or folded 1x1-conv+BN projection ----
        if b == 0:
            xs = tap(x_ref, 1, 1, s).reshape(m, c_in0)   # original x at stride s
        else:
            xs = res
        if has_proj[b]:
            sc = jnp.dot(xs, ws[...], preferred_element_type=jnp.float32) + bs[...]
        else:
            sc = xs                                      # Cin == Cout, s == 1

        # ---- conv1+bn1+relu -> conv2+bn2 -> +shortcut -> relu ---------------
        y1 = conv3x3(src, w1, b1, s, relu=True)                         # (M, Cout)
        pad_ref[:, 1:1 + h_out, 1:1 + w_out, :] = y1.reshape(n, h_out, w_out, c_out)
        y2 = conv3x3(pad_ref, w2, b2, 1, relu=False)                    # (M, Cout)
        res = jnp.maximum(y2 + sc, 0.0)

        if b + 1 < n_blocks:         # stage this block's output for the next conv1
            pad_ref[:, 1:1 + h_out, 1:1 + w_out, :] = res.reshape(n, h_out, w_out, c_out)

    # Lane-dense epilogue: (Cout, M) fills full 128-lane vregs, so the final
    # store / HBM writeback is unmasked instead of 8-of-128-lane vst.msk.
    o_ref[...] = jnp.transpose(res).astype(o_ref.dtype)


# ----------------------------- host-side glue --------------------------------

def _prep_conv3x3(p):
    """PyTorch (Cout,Cin,3,3) + folded BN -> (9, Cin, Cout) with the BN scale
    folded into the weight columns, plus a (1, Cout) bias."""
    wt = p["w"]
    c_out, c_in = wt.shape[0], wt.shape[1]
    wt = jnp.transpose(wt, (2, 3, 1, 0)).reshape(9, c_in, c_out)
    wt = wt * p["scale"][None, None, :]
    return wt, p["bias"].reshape(1, c_out)


def _prep_conv1x1(p):
    wt = p["w"]
    c_out, c_in = wt.shape[0], wt.shape[1]
    wt = jnp.transpose(wt.reshape(c_out, c_in), (1, 0)) * p["scale"][None, :]
    return wt, p["bias"].reshape(1, c_out)


def basic_layer_forward(layer_params, x_nchw):
    n, _, hh, ww = x_nchw.shape
    stride = layer_params[0]["stride"]
    out_c = layer_params[0]["out_c"]
    ksize, pad = 3, 1
    h_out = (hh + 2 * pad - ksize) // stride + 1
    w_out = (ww + 2 * pad - ksize) // stride + 1
    m = n * h_out * w_out

    # One-time host prep for the WHOLE layer (not per block): NCHW -> NHWC
    # (channels on lanes) and a single spatial zero-pad.  No phase-split copy.
    x = jnp.transpose(x_nchw, (0, 2, 3, 1))
    xp = jnp.pad(x, ((0, 0), (pad, pad), (pad, pad), (0, 0)))

    args = [xp]
    has_proj = []
    for p in layer_params:
        w1, b1 = _prep_conv3x3(p["conv1"])
        w2, b2 = _prep_conv3x3(p["conv2"])
        args += [w1, b1, w2, b2]
        if "shortcut" in p:
            ws, bs = _prep_conv1x1(p["shortcut"])
            args += [ws, bs]
        has_proj.append("shortcut" in p)

    kernel = functools.partial(
        _basic_layer_kernel, n_blocks=len(layer_params),
        has_proj=tuple(has_proj), stride=stride, h_out=h_out, w_out=w_out)

    # Whole layer = ONE pallas_call, grid=().  Everything (weights + activation
    # + scratch) is a few KiB, comfortably inside scoped VMEM on v5e/v6e/v7x.
    # At real ResNet sizes: add a "parallel" batch/row grid axis (2 TCs on v7x)
    # and switch MXU operands to bf16 (loosening the 1e-4 check accordingly).
    out_cm = pl.pallas_call(
        kernel,
        out_shape=jax.ShapeDtypeStruct((out_c, m), x_nchw.dtype),
        in_specs=[pl.BlockSpec(memory_space=pltpu.MemorySpace.VMEM)] * len(args),
        out_specs=pl.BlockSpec(memory_space=pltpu.MemorySpace.VMEM),
        scratch_shapes=[pltpu.VMEM((n, h_out + 2, w_out + 2, out_c), jnp.float32)],
    )(*args)

    # (Cout, N*Ho*Wo) -> NCHW; a trivial relayout of a few KiB in XLA.
    out = out_cm.reshape(out_c, n, h_out, w_out)
    return jnp.transpose(out, (1, 0, 2, 3))


# ----------------------------- parameter init --------------------------------

def fold_bn(gamma, beta, mean, var, eps=1e-5):
    scale = gamma / jnp.sqrt(var + eps)
    bias = beta - mean * scale
    return scale, bias


def init_conv_bn(key, in_c, out_c, ksize):
    k1, k2, k3, k4, k5 = jax.random.split(key, 5)
    fan_in = in_c * ksize * ksize
    w = jax.random.normal(k1, (out_c, in_c, ksize, ksize), jnp.float32) / jnp.sqrt(fan_in)
    gamma = 1.0 + 0.1 * jax.random.normal(k2, (out_c,), jnp.float32)
    beta = 0.1 * jax.random.normal(k3, (out_c,), jnp.float32)
    mean = 0.1 * jax.random.normal(k4, (out_c,), jnp.float32)
    var = 0.5 + jax.random.uniform(k5, (out_c,), jnp.float32)
    scale, bias = fold_bn(gamma, beta, mean, var)
    return {"w": w, "scale": scale, "bias": bias}


def init_basic_block(key, in_c, out_c, stride):
    k1, k2, k3 = jax.random.split(key, 3)
    p = {"conv1": init_conv_bn(k1, in_c, out_c, 3),
         "conv2": init_conv_bn(k2, out_c, out_c, 3),
         "stride": stride, "in_c": in_c, "out_c": out_c}
    if stride != 1 or in_c != out_c:
        p["shortcut"] = init_conv_bn(k3, in_c, out_c, 1)
    return p


def init_basic_layer(key, blockN, in_c, out_c, stride):
    keys = jax.random.split(key, blockN)
    blocks = [init_basic_block(keys[0], in_c, out_c, stride)]
    for i in range(1, blockN):
        blocks.append(init_basic_block(keys[i], out_c, out_c, 1))
    return blocks


# ----------------------------- pure-JAX reference ----------------------------

def _ref_conv_bn(x_nhwc, w_oihw, scale, bias, stride, padding):
    w_hwio = jnp.transpose(w_oihw, (2, 3, 1, 0))
    y = lax.conv_general_dilated(
        x_nhwc, w_hwio, window_strides=(stride, stride),
        padding=[(padding, padding), (padding, padding)],
        dimension_numbers=("NHWC", "HWIO", "NHWC"),
        precision=lax.Precision.HIGHEST)
    return y * scale + bias


def _ref_block(params, x_nhwc):
    c1, c2, s = params["conv1"], params["conv2"], params["stride"]
    y = jnp.maximum(_ref_conv_bn(x_nhwc, c1["w"], c1["scale"], c1["bias"], s, 1), 0.0)
    y = _ref_conv_bn(y, c2["w"], c2["scale"], c2["bias"], 1, 1)
    if "shortcut" in params:
        sc = params["shortcut"]
        short = _ref_conv_bn(x_nhwc, sc["w"], sc["scale"], sc["bias"], s, 0)
    else:
        short = x_nhwc
    return jnp.maximum(y + short, 0.0)


def _ref_layer(layer_params, x_nchw):
    x = jnp.transpose(x_nchw, (0, 2, 3, 1))
    for bp in layer_params:
        x = _ref_block(bp, x)
    return jnp.transpose(x, (0, 3, 1, 2))


# ---------------------------------- main -------------------------------------

if __name__ == "__main__":
    key = jax.random.PRNGKey(0)
    kx, kp = jax.random.split(key)

    # BasicLayer(BasicBlock, blockN=2, inCHN=4, outCHN=8, stride=2)
    batch, in_c, out_c, H, W = 2, 4, 8, 16, 16
    blockN, stride = 2, 2

    x = jax.random.normal(kx, (batch, in_c, H, W), jnp.float32)   # NCHW like PyTorch
    layer_params = init_basic_layer(kp, blockN, in_c, out_c, stride)

    fwd = jax.jit(lambda xx: basic_layer_forward(layer_params, xx))
    out = jax.block_until_ready(fwd(x))

    ref = _ref_layer(layer_params, x)
    assert out.shape == (batch, out_c, H // stride, W // stride), out.shape
    err = float(jnp.max(jnp.abs(out - ref)))
    assert jnp.allclose(out, ref, atol=1e-4, rtol=1e-4), err

    print("KERNEL_OK")
</pallas_src>

<mosaic_0001>
module attributes {stable_mosaic.version = 11 : i64} {
  func.func @_basic_layer_kernel(%arg0: memref<2x18x18x4xf32, #tpu.memory_space<vmem>>, %arg1: memref<9x4x8xf32, #tpu.memory_space<vmem>>, %arg2: memref<1x8xf32, #tpu.memory_space<vmem>>, %arg3: memref<9x8x8xf32, #tpu.memory_space<vmem>>, %arg4: memref<1x8xf32, #tpu.memory_space<vmem>>, %arg5: memref<4x8xf32, #tpu.memory_space<vmem>>, %arg6: memref<1x8xf32, #tpu.memory_space<vmem>>, %arg7: memref<9x8x8xf32, #tpu.memory_space<vmem>>, %arg8: memref<1x8xf32, #tpu.memory_space<vmem>>, %arg9: memref<9x8x8xf32, #tpu.memory_space<vmem>>, %arg10: memref<1x8xf32, #tpu.memory_space<vmem>>, %arg11: memref<8x128xf32, #tpu.memory_space<vmem>>, %arg12: memref<2x10x10x8xf32, #tpu.memory_space<vmem>>) attributes {dimension_semantics = [], scalar_prefetch = 0 : i64, scratch_operands = 1 : i64, tpu.core_type = #tpu.core_type<tc>} {
    %cst = arith.constant 0.000000e+00 : f32
    %0 = vector.broadcast %cst : f32 to vector<2x10x10x8xf32>
    %c0 = arith.constant 0 : index
    %c0_0 = arith.constant 0 : index
    %c0_1 = arith.constant 0 : index
    %c0_2 = arith.constant 0 : index
    %1 = vector.load %arg12[%c0, %c0_0, %c0_1, %c0_2] : memref<2x10x10x8xf32, #tpu.memory_space<vmem>>, vector<2x10x10x8xf32>
    tpu.vector_store %arg12[%c0, %c0_0, %c0_1, %c0_2], %0 {strides = array<i32>} : memref<2x10x10x8xf32, #tpu.memory_space<vmem>>, vector<2x10x10x8xf32>,
    %c0_3 = arith.constant 0 : index
    %c1 = arith.constant 1 : index
    %c1_4 = arith.constant 1 : index
    %c0_5 = arith.constant 0 : index
    %2 = tpu.strided_load %arg0[%c0_3, %c1, %c1_4, %c0_5] {strides = array<i32: 1, 1, 2, 1>} : memref<2x18x18x4xf32, #tpu.memory_space<vmem>>, vector<2x16x8x4xf32>
    %3 = vector.shape_cast %2 : vector<2x16x8x4xf32> to vector<2x8x2x8x4xf32>
    %4 = vector.extract_strided_slice %3 {offsets = [0, 0, 0, 0, 0], sizes = [2, 8, 1, 8, 4], strides = [1, 1, 1, 1, 1]} : vector<2x8x2x8x4xf32> to vector<2x8x1x8x4xf32>
    %5 = vector.shape_cast %4 : vector<2x8x1x8x4xf32> to vector<2x8x8x4xf32>
    %6 = vector.shape_cast %5 : vector<2x8x8x4xf32> to vector<128x4xf32>
    %c0_6 = arith.constant 0 : index
    %c0_7 = arith.constant 0 : index
    %7 = vector.load %arg5[%c0_6, %c0_7] : memref<4x8xf32, #tpu.memory_space<vmem>>, vector<4x8xf32>
    %cst_8 = arith.constant dense<0.000000e+00> : vector<128x8xf32>
    %8 = tpu.matmul %6, %7, %cst_8 {dimension_numbers = #tpu.dot_dimension_numbers<[1], [0], [0], [1], [0, 0, 1, 1], [], []>} : vector<128x4xf32>, vector<4x8xf32>, vector<128x8xf32> -> vector<128x8xf32>
    %c0_9 = arith.constant 0 : index
    %c0_10 = arith.constant 0 : index
    %9 = vector.load %arg6[%c0_9, %c0_10] : memref<1x8xf32, #tpu.memory_space<vmem>>, vector<1x8xf32>
    %10 = vector.broadcast %9 : vector<1x8xf32> to vector<128x8xf32>
    %11 = arith.addf %8, %10 : vector<128x8xf32>
    %c0_11 = arith.constant 0 : index
    %c0_12 = arith.constant 0 : index
    %c0_13 = arith.constant 0 : index
    %c0_14 = arith.constant 0 : index
    %12 = tpu.strided_load %arg0[%c0_11, %c0_12, %c0_13, %c0_14] {strides = array<i32: 1, 1, 2, 1>} : memref<2x18x18x4xf32, #tpu.memory_space<vmem>>, vector<2x16x8x4xf32>
    %13 = vector.shape_cast %12 : vector<2x16x8x4xf32> to vector<2x8x2x8x4xf32>
    %14 = vector.extract_strided_slice %13 {offsets = [0, 0, 0, 0, 0], sizes = [2, 8, 1, 8, 4], strides = [1, 1, 1, 1, 1]} : vector<2x8x2x8x4xf32> to vector<2x8x1x8x4xf32>
    %15 = vector.shape_cast %14 : vector<2x8x1x8x4xf32> to vector<2x8x8x4xf32>
    %16 = vector.shape_cast %15 : vector<2x8x8x4xf32> to vector<128x4xf32>
    %c0_15 = arith.constant 0 : index
    %c0_16 = arith.constant 0 : index
    %c0_17 = arith.constant 0 : index
    %17 = vector.load %arg1[%c0_15, %c0_16, %c0_17] : memref<9x4x8xf32, #tpu.memory_space<vmem>>, vector<1x4x8xf32>
    %18 = vector.shape_cast %17 : vector<1x4x8xf32> to vector<4x8xf32>
    %cst_18 = arith.constant dense<0.000000e+00> : vector<128x8xf32>
    %19 = tpu.matmul %16, %18, %cst_18 {dimension_numbers = #tpu.dot_dimension_numbers<[1], [0], [0], [1], [0, 0, 1, 1], [], []>} : vector<128x4xf32>, vector<4x8xf32>, vector<128x8xf32> -> vector<128x8xf32>
    %c0_19 = arith.constant 0 : index
    %c0_20 = arith.constant 0 : index
    %c1_21 = arith.constant 1 : index
    %c0_22 = arith.constant 0 : index
    %20 = tpu.strided_load %arg0[%c0_19, %c0_20, %c1_21, %c0_22] {strides = array<i32: 1, 1, 2, 1>} : memref<2x18x18x4xf32, #tpu.memory_space<vmem>>, vector<2x16x8x4xf32>
    %21 = vector.shape_cast %20 : vector<2x16x8x4xf32> to vector<2x8x2x8x4xf32>
    %22 = vector.extract_strided_slice %21 {offsets = [0, 0, 0, 0, 0], sizes = [2, 8, 1, 8, 4], strides = [1, 1, 1, 1, 1]} : vector<2x8x2x8x4xf32> to vector<2x8x1x8x4xf32>
    %23 = vector.shape_cast %22 : vector<2x8x1x8x4xf32> to vector<2x8x8x4xf32>
    %24 = vector.shape_cast %23 : vector<2x8x8x4xf32> to vector<128x4xf32>
    %c1_23 = arith.constant 1 : index
    %c0_24 = arith.constant 0 : index
    %c0_25 = arith.constant 0 : index
    %25 = vector.load %arg1[%c1_23, %c0_24, %c0_25] : memref<9x4x8xf32, #tpu.memory_space<vmem>>, vector<1x4x8xf32>
    %26 = vector.shape_cast %25 : vector<1x4x8xf32> to vector<4x8xf32>
    %cst_26 = arith.constant dense<0.000000e+00> : vector<128x8xf32>
    %27 = tpu.matmul %24, %26, %cst_26 {dimension_numbers = #tpu.dot_dimension_numbers<[1], [0], [0], [1], [0, 0, 1, 1], [], []>} : vector<128x4xf32>, vector<4x8xf32>, vector<128x8xf32> -> vector<128x8xf32>
    %28 = arith.addf %19, %27 : vector<128x8xf32>
    %c0_27 = arith.constant 0 : index
    %c0_28 = arith.constant 0 : index
    %c2 = arith.constant 2 : index
    %c0_29 = arith.constant 0 : index
    %29 = tpu.strided_load %arg0[%c0_27, %c0_28, %c2, %c0_29] {strides = array<i32: 1, 1, 2, 1>} : memref<2x18x18x4xf32, #tpu.memory_space<vmem>>, vector<2x16x8x4xf32>
    %30 = vector.shape_cast %29 : vector<2x16x8x4xf32> to vector<2x8x2x8x4xf32>
    %31 = vector.extract_strided_slice %30 {offsets = [0, 0, 0, 0, 0], sizes = [2, 8, 1, 8, 4], strides = [1, 1, 1, 1, 1]} : vector<2x8x2x8x4xf32> to vector<2x8x1x8x4xf32>
    %32 = vector.shape_cast %31 : vector<2x8x1x8x4xf32> to vector<2x8x8x4xf32>
    %33 = vector.shape_cast %32 : vector<2x8x8x4xf32> to vector<128x4xf32>
    %c2_30 = arith.constant 2 : index
    %c0_31 = arith.constant 0 : index
    %c0_32 = arith.constant 0 : index
    %34 = vector.load %arg1[%c2_30, %c0_31, %c0_32] : memref<9x4x8xf32, #tpu.memory_space<vmem>>, vector<1x4x8xf32>
    %35 = vector.shape_cast %34 : vector<1x4x8xf32> to vector<4x8xf32>
    %cst_33 = arith.constant dense<0.000000e+00> : vector<128x8xf32>
    %36 = tpu.matmul %33, %35, %cst_33 {dimension_numbers = #tpu.dot_dimension_numbers<[1], [0], [0], [1], [0, 0, 1, 1], [], []>} : vector<128x4xf32>, vector<4x8xf32>, vector<128x8xf32> -> vector<128x8xf32>
    %37 = arith.addf %28, %36 : vector<128x8xf32>
    %c0_34 = arith.constant 0 : index
    %c1_35 = arith.constant 1 : index
    %c0_36 = arith.constant 0 : index
    %c0_37 = arith.constant 0 : index
    %38 = tpu.strided_load %arg0[%c0_34, %c1_35, %c0_36, %c0_37] {strides = array<i32: 1, 1, 2, 1>} : memref<2x18x18x4xf32, #tpu.memory_space<vmem>>, vector<2x16x8x4xf32>
    %39 = vector.shape_cast %38 : vector<2x16x8x4xf32> to vector<2x8x2x8x4xf32>
    %40 = vector.extract_strided_slice %39 {offsets = [0, 0, 0, 0, 0], sizes = [2, 8, 1, 8, 4], strides = [1, 1, 1, 1, 1]} : vector<2x8x2x8x4xf32> to vector<2x8x1x8x4xf32>
    %41 = vector.shape_cast %40 : vector<2x8x1x8x4xf32> to vector<2x8x8x4xf32>
    %42 = vector.shape_cast %41 : vector<2x8x8x4xf32> to vector<128x4xf32>
    %c3 = arith.constant 3 : index
    %c0_38 = arith.constant 0 : index
    %c0_39 = arith.constant 0 : index
    %43 = vector.load %arg1[%c3, %c0_38, %c0_39] : memref<9x4x8xf32, #tpu.memory_space<vmem>>, vector<1x4x8xf32>
    %44 = vector.shape_cast %43 : vector<1x4x8xf32> to vector<4x8xf32>
    %cst_40 = arith.constant dense<0.000000e+00> : vector<128x8xf32>
    %45 = tpu.matmul %42, %44, %cst_40 {dimension_numbers = #tpu.dot_dimension_numbers<[1], [0], [0], [1], [0, 0, 1, 1], [], []>} : vector<128x4xf32>, vector<4x8xf32>, vector<128x8xf32> -> vector<128x8xf32>
    %46 = arith.addf %37, %45 : vector<128x8xf32>
    %c0_41 = arith.constant 0 : index
    %c1_42 = arith.constant 1 : index
    %c1_43 = arith.constant 1 : index
    %c0_44 = arith.constant 0 : index
    %47 = tpu.strided_load %arg0[%c0_41, %c1_42, %c1_43, %c0_44] {strides = array<i32: 1, 1, 2, 1>} : memref<2x18x18x4xf32, #tpu.memory_space<vmem>>, vector<2x16x8x4xf32>
    %48 = vector.shape_cast %47 : vector<2x16x8x4xf32> to vector<2x8x2x8x4xf32>
    %49 = vector.extract_strided_slice %48 {offsets = [0, 0, 0, 0, 0], sizes = [2, 8, 1, 8, 4], strides = [1, 1, 1, 1, 1]} : vector<2x8x2x8x4xf32> to vector<2x8x1x8x4xf32>
    %50 = vector.shape_cast %49 : vector<2x8x1x8x4xf32> to vector<2x8x8x4xf32>
    %51 = vector.shape_cast %50 : vector<2x8x8x4xf32> to vector<128x4xf32>
    %c4 = arith.constant 4 : index
    %c0_45 = arith.constant 0 : index
    %c0_46 = arith.constant 0 : index
    %52 = vector.load %arg1[%c4, %c0_45, %c0_46] : memref<9x4x8xf32, #tpu.memory_space<vmem>>, vector<1x4x8xf32>
    %53 = vector.shape_cast %52 : vector<1x4x8xf32> to vector<4x8xf32>
    %cst_47 = arith.constant dense<0.000000e+00> : vector<128x8xf32>
    %54 = tpu.matmul %51, %53, %cst_47 {dimension_numbers = #tpu.dot_dimension_numbers<[1], [0], [0], [1], [0, 0, 1, 1], [], []>} : vector<128x4xf32>, vector<4x8xf32>, vector<128x8xf32> -> vector<128x8xf32>
    %55 = arith.addf %46, %54 : vector<128x8xf32>
    %c0_48 = arith.constant 0 : index
    %c1_49 = arith.constant 1 : index
    %c2_50 = arith.constant 2 : index
    %c0_51 = arith.constant 0 : index
    %56 = tpu.strided_load %arg0[%c0_48, %c1_49, %c2_50, %c0_51] {strides = array<i32: 1, 1, 2, 1>} : memref<2x18x18x4xf32, #tpu.memory_space<vmem>>, vector<2x16x8x4xf32>
    %57 = vector.shape_cast %56 : vector<2x16x8x4xf32> to vector<2x8x2x8x4xf32>
    %58 = vector.extract_strided_slice %57 {offsets = [0, 0, 0, 0, 0], sizes = [2, 8, 1, 8, 4], strides = [1, 1, 1, 1, 1]} : vector<2x8x2x8x4xf32> to vector<2x8x1x8x4xf32>
    %59 = vector.shape_cast %58 : vector<2x8x1x8x4xf32> to vector<2x8x8x4xf32>
    %60 = vector.shape_cast %59 : vector<2x8x8x4xf32> to vector<128x4xf32>
    %c5 = arith.constant 5 : index
    %c0_52 = arith.constant 0 : index
    %c0_53 = arith.constant 0 : index
    %61 = vector.load %arg1[%c5, %c0_52, %c0_53] : memref<9x4x8xf32, #tpu.memory_space<vmem>>, vector<1x4x8xf32>
    %62 = vector.shape_cast %61 : vector<1x4x8xf32> to vector<4x8xf32>
    %cst_54 = arith.constant dense<0.000000e+00> : vector<128x8xf32>
    %63 = tpu.matmul %60, %62, %cst_54 {dimension_numbers = #tpu.dot_dimension_numbers<[1], [0], [0], [1], [0, 0, 1, 1], [], []>} : vector<128x4xf32>, vector<4x8xf32>, vector<128x8xf32> -> vector<128x8xf32>
    %64 = arith.addf %55, %63 : vector<128x8xf32>
    %c0_55 = arith.constant 0 : index
    %c2_56 = arith.constant 2 : index
    %c0_57 = arith.constant 0 : index
    %c0_58 = arith.constant 0 : index
    %65 = tpu.strided_load %arg0[%c0_55, %c2_56, %c0_57, %c0_58] {strides = array<i32: 1, 1, 2, 1>} : memref<2x18x18x4xf32, #tpu.memory_space<vmem>>, vector<2x16x8x4xf32>
    %66 = vector.shape_cast %65 : vector<2x16x8x4xf32> to vector<2x8x2x8x4xf32>
    %67 = vector.extract_strided_slice %66 {offsets = [0, 0, 0, 0, 0], sizes = [2, 8, 1, 8, 4], strides = [1, 1, 1, 1, 1]} : vector<2x8x2x8x4xf32> to vector<2x8x1x8x4xf32>
    %68 = vector.shape_cast %67 : vector<2x8x1x8x4xf32> to vector<2x8x8x4xf32>
    %69 = vector.shape_cast %68 : vector<2x8x8x4xf32> to vector<128x4xf32>
    %c6 = arith.constant 6 : index
    %c0_59 = arith.constant 0 : index
    %c0_60 = arith.constant 0 : index
    %70 = vector.load %arg1[%c6, %c0_59, %c0_60] : memref<9x4x8xf32, #tpu.memory_space<vmem>>, vector<1x4x8xf32>
    %71 = vector.shape_cast %70 : vector<1x4x8xf32> to vector<4x8xf32>
    %cst_61 = arith.constant dense<0.000000e+00> : vector<128x8xf32>
    %72 = tpu.matmul %69, %71, %cst_61 {dimension_numbers = #tpu.dot_dimension_numbers<[1], [0], [0], [1], [0, 0, 1, 1], [], []>} : vector<128x4xf32>, vector<4x8xf32>, vector<128x8xf32> -> vector<128x8xf32>
    %73 = arith.addf %64, %72 : vector<128x8xf32>
    %c0_62 = arith.constant 0 : index
    %c2_63 = arith.constant 2 : index
    %c1_64 = arith.constant 1 : index
    %c0_65 = arith.constant 0 : index
    %74 = tpu.strided_load %arg0[%c0_62, %c2_63, %c1_64, %c0_65] {strides = array<i32: 1, 1, 2, 1>} : memref<2x18x18x4xf32, #tpu.memory_space<vmem>>, vector<2x16x8x4xf32>
    %75 = vector.shape_cast %74 : vector<2x16x8x4xf32> to vector<2x8x2x8x4xf32>
    %76 = vector.extract_strided_slice %75 {offsets = [0, 0, 0, 0, 0], sizes = [2, 8, 1, 8, 4], strides = [1, 1, 1, 1, 1]} : vector<2x8x2x8x4xf32> to vector<2x8x1x8x4xf32>
    %77 = vector.shape_cast %76 : vector<2x8x1x8x4xf32> to vector<2x8x8x4xf32>
    %78 = vector.shape_cast %77 : vector<2x8x8x4xf32> to vector<128x4xf32>
    %c7 = arith.constant 7 : index
    %c0_66 = arith.constant 0 : index
    %c0_67 = arith.constant 0 : index
    %79 = vector.load %arg1[%c7, %c0_66, %c0_67] : memref<9x4x8xf32, #tpu.memory_space<vmem>>, vector<1x4x8xf32>
    %80 = vector.shape_cast %79 : vector<1x4x8xf32> to vector<4x8xf32>
    %cst_68 = arith.constant dense<0.000000e+00> : vector<128x8xf32>
    %81 = tpu.matmul %78, %80, %cst_68 {dimension_numbers = #tpu.dot_dimension_numbers<[1], [0], [0], [1], [0, 0, 1, 1], [], []>} : vector<128x4xf32>, vector<4x8xf32>, vector<128x8xf32> -> vector<128x8xf32>
    %82 = arith.addf %73, %81 : vector<128x8xf32>
    %c0_69 = arith.constant 0 : index
    %c2_70 = arith.constant 2 : index
    %c2_71 = arith.constant 2 : index
    %c0_72 = arith.constant 0 : index
    %83 = tpu.strided_load %arg0[%c0_69, %c2_70, %c2_71, %c0_72] {strides = array<i32: 1, 1, 2, 1>} : memref<2x18x18x4xf32, #tpu.memory_space<vmem>>, vector<2x16x8x4xf32>
    %84 = vector.shape_cast %83 : vector<2x16x8x4xf32> to vector<2x8x2x8x4xf32>
    %85 = vector.extract_strided_slice %84 {offsets = [0, 0, 0, 0, 0], sizes = [2, 8, 1, 8, 4], strides = [1, 1, 1, 1, 1]} : vector<2x8x2x8x4xf32> to vector<2x8x1x8x4xf32>
    %86 = vector.shape_cast %85 : vector<2x8x1x8x4xf32> to vector<2x8x8x4xf32>
    %87 = vector.shape_cast %86 : vector<2x8x8x4xf32> to vector<128x4xf32>
    %c8 = arith.constant 8 : index
    %c0_73 = arith.constant 0 : index
    %c0_74 = arith.constant 0 : index
    %88 = vector.load %arg1[%c8, %c0_73, %c0_74] : memref<9x4x8xf32, #tpu.memory_space<vmem>>, vector<1x4x8xf32>
    %89 = vector.shape_cast %88 : vector<1x4x8xf32> to vector<4x8xf32>
    %cst_75 = arith.constant dense<0.000000e+00> : vector<128x8xf32>
    %90 = tpu.matmul %87, %89, %cst_75 {dimension_numbers = #tpu.dot_dimension_numbers<[1], [0], [0], [1], [0, 0, 1, 1], [], []>} : vector<128x4xf32>, vector<4x8xf32>, vector<128x8xf32> -> vector<128x8xf32>
    %91 = arith.addf %82, %90 : vector<128x8xf32>
    %c0_76 = arith.constant 0 : index
    %c0_77 = arith.constant 0 : index
    %92 = vector.load %arg2[%c0_76, %c0_77] : memref<1x8xf32, #tpu.memory_space<vmem>>, vector<1x8xf32>
    %93 = vector.broadcast %92 : vector<1x8xf32> to vector<128x8xf32>
    %94 = arith.addf %91, %93 : vector<128x8xf32>
    %cst_78 = arith.constant 0.000000e+00 : f32
    %95 = vector.broadcast %cst_78 : f32 to vector<128x8xf32>
    %96 = arith.maximumf %94, %95 : vector<128x8xf32>
    %97 = vector.shape_cast %96 : vector<128x8xf32> to vector<2x8x8x8xf32>
    %c0_79 = arith.constant 0 : index
    %c1_80 = arith.constant 1 : index
    %c1_81 = arith.constant 1 : index
    %c0_82 = arith.constant 0 : index
    %98 = vector.load %arg12[%c0_79, %c1_80, %c1_81, %c0_82] : memref<2x10x10x8xf32, #tpu.memory_space<vmem>>, vector<2x8x8x8xf32>
    tpu.vector_store %arg12[%c0_79, %c1_80, %c1_81, %c0_82], %97 {strides = array<i32>} : memref<2x10x10x8xf32, #tpu.memory_space<vmem>>, vector<2x8x8x8xf32>,
    %c0_83 = arith.constant 0 : index
    %c0_84 = arith.constant 0 : index
    %c0_85 = arith.constant 0 : index
    %c0_86 = arith.constant 0 : index
    %99 = vector.load %arg12[%c0_83, %c0_84, %c0_85, %c0_86] : memref<2x10x10x8xf32, #tpu.memory_space<vmem>>, vector<2x8x8x8xf32>
    %100 = vector.shape_cast %99 : vector<2x8x8x8xf32> to vector<128x8xf32>
    %c0_87 = arith.constant 0 : index
    %c0_88 = arith.constant 0 : index
    %c0_89 = arith.constant 0 : index
    %101 = vector.load %arg3[%c0_87, %c0_88, %c0_89] : memref<9x8x8xf32, #tpu.memory_space<vmem>>, vector<1x8x8xf32>
    %102 = vector.shape_cast %101 : vector<1x8x8xf32> to vector<8x8xf32>
    %cst_90 = arith.constant dense<0.000000e+00> : vector<128x8xf32>
    %103 = tpu.matmul %100, %102, %cst_90 {dimension_numbers = #tpu.dot_dimension_numbers<[1], [0], [0], [1], [0, 0, 1, 1], [], []>} : vector<128x8xf32>, vector<8x8xf32>, vector<128x8xf32> -> vector<128x8xf32>
    %c0_91 = arith.constant 0 : index
    %c0_92 = arith.constant 0 : index
    %c1_93 = arith.constant 1 : index
    %c0_94 = arith.constant 0 : index
    %104 = vector.load %arg12[%c0_91, %c0_92, %c1_93, %c0_94] : memref<2x10x10x8xf32, #tpu.memory_space<vmem>>, vector<2x8x8x8xf32>
    %105 = vector.shape_cast %104 : vector<2x8x8x8xf32> to vector<128x8xf32>
    %c1_95 = arith.constant 1 : index
    %c0_96 = arith.constant 0 : index
    %c0_97 = arith.constant 0 : index
    %106 = vector.load %arg3[%c1_95, %c0_96, %c0_97] : memref<9x8x8xf32, #tpu.memory_space<vmem>>, vector<1x8x8xf32>
    %107 = vector.shape_cast %106 : vector<1x8x8xf32> to vector<8x8xf32>
    %cst_98 = arith.constant dense<0.000000e+00> : vector<128x8xf32>
    %108 = tpu.matmul %105, %107, %cst_98 {dimension_numbers = #tpu.dot_dimension_numbers<[1], [0], [0], [1], [0, 0, 1, 1], [], []>} : vector<128x8xf32>, vector<8x8xf32>, vector<128x8xf32> -> vector<128x8xf32>
    %109 = arith.addf %103, %108 : vector<128x8xf32>
    %c0_99 = arith.constant 0 : index
    %c0_100 = arith.constant 0 : index
    %c2_101 = arith.constant 2 : index
    %c0_102 = arith.constant 0 : index
    %110 = vector.load %arg12[%c0_99, %c0_100, %c2_101, %c0_102] : memref<2x10x10x8xf32, #tpu.memory_space<vmem>>, vector<2x8x8x8xf32>
    %111 = vector.shape_cast %110 : vector<2x8x8x8xf32> to vector<128x8xf32>
    %c2_103 = arith.constant 2 : index
    %c0_104 = arith.constant 0 : index
    %c0_105 = arith.constant 0 : index
    %112 = vector.load %arg3[%c2_103, %c0_104, %c0_105] : memref<9x8x8xf32, #tpu.memory_space<vmem>>, vector<1x8x8xf32>
    %113 = vector.shape_cast %112 : vector<1x8x8xf32> to vector<8x8xf32>
    %cst_106 = arith.constant dense<0.000000e+00> : vector<128x8xf32>
    %114 = tpu.matmul %111, %113, %cst_106 {dimension_numbers = #tpu.dot_dimension_numbers<[1], [0], [0], [1], [0, 0, 1, 1], [], []>} : vector<128x8xf32>, vector<8x8xf32>, vector<128x8xf32> -> vector<128x8xf32>
    %115 = arith.addf %109, %114 : vector<128x8xf32>
    %c0_107 = arith.constant 0 : index
    %c1_108 = arith.constant 1 : index
    %c0_109 = arith.constant 0 : index
    %c0_110 = arith.constant 0 : index
    %116 = vector.load %arg12[%c0_107, %c1_108, %c0_109, %c0_110] : memref<2x10x10x8xf32, #tpu.memory_space<vmem>>, vector<2x8x8x8xf32>
    %117 = vector.shape_cast %116 : vector<2x8x8x8xf32> to vector<128x8xf32>
    %c3_111 = arith.constant 3 : index
    %c0_112 = arith.constant 0 : index
    %c0_113 = arith.constant 0 : index
    %118 = vector.load %arg3[%c3_111, %c0_112, %c0_113] : memref<9x8x8xf32, #tpu.memory_space<vmem>>, vector<1x8x8xf32>
    %119 = vector.shape_cast %118 : vector<1x8x8xf32> to vector<8x8xf32>
    %cst_114 = arith.constant dense<0.000000e+00> : vector<128x8xf32>
    %120 = tpu.matmul %117, %119, %cst_114 {dimension_numbers = #tpu.dot_dimension_numbers<[1], [0], [0], [1], [0, 0, 1, 1], [], []>} : vector<128x8xf32>, vector<8x8xf32>, vector<128x8xf32> -> vector<128x8xf32>
    %121 = arith.addf %115, %120 : vector<128x8xf32>
    %c0_115 = arith.constant 0 : index
    %c1_116 = arith.constant 1 : index
    %c1_117 = arith.constant 1 : index
    %c0_118 = arith.constant 0 : index
    %122 = vector.load %arg12[%c0_115, %c1_116, %c1_117, %c0_118] : memref<2x10x10x8xf32, #tpu.memory_space<vmem>>, vector<2x8x8x8xf32>
    %123 = vector.shape_cast %122 : vector<2x8x8x8xf32> to vector<128x8xf32>
    %c4_119 = arith.constant 4 : index
    %c0_120 = arith.constant 0 : index
    %c0_121 = arith.constant 0 : index
    %124 = vector.load %arg3[%c4_119, %c0_120, %c0_121] : memref<9x8x8xf32, #tpu.memory_space<vmem>>, vector<1x8x8xf32>
    %125 = vector.shape_cast %124 : vector<1x8x8xf32> to vector<8x8xf32>
    %cst_122 = arith.constant dense<0.000000e+00> : vector<128x8xf32>
    %126 = tpu.matmul %123, %125, %cst_122 {dimension_numbers = #tpu.dot_dimension_numbers<[1], [0], [0], [1], [0, 0, 1, 1], [], []>} : vector<128x8xf32>, vector<8x8xf32>, vector<128x8xf32> -> vector<128x8xf32>
    %127 = arith.addf %121, %126 : vector<128x8xf32>
    %c0_123 = arith.constant 0 : index
    %c1_124 = arith.constant 1 : index
    %c2_125 = arith.constant 2 : index
    %c0_126 = arith.constant 0 : index
    %128 = vector.load %arg12[%c0_123, %c1_124, %c2_125, %c0_126] : memref<2x10x10x8xf32, #tpu.memory_space<vmem>>, vector<2x8x8x8xf32>
    %129 = vector.shape_cast %128 : vector<2x8x8x8xf32> to vector<128x8xf32>
    %c5_127 = arith.constant 5 : index
    %c0_128 = arith.constant 0 : index
    %c0_129 = arith.constant 0 : index
    %130 = vector.load %arg3[%c5_127, %c0_128, %c0_129] : memref<9x8x8xf32, #tpu.memory_space<vmem>>, vector<1x8x8xf32>
    %131 = vector.shape_cast %130 : vector<1x8x8xf32> to vector<8x8xf32>
    %cst_130 = arith.constant dense<0.000000e+00> : vector<128x8xf32>
    %132 = tpu.matmul %129, %131, %cst_130 {dimension_numbers = #tpu.dot_dimension_numbers<[1], [0], [0], [1], [0, 0, 1, 1], [], []>} : vector<128x8xf32>, vector<8x8xf32>, vector<128x8xf32> -> vector<128x8xf32>
    %133 = arith.addf %127, %132 : vector<128x8xf32>
    %c0_131 = arith.constant 0 : index
    %c2_132 = arith.constant 2 : index
    %c0_133 = arith.constant 0 : index
    %c0_134 = arith.constant 0 : index
    %134 = vector.load %arg12[%c0_131, %c2_132, %c0_133, %c0_134] : memref<2x10x10x8xf32, #tpu.memory_space<vmem>>, vector<2x8x8x8xf32>
    %135 = vector.shape_cast %134 : vector<2x8x8x8xf32> to vector<128x8xf32>
    %c6_135 = arith.constant 6 : index
    %c0_136 = arith.constant 0 : index
    %c0_137 = arith.constant 0 : index
    %136 = vector.load %arg3[%c6_135, %c0_136, %c0_137] : memref<9x8x8xf32, #tpu.memory_space<vmem>>, vector<1x8x8xf32>
    %137 = vector.shape_cast %136 : vector<1x8x8xf32> to vector<8x8xf32>
    %cst_138 = arith.constant dense<0.000000e+00> : vector<128x8xf32>
    %138 = tpu.matmul %135, %137, %cst_138 {dimension_numbers = #tpu.dot_dimension_numbers<[1], [0], [0], [1], [0, 0, 1, 1], [], []>} : vector<128x8xf32>, vector<8x8xf32>, vector<128x8xf32> -> vector<128x8xf32>
    %139 = arith.addf %133, %138 : vector<128x8xf32>
    %c0_139 = arith.constant 0 : index
    %c2_140 = arith.constant 2 : index
    %c1_141 = arith.constant 1 : index
    %c0_142 = arith.constant 0 : index
    %140 = vector.load %arg12[%c0_139, %c2_140, %c1_141, %c0_142] : memref<2x10x10x8xf32, #tpu.memory_space<vmem>>, vector<2x8x8x8xf32>
    %141 = vector.shape_cast %140 : vector<2x8x8x8xf32> to vector<128x8xf32>
    %c7_143 = arith.constant 7 : index
    %c0_144 = arith.constant 0 : index
    %c0_145 = arith.constant 0 : index
    %142 = vector.load %arg3[%c7_143, %c0_144, %c0_145] : memref<9x8x8xf32, #tpu.memory_space<vmem>>, vector<1x8x8xf32>
    %143 = vector.shape_cast %142 : vector<1x8x8xf32> to vector<8x8xf32>
    %cst_146 = arith.constant dense<0.000000e+00> : vector<128x8xf32>
    %144 = tpu.matmul %141, %143, %cst_146 {dimension_numbers = #tpu.dot_dimension_numbers<[1], [0], [0], [1], [0, 0, 1, 1], [], []>} : vector<128x8xf32>, vector<8x8xf32>, vector<128x8xf32> -> vector<128x8xf32>
    %145 = arith.addf %139, %144 : vector<128x8xf32>
    %c0_147 = arith.constant 0 : index
    %c2_148 = arith.constant 2 : index
    %c2_149 = arith.constant 2 : index
    %c0_150 = arith.constant 0 : index
    %146 = vector.load %arg12[%c0_147, %c2_148, %c2_149, %c0_150] : memref<2x10x10x8xf32, #tpu.memory_space<vmem>>, vector<2x8x8x8xf32>
    %147 = vector.shape_cast %146 : vector<2x8x8x8xf32> to vector<128x8xf32>
    %c8_151 = arith.constant 8 : index
    %c0_152 = arith.constant 0 : index
    %c0_153 = arith.constant 0 : index
    %148 = vector.load %arg3[%c8_151, %c0_152, %c0_153] : memref<9x8x8xf32, #tpu.memory_space<vmem>>, vector<1x8x8xf32>
    %149 = vector.shape_cast %148 : vector<1x8x8xf32> to vector<8x8xf32>
    %cst_154 = arith.constant dense<0.000000e+00> : vector<128x8xf32>
    %150 = tpu.matmul %147, %149, %cst_154 {dimension_numbers = #tpu.dot_dimension_numbers<[1], [0], [0], [1], [0, 0, 1, 1], [], []>} : vector<128x8xf32>, vector<8x8xf32>, vector<128x8xf32> -> vector<128x8xf32>
    %151 = arith.addf %145, %150 : vector<128x8xf32>
    %c0_155 = arith.constant 0 : index
    %c0_156 = arith.constant 0 : index
    %152 = vector.load %arg4[%c0_155, %c0_156] : memref<1x8xf32, #tpu.memory_space<vmem>>, vector<1x8xf32>
    %153 = vector.broadcast %152 : vector<1x8xf32> to vector<128x8xf32>
    %154 = arith.addf %151, %153 : vector<128x8xf32>
    %155 = arith.addf %154, %11 : vector<128x8xf32>
    %cst_157 = arith.constant 0.000000e+00 : f32
    %156 = vector.broadcast %cst_157 : f32 to vector<128x8xf32>
    %157 = arith.maximumf %155, %156 : vector<128x8xf32>
    %158 = vector.shape_cast %157 : vector<128x8xf32> to vector<2x8x8x8xf32>
    %c0_158 = arith.constant 0 : index
    %c1_159 = arith.constant 1 : index
    %c1_160 = arith.constant 1 : index
    %c0_161 = arith.constant 0 : index
    %159 = vector.load %arg12[%c0_158, %c1_159, %c1_160, %c0_161] : memref<2x10x10x8xf32, #tpu.memory_space<vmem>>, vector<2x8x8x8xf32>
    tpu.vector_store %arg12[%c0_158, %c1_159, %c1_160, %c0_161], %158 {strides = array<i32>} : memref<2x10x10x8xf32, #tpu.memory_space<vmem>>, vector<2x8x8x8xf32>,
    %c0_162 = arith.constant 0 : index
    %c0_163 = arith.constant 0 : index
    %c0_164 = arith.constant 0 : index
    %c0_165 = arith.constant 0 : index
    %160 = vector.load %arg12[%c0_162, %c0_163, %c0_164, %c0_165] : memref<2x10x10x8xf32, #tpu.memory_space<vmem>>, vector<2x8x8x8xf32>
    %161 = vector.shape_cast %160 : vector<2x8x8x8xf32> to vector<128x8xf32>
    %c0_166 = arith.constant 0 : index
    %c0_167 = arith.constant 0 : index
    %c0_168 = arith.constant 0 : index
    %162 = vector.load %arg7[%c0_166, %c0_167, %c0_168] : memref<9x8x8xf32, #tpu.memory_space<vmem>>, vector<1x8x8xf32>
    %163 = vector.shape_cast %162 : vector<1x8x8xf32> to vector<8x8xf32>
    %cst_169 = arith.constant dense<0.000000e+00> : vector<128x8xf32>
    %164 = tpu.matmul %161, %163, %cst_169 {dimension_numbers = #tpu.dot_dimension_numbers<[1], [0], [0], [1], [0, 0, 1, 1], [], []>} : vector<128x8xf32>, vector<8x8xf32>, vector<128x8xf32> -> vector<128x8xf32>
    %c0_170 = arith.constant 0 : index
    %c0_171 = arith.constant 0 : index
    %c1_172 = arith.constant 1 : index
    %c0_173 = arith.constant 0 : index
    %165 = vector.load %arg12[%c0_170, %c0_171, %c1_172, %c0_173] : memref<2x10x10x8xf32, #tpu.memory_space<vmem>>, vector<2x8x8x8xf32>
    %166 = vector.shape_cast %165 : vector<2x8x8x8xf32> to vector<128x8xf32>
    %c1_174 = arith.constant 1 : index
    %c0_175 = arith.constant 0 : index
    %c0_176 = arith.constant 0 : index
    %167 = vector.load %arg7[%c1_174, %c0_175, %c0_176] : memref<9x8x8xf32, #tpu.memory_space<vmem>>, vector<1x8x8xf32>
    %168 = vector.shape_cast %167 : vector<1x8x8xf32> to vector<8x8xf32>
    %cst_177 = arith.constant dense<0.000000e+00> : vector<128x8xf32>
    %169 = tpu.matmul %166, %168, %cst_177 {dimension_numbers = #tpu.dot_dimension_numbers<[1], [0], [0], [1], [0, 0, 1, 1], [], []>} : vector<128x8xf32>, vector<8x8xf32>, vector<128x8xf32> -> vector<128x8xf32>
    %170 = arith.addf %164, %169 : vector<128x8xf32>
    %c0_178 = arith.constant 0 : index
    %c0_179 = arith.constant 0 : index
    %c2_180 = arith.constant 2 : index
    %c0_181 = arith.constant 0 : index
    %171 = vector.load %arg12[%c0_178, %c0_179, %c2_180, %c0_181] : memref<2x10x10x8xf32, #tpu.memory_space<vmem>>, vector<2x8x8x8xf32>
    %172 = vector.shape_cast %171 : vector<2x8x8x8xf32> to vector<128x8xf32>
    %c2_182 = arith.constant 2 : index
    %c0_183 = arith.constant 0 : index
    %c0_184 = arith.constant 0 : index
    %173 = vector.load %arg7[%c2_182, %c0_183, %c0_184] : memref<9x8x8xf32, #tpu.memory_space<vmem>>, vector<1x8x8xf32>
    %174 = vector.shape_cast %173 : vector<1x8x8xf32> to vector<8x8xf32>
    %cst_185 = arith.constant dense<0.000000e+00> : vector<128x8xf32>
    %175 = tpu.matmul %172, %174, %cst_185 {dimension_numbers = #tpu.dot_dimension_numbers<[1], [0], [0], [1], [0, 0, 1, 1], [], []>} : vector<128x8xf32>, vector<8x8xf32>, vector<128x8xf32> -> vector<128x8xf32>
    %176 = arith.addf %170, %175 : vector<128x8xf32>
    %c0_186 = arith.constant 0 : index
    %c1_187 = arith.constant 1 : index
    %c0_188 = arith.constant 0 : index
    %c0_189 = arith.constant 0 : index
    %177 = vector.load %arg12[%c0_186, %c1_187, %c0_188, %c0_189] : memref<2x10x10x8xf32, #tpu.memory_space<vmem>>, vector<2x8x8x8xf32>
    %178 = vector.shape_cast %177 : vector<2x8x8x8xf32> to vector<128x8xf32>
    %c3_190 = arith.constant 3 : index
    %c0_191 = arith.constant 0 : index
    %c0_192 = arith.constant 0 : index
    %179 = vector.load %arg7[%c3_190, %c0_191, %c0_192] : memref<9x8x8xf32, #tpu.memory_space<vmem>>, vector<1x8x8xf32>
    %180 = vector.shape_cast %179 : vector<1x8x8xf32> to vector<8x8xf32>
    %cst_193 = arith.constant dense<0.000000e+00> : vector<128x8xf32>
    %181 = tpu.matmul %178, %180, %cst_193 {dimension_numbers = #tpu.dot_dimension_numbers<[1], [0], [0], [1], [0, 0, 1, 1], [], []>} : vector<128x8xf32>, vector<8x8xf32>, vector<128x8xf32> -> vector<128x8xf32>
    %182 = arith.addf %176, %181 : vector<128x8xf32>
    %c0_194 = arith.constant 0 : index
    %c1_195 = arith.constant 1 : index
    %c1_196 = arith.constant 1 : index
    %c0_197 = arith.constant 0 : index
    %183 = vector.load %arg12[%c0_194, %c1_195, %c1_196, %c0_197] : memref<2x10x10x8xf32, #tpu.memory_space<vmem>>, vector<2x8x8x8xf32>
    %184 = vector.shape_cast %183 : vector<2x8x8x8xf32> to vector<128x8xf32>
    %c4_198 = arith.constant 4 : index
    %c0_199 = arith.constant 0 : index
    %c0_200 = arith.constant 0 : index
    %185 = vector.load %arg7[%c4_198, %c0_199, %c0_200] : memref<9x8x8xf32, #tpu.memory_space<vmem>>, vector<1x8x8xf32>
    %186 = vector.shape_cast %185 : vector<1x8x8xf32> to vector<8x8xf32>
    %cst_201 = arith.constant dense<0.000000e+00> : vector<128x8xf32>
    %187 = tpu.matmul %184, %186, %cst_201 {dimension_numbers = #tpu.dot_dimension_numbers<[1], [0], [0], [1], [0, 0, 1, 1], [], []>} : vector<128x8xf32>, vector<8x8xf32>, vector<128x8xf32> -> vector<128x8xf32>
    %188 = arith.addf %182, %187 : vector<128x8xf32>
    %c0_202 = arith.constant 0 : index
    %c1_203 = arith.constant 1 : index
    %c2_204 = arith.constant 2 : index
    %c0_205 = arith.constant 0 : index
    %189 = vector.load %arg12[%c0_202, %c1_203, %c2_204, %c0_205] : memref<2x10x10x8xf32, #tpu.memory_space<vmem>>, vector<2x8x8x8xf32>
    %190 = vector.shape_cast %189 : vector<2x8x8x8xf32> to vector<128x8xf32>
    %c5_206 = arith.constant 5 : index
    %c0_207 = arith.constant 0 : index
    %c0_208 = arith.constant 0 : index
    %191 = vector.load %arg7[%c5_206, %c0_207, %c0_208] : memref<9x8x8xf32, #tpu.memory_space<vmem>>, vector<1x8x8xf32>
    %192 = vector.shape_cast %191 : vector<1x8x8xf32> to vector<8x8xf32>
    %cst_209 = arith.constant dense<0.000000e+00> : vector<128x8xf32>
    %193 = tpu.matmul %190, %192, %cst_209 {dimension_numbers = #tpu.dot_dimension_numbers<[1], [0], [0], [1], [0, 0, 1, 1], [], []>} : vector<128x8xf32>, vector<8x8xf32>, vector<128x8xf32> -> vector<128x8xf32>
    %194 = arith.addf %188, %193 : vector<128x8xf32>
    %c0_210 = arith.constant 0 : index
    %c2_211 = arith.constant 2 : index
    %c0_212 = arith.constant 0 : index
    %c0_213 = arith.constant 0 : index
    %195 = vector.load %arg12[%c0_210, %c2_211, %c0_212, %c0_213] : memref<2x10x10x8xf32, #tpu.memory_space<vmem>>, vector<2x8x8x8xf32>
    %196 = vector.shape_cast %195 : vector<2x8x8x8xf32> to vector<128x8xf32>
    %c6_214 = arith.constant 6 : index
    %c0_215 = arith.constant 0 : index
    %c0_216 = arith.constant 0 : index
    %197 = vector.load %arg7[%c6_214, %c0_215, %c0_216] : memref<9x8x8xf32, #tpu.memory_space<vmem>>, vector<1x8x8xf32>
    %198 = vector.shape_cast %197 : vector<1x8x8xf32> to vector<8x8xf32>
    %cst_217 = arith.constant dense<0.000000e+00> : vector<128x8xf32>
    %199 = tpu.matmul %196, %198, %cst_217 {dimension_numbers = #tpu.dot_dimension_numbers<[1], [0], [0], [1], [0, 0, 1, 1], [], []>} : vector<128x8xf32>, vector<8x8xf32>, vector<128x8xf32> -> vector<128x8xf32>
    %200 = arith.addf %194, %199 : vector<128x8xf32>
    %c0_218 = arith.constant 0 : index
    %c2_219 = arith.constant 2 : index
    %c1_220 = arith.constant 1 : index
    %c0_221 = arith.constant 0 : index
    %201 = vector.load %arg12[%c0_218, %c2_219, %c1_220, %c0_221] : memref<2x10x10x8xf32, #tpu.memory_space<vmem>>, vector<2x8x8x8xf32>
    %202 = vector.shape_cast %201 : vector<2x8x8x8xf32> to vector<128x8xf32>
    %c7_222 = arith.constant 7 : index
    %c0_223 = arith.constant 0 : index
    %c0_224 = arith.constant 0 : index
    %203 = vector.load %arg7[%c7_222, %c0_223, %c0_224] : memref<9x8x8xf32, #tpu.memory_space<vmem>>, vector<1x8x8xf32>
    %204 = vector.shape_cast %203 : vector<1x8x8xf32> to vector<8x8xf32>
    %cst_225 = arith.constant dense<0.000000e+00> : vector<128x8xf32>
    %205 = tpu.matmul %202, %204, %cst_225 {dimension_numbers = #tpu.dot_dimension_numbers<[1], [0], [0], [1], [0, 0, 1, 1], [], []>} : vector<128x8xf32>, vector<8x8xf32>, vector<128x8xf32> -> vector<128x8xf32>
    %206 = arith.addf %200, %205 : vector<128x8xf32>
    %c0_226 = arith.constant 0 : index
    %c2_227 = arith.constant 2 : index
    %c2_228 = arith.constant 2 : index
    %c0_229 = arith.constant 0 : index
    %207 = vector.load %arg12[%c0_226, %c2_227, %c2_228, %c0_229] : memref<2x10x10x8xf32, #tpu.memory_space<vmem>>, vector<2x8x8x8xf32>
    %208 = vector.shape_cast %207 : vector<2x8x8x8xf32> to vector<128x8xf32>
    %c8_230 = arith.constant 8 : index
    %c0_231 = arith.constant 0 : index
    %c0_232 = arith.constant 0 : index
    %209 = vector.load %arg7[%c8_230, %c0_231, %c0_232] : memref<9x8x8xf32, #tpu.memory_space<vmem>>, vector<1x8x8xf32>
    %210 = vector.shape_cast %209 : vector<1x8x8xf32> to vector<8x8xf32>
    %cst_233 = arith.constant dense<0.000000e+00> : vector<128x8xf32>
    %211 = tpu.matmul %208, %210, %cst_233 {dimension_numbers = #tpu.dot_dimension_numbers<[1], [0], [0], [1], [0, 0, 1, 1], [], []>} : vector<128x8xf32>, vector<8x8xf32>, vector<128x8xf32> -> vector<128x8xf32>
    %212 = arith.addf %206, %211 : vector<128x8xf32>
    %c0_234 = arith.constant 0 : index
    %c0_235 = arith.constant 0 : index
    %213 = vector.load %arg8[%c0_234, %c0_235] : memref<1x8xf32, #tpu.memory_space<vmem>>, vector<1x8xf32>
    %214 = vector.broadcast %213 : vector<1x8xf32> to vector<128x8xf32>
    %215 = arith.addf %212, %214 : vector<128x8xf32>
    %cst_236 = arith.constant 0.000000e+00 : f32
    %216 = vector.broadcast %cst_236 : f32 to vector<128x8xf32>
    %217 = arith.maximumf %215, %216 : vector<128x8xf32>
    %218 = vector.shape_cast %217 : vector<128x8xf32> to vector<2x8x8x8xf32>
    %c0_237 = arith.constant 0 : index
    %c1_238 = arith.constant 1 : index
    %c1_239 = arith.constant 1 : index
    %c0_240 = arith.constant 0 : index
    %219 = vector.load %arg12[%c0_237, %c1_238, %c1_239, %c0_240] : memref<2x10x10x8xf32, #tpu.memory_space<vmem>>, vector<2x8x8x8xf32>
    tpu.vector_store %arg12[%c0_237, %c1_238, %c1_239, %c0_240], %218 {strides = array<i32>} : memref<2x10x10x8xf32, #tpu.memory_space<vmem>>, vector<2x8x8x8xf32>,
    %c0_241 = arith.constant 0 : index
    %c0_242 = arith.constant 0 : index
    %c0_243 = arith.constant 0 : index
    %c0_244 = arith.constant 0 : index
    %220 = vector.load %arg12[%c0_241, %c0_242, %c0_243, %c0_244] : memref<2x10x10x8xf32, #tpu.memory_space<vmem>>, vector<2x8x8x8xf32>
    %221 = vector.shape_cast %220 : vector<2x8x8x8xf32> to vector<128x8xf32>
    %c0_245 = arith.constant 0 : index
    %c0_246 = arith.constant 0 : index
    %c0_247 = arith.constant 0 : index
    %222 = vector.load %arg9[%c0_245, %c0_246, %c0_247] : memref<9x8x8xf32, #tpu.memory_space<vmem>>, vector<1x8x8xf32>
    %223 = vector.shape_cast %222 : vector<1x8x8xf32> to vector<8x8xf32>
    %cst_248 = arith.constant dense<0.000000e+00> : vector<128x8xf32>
    %224 = tpu.matmul %221, %223, %cst_248 {dimension_numbers = #tpu.dot_dimension_numbers<[1], [0], [0], [1], [0, 0, 1, 1], [], []>} : vector<128x8xf32>, vector<8x8xf32>, vector<128x8xf32> -> vector<128x8xf32>
    %c0_249 = arith.constant 0 : index
    %c0_250 = arith.constant 0 : index
    %c1_251 = arith.constant 1 : index
    %c0_252 = arith.constant 0 : index
    %225 = vector.load %arg12[%c0_249, %c0_250, %c1_251, %c0_252] : memref<2x10x10x8xf32, #tpu.memory_space<vmem>>, vector<2x8x8x8xf32>
    %226 = vector.shape_cast %225 : vector<2x8x8x8xf32> to vector<128x8xf32>
    %c1_253 = arith.constant 1 : index
    %c0_254 = arith.constant 0 : index
    %c0_255 = arith.constant 0 : index
    %227 = vector.load %arg9[%c1_253, %c0_254, %c0_255] : memref<9x8x8xf32, #tpu.memory_space<vmem>>, vector<1x8x8xf32>
    %228 = vector.shape_cast %227 : vector<1x8x8xf32> to vector<8x8xf32>
    %cst_256 = arith.constant dense<0.000000e+00> : vector<128x8xf32>
    %229 = tpu.matmul %226, %228, %cst_256 {dimension_numbers = #tpu.dot_dimension_numbers<[1], [0], [0], [1], [0, 0, 1, 1], [], []>} : vector<128x8xf32>, vector<8x8xf32>, vector<128x8xf32> -> vector<128x8xf32>
    %230 = arith.addf %224, %229 : vector<128x8xf32>
    %c0_257 = arith.constant 0 : index
    %c0_258 = arith.constant 0 : index
    %c2_259 = arith.constant 2 : index
    %c0_260 = arith.constant 0 : index
    %231 = vector.load %arg12[%c0_257, %c0_258, %c2_259, %c0_260] : memref<2x10x10x8xf32, #tpu.memory_space<vmem>>, vector<2x8x8x8xf32>
    %232 = vector.shape_cast %231 : vector<2x8x8x8xf32> to vector<128x8xf32>
    %c2_261 = arith.constant 2 : index
    %c0_262 = arith.constant 0 : index
    %c0_263 = arith.constant 0 : index
    %233 = vector.load %arg9[%c2_261, %c0_262, %c0_263] : memref<9x8x8xf32, #tpu.memory_space<vmem>>, vector<1x8x8xf32>
    %234 = vector.shape_cast %233 : vector<1x8x8xf32> to vector<8x8xf32>
    %cst_264 = arith.constant dense<0.000000e+00> : vector<128x8xf32>
    %235 = tpu.matmul %232, %234, %cst_264 {dimension_numbers = #tpu.dot_dimension_numbers<[1], [0], [0], [1], [0, 0, 1, 1], [], []>} : vector<128x8xf32>, vector<8x8xf32>, vector<128x8xf32> -> vector<128x8xf32>
    %236 = arith.addf %230, %235 : vector<128x8xf32>
    %c0_265 = arith.constant 0 : index
    %c1_266 = arith.constant 1 : index
    %c0_267 = arith.constant 0 : index
    %c0_268 = arith.constant 0 : index
    %237 = vector.load %arg12[%c0_265, %c1_266, %c0_267, %c0_268] : memref<2x10x10x8xf32, #tpu.memory_space<vmem>>, vector<2x8x8x8xf32>
    %238 = vector.shape_cast %237 : vector<2x8x8x8xf32> to vector<128x8xf32>
    %c3_269 = arith.constant 3 : index
    %c0_270 = arith.constant 0 : index
    %c0_271 = arith.constant 0 : index
    %239 = vector.load %arg9[%c3_269, %c0_270, %c0_271] : memref<9x8x8xf32, #tpu.memory_space<vmem>>, vector<1x8x8xf32>
    %240 = vector.shape_cast %239 : vector<1x8x8xf32> to vector<8x8xf32>
    %cst_272 = arith.constant dense<0.000000e+00> : vector<128x8xf32>
    %241 = tpu.matmul %238, %240, %cst_272 {dimension_numbers = #tpu.dot_dimension_numbers<[1], [0], [0], [1], [0, 0, 1, 1], [], []>} : vector<128x8xf32>, vector<8x8xf32>, vector<128x8xf32> -> vector<128x8xf32>
    %242 = arith.addf %236, %241 : vector<128x8xf32>
    %c0_273 = arith.constant 0 : index
    %c1_274 = arith.constant 1 : index
    %c1_275 = arith.constant 1 : index
    %c0_276 = arith.constant 0 : index
    %243 = vector.load %arg12[%c0_273, %c1_274, %c1_275, %c0_276] : memref<2x10x10x8xf32, #tpu.memory_space<vmem>>, vector<2x8x8x8xf32>
    %244 = vector.shape_cast %243 : vector<2x8x8x8xf32> to vector<128x8xf32>
    %c4_277 = arith.constant 4 : index
    %c0_278 = arith.constant 0 : index
    %c0_279 = arith.constant 0 : index
    %245 = vector.load %arg9[%c4_277, %c0_278, %c0_279] : memref<9x8x8xf32, #tpu.memory_space<vmem>>, vector<1x8x8xf32>
    %246 = vector.shape_cast %245 : vector<1x8x8xf32> to vector<8x8xf32>
    %cst_280 = arith.constant dense<0.000000e+00> : vector<128x8xf32>
    %247 = tpu.matmul %244, %246, %cst_280 {dimension_numbers = #tpu.dot_dimension_numbers<[1], [0], [0], [1], [0, 0, 1, 1], [], []>} : vector<128x8xf32>, vector<8x8xf32>, vector<128x8xf32> -> vector<128x8xf32>
    %248 = arith.addf %242, %247 : vector<128x8xf32>
    %c0_281 = arith.constant 0 : index
    %c1_282 = arith.constant 1 : index
    %c2_283 = arith.constant 2 : index
    %c0_284 = arith.constant 0 : index
    %249 = vector.load %arg12[%c0_281, %c1_282, %c2_283, %c0_284] : memref<2x10x10x8xf32, #tpu.memory_space<vmem>>, vector<2x8x8x8xf32>
    %250 = vector.shape_cast %249 : vector<2x8x8x8xf32> to vector<128x8xf32>
    %c5_285 = arith.constant 5 : index
    %c0_286 = arith.constant 0 : index
    %c0_287 = arith.constant 0 : index
    %251 = vector.load %arg9[%c5_285, %c0_286, %c0_287] : memref<9x8x8xf32, #tpu.memory_space<vmem>>, vector<1x8x8xf32>
    %252 = vector.shape_cast %251 : vector<1x8x8xf32> to vector<8x8xf32>
    %cst_288 = arith.constant dense<0.000000e+00> : vector<128x8xf32>
    %253 = tpu.matmul %250, %252, %cst_288 {dimension_numbers = #tpu.dot_dimension_numbers<[1], [0], [0], [1], [0, 0, 1, 1], [], []>} : vector<128x8xf32>, vector<8x8xf32>, vector<128x8xf32> -> vector<128x8xf32>
    %254 = arith.addf %248, %253 : vector<128x8xf32>
    %c0_289 = arith.constant 0 : index
    %c2_290 = arith.constant 2 : index
    %c0_291 = arith.constant 0 : index
    %c0_292 = arith.constant 0 : index
    %255 = vector.load %arg12[%c0_289, %c2_290, %c0_291, %c0_292] : memref<2x10x10x8xf32, #tpu.memory_space<vmem>>, vector<2x8x8x8xf32>
    %256 = vector.shape_cast %255 : vector<2x8x8x8xf32> to vector<128x8xf32>
    %c6_293 = arith.constant 6 : index
    %c0_294 = arith.constant 0 : index
    %c0_295 = arith.constant 0 : index
    %257 = vector.load %arg9[%c6_293, %c0_294, %c0_295] : memref<9x8x8xf32, #tpu.memory_space<vmem>>, vector<1x8x8xf32>
    %258 = vector.shape_cast %257 : vector<1x8x8xf32> to vector<8x8xf32>
    %cst_296 = arith.constant dense<0.000000e+00> : vector<128x8xf32>
    %259 = tpu.matmul %256, %258, %cst_296 {dimension_numbers = #tpu.dot_dimension_numbers<[1], [0], [0], [1], [0, 0, 1, 1], [], []>} : vector<128x8xf32>, vector<8x8xf32>, vector<128x8xf32> -> vector<128x8xf32>
    %260 = arith.addf %254, %259 : vector<128x8xf32>
    %c0_297 = arith.constant 0 : index
    %c2_298 = arith.constant 2 : index
    %c1_299 = arith.constant 1 : index
    %c0_300 = arith.constant 0 : index
    %261 = vector.load %arg12[%c0_297, %c2_298, %c1_299, %c0_300] : memref<2x10x10x8xf32, #tpu.memory_space<vmem>>, vector<2x8x8x8xf32>
    %262 = vector.shape_cast %261 : vector<2x8x8x8xf32> to vector<128x8xf32>
    %c7_301 = arith.constant 7 : index
    %c0_302 = arith.constant 0 : index
    %c0_303 = arith.constant 0 : index
    %263 = vector.load %arg9[%c7_301, %c0_302, %c0_303] : memref<9x8x8xf32, #tpu.memory_space<vmem>>, vector<1x8x8xf32>
    %264 = vector.shape_cast %263 : vector<1x8x8xf32> to vector<8x8xf32>
    %cst_304 = arith.constant dense<0.000000e+00> : vector<128x8xf32>
    %265 = tpu.matmul %262, %264, %cst_304 {dimension_numbers = #tpu.dot_dimension_numbers<[1], [0], [0], [1], [0, 0, 1, 1], [], []>} : vector<128x8xf32>, vector<8x8xf32>, vector<128x8xf32> -> vector<128x8xf32>
    %266 = arith.addf %260, %265 : vector<128x8xf32>
    %c0_305 = arith.constant 0 : index
    %c2_306 = arith.constant 2 : index
    %c2_307 = arith.constant 2 : index
    %c0_308 = arith.constant 0 : index
    %267 = vector.load %arg12[%c0_305, %c2_306, %c2_307, %c0_308] : memref<2x10x10x8xf32, #tpu.memory_space<vmem>>, vector<2x8x8x8xf32>
    %268 = vector.shape_cast %267 : vector<2x8x8x8xf32> to vector<128x8xf32>
    %c8_309 = arith.constant 8 : index
    %c0_310 = arith.constant 0 : index
    %c0_311 = arith.constant 0 : index
    %269 = vector.load %arg9[%c8_309, %c0_310, %c0_311] : memref<9x8x8xf32, #tpu.memory_space<vmem>>, vector<1x8x8xf32>
    %270 = vector.shape_cast %269 : vector<1x8x8xf32> to vector<8x8xf32>
    %cst_312 = arith.constant dense<0.000000e+00> : vector<128x8xf32>
    %271 = tpu.matmul %268, %270, %cst_312 {dimension_numbers = #tpu.dot_dimension_numbers<[1], [0], [0], [1], [0, 0, 1, 1], [], []>} : vector<128x8xf32>, vector<8x8xf32>, vector<128x8xf32> -> vector<128x8xf32>
    %272 = arith.addf %266, %271 : vector<128x8xf32>
    %c0_313 = arith.constant 0 : index
    %c0_314 = arith.constant 0 : index
    %273 = vector.load %arg10[%c0_313, %c0_314] : memref<1x8xf32, #tpu.memory_space<vmem>>, vector<1x8xf32>
    %274 = vector.broadcast %273 : vector<1x8xf32> to vector<128x8xf32>
    %275 = arith.addf %272, %274 : vector<128x8xf32>
    %276 = arith.addf %275, %157 : vector<128x8xf32>
    %cst_315 = arith.constant 0.000000e+00 : f32
    %277 = vector.broadcast %cst_315 : f32 to vector<128x8xf32>
    %278 = arith.maximumf %276, %277 : vector<128x8xf32>
    %279 = tpu.transpose %278, [1, 0] : vector<128x8xf32> -> vector<8x128xf32>
    %c0_316 = arith.constant 0 : index
    %c0_317 = arith.constant 0 : index
    %280 = vector.load %arg11[%c0_316, %c0_317] : memref<8x128xf32, #tpu.memory_space<vmem>>, vector<8x128xf32>
    tpu.vector_store %arg11[%c0_316, %c0_317], %279 {strides = array<i32>} : memref<8x128xf32, #tpu.memory_space<vmem>>, vector<8x128xf32>,
    return
  }
}

</mosaic_0001>

<llo_original>
// kernel: _lambda_.1
$region0: #{_lambda_.1}
  #allocation0 [shape = 'u32[]', space=smem, size = 0x4, offset = 0x4, fixed_abs, tag = 'smem constant byte address 0x4 - core index']
  #allocation1 [shape = 'u32[72,128]{1,0:T(1,128)}', space=vmem, size = 0x9000, scoped, tag = 'internal scratch']
  #allocation2 [shape = 'f32[2,10,10,8]{3,2,1,0:T(8,128)}', space=vmem, size = 0x28000, scoped, tag = 'scratch operand']
  %s0 = inlined_call_operand.vmem [shape: f32[2,18,18,4], index: 0, kind: input, shape index: {}]
  %s1 = inlined_call_operand.vmem [shape: f32[9,4,8], index: 1, kind: input, shape index: {}]
  %s2 = inlined_call_operand.vmem [shape: f32[1,8], index: 2, kind: input, shape index: {}]
  %s3 = inlined_call_operand.vmem [shape: f32[9,8,8], index: 3, kind: input, shape index: {}]
  %s4 = inlined_call_operand.vmem [shape: f32[1,8], index: 4, kind: input, shape index: {}]
  %s5 = inlined_call_operand.vmem [shape: f32[4,8], index: 5, kind: input, shape index: {}]
  %s6 = inlined_call_operand.vmem [shape: f32[1,8], index: 6, kind: input, shape index: {}]
  %s7 = inlined_call_operand.vmem [shape: f32[9,8,8], index: 7, kind: input, shape index: {}]
  %s8 = inlined_call_operand.vmem [shape: f32[1,8], index: 8, kind: input, shape index: {}]
  %s9 = inlined_call_operand.vmem [shape: f32[9,8,8], index: 9, kind: input, shape index: {}]
  %s10 = inlined_call_operand.vmem [shape: f32[1,8], index: 10, kind: input, shape index: {}]
  %s11 = inlined_call_operand.vmem [shape: f32[8,128], index: 11, kind: output, shape index: {}]
  %s12 = sld [smem:[#allocation0]]
  $region54: #{_lambda_.1} parent=0
    _
  %s14 = ssub.s32 1, %s12
  %s15 = scalar_select 0, %s14, %s12
  // Predicated region
  $region2: #{_lambda_.1} parent=0 // pred_check
    _
  $region3: #{_lambda_.1} parent=0 // pred_check_branch
    %17 = sbr.rel (0) target = $region5
  $region4: #{_lambda_.1} parent=0 // pred_region
    _
  $region5: #{_lambda_.1} parent=0 // pred_fallthru
    _
  // Predicated region
  $region6: #{_lambda_.1} parent=0 // pred_check
    _
  $region7: #{_lambda_.1} parent=0 // pred_check_branch
    %19 = sbr.rel (0) target = $region9
  $region8: #{_lambda_.1} parent=0 // pred_region
    _
  $region9: #{_lambda_.1} parent=0 // pred_fallthru
    _
  // Predicated region
  $region10: #{_lambda_.1} parent=0 // pred_check
    _
  $region11: #{_lambda_.1} parent=0 // pred_check_branch
    %21 = sbr.rel (0) target = $region13
  $region12: #{_lambda_.1} parent=0 // pred_region
    _
  $region13: #{_lambda_.1} parent=0 // pred_fallthru
    _
  // Predicated region
  $region14: #{_lambda_.1} parent=0 // pred_check
    _
  $region15: #{_lambda_.1} parent=0 // pred_check_branch
    %23 = sbr.rel (0) target = $region17
  $region16: #{_lambda_.1} parent=0 // pred_region
    _
  $region17: #{_lambda_.1} parent=0 // pred_fallthru
    _
  // Predicated region
  $region18: #{_lambda_.1} parent=0 // pred_check
    _
  $region19: #{_lambda_.1} parent=0 // pred_check_branch
    %25 = sbr.rel (0) target = $region21
  $region20: #{_lambda_.1} parent=0 // pred_region
    _
  $region21: #{_lambda_.1} parent=0 // pred_fallthru
    _
  // Predicated region
  $region22: #{_lambda_.1} parent=0 // pred_check
    _
  $region23: #{_lambda_.1} parent=0 // pred_check_branch
    %27 = sbr.rel (0) target = $region25
  $region24: #{_lambda_.1} parent=0 // pred_region
    _
  $region25: #{_lambda_.1} parent=0 // pred_fallthru
    _
  // Predicated region
  $region26: #{_lambda_.1} parent=0 // pred_check
    _
  $region27: #{_lambda_.1} parent=0 // pred_check_branch
    %29 = sbr.rel (0) target = $region29
  $region28: #{_lambda_.1} parent=0 // pred_region
    _
  $region29: #{_lambda_.1} parent=0 // pred_fallthru
    _
  // Predicated region
  $region30: #{_lambda_.1} parent=0 // pred_check
    _
  $region31: #{_lambda_.1} parent=0 // pred_check_branch
    %31 = sbr.rel (0) target = $region33
  $region32: #{_lambda_.1} parent=0 // pred_region
    _
  $region33: #{_lambda_.1} parent=0 // pred_fallthru
    _
  // Predicated region
  $region34: #{_lambda_.1} parent=0 // pred_check
    _
  $region35: #{_lambda_.1} parent=0 // pred_check_branch
    %33 = sbr.rel (0) target = $region37
  $region36: #{_lambda_.1} parent=0 // pred_region
    _
  $region37: #{_lambda_.1} parent=0 // pred_fallthru
    _
  // Predicated region
  $region38: #{_lambda_.1} parent=0 // pred_check
    _
  $region39: #{_lambda_.1} parent=0 // pred_check_branch
    %35 = sbr.rel (0) target = $region41
  $region40: #{_lambda_.1} parent=0 // pred_region
    _
  $region41: #{_lambda_.1} parent=0 // pred_fallthru
    _
  // Predicated region
  $region42: #{_lambda_.1} parent=0 // pred_check
    _
  $region43: #{_lambda_.1} parent=0 // pred_check_branch
    %37 = sbr.rel (0) target = $region45
  $region44: #{_lambda_.1} parent=0 // pred_region
    _
  $region45: #{_lambda_.1} parent=0 // pred_fallthru
    _
  %vm38 = vcmask 64512
  %39 = vst.msk [vmem:[#allocation2] sm:$0xff] %vm38, 0.0
  %vm40 = vcmask 58368
  %41 = vst.msk [vmem:[#allocation2 + $0x8] sm:$0x3] %vm40, 0.0
  %42 = vst.msk [vmem:[#allocation2 + $0x10] sm:$0xff] %vm38, 0.0
  %43 = vst.msk [vmem:[#allocation2 + $0x18] sm:$0x3] %vm40, 0.0
  %44 = vst.msk [vmem:[#allocation2 + $0x20] sm:$0xff] %vm38, 0.0
  %45 = vst.msk [vmem:[#allocation2 + $0x28] sm:$0x3] %vm40, 0.0
  %46 = vst.msk [vmem:[#allocation2 + $0x30] sm:$0xff] %vm38, 0.0
  %47 = vst.msk [vmem:[#allocation2 + $0x38] sm:$0x3] %vm40, 0.0
  %48 = vst.msk [vmem:[#allocation2 + $0x40] sm:$0xff] %vm38, 0.0
  %49 = vst.msk [vmem:[#allocation2 + $0x48] sm:$0x3] %vm40, 0.0
  %50 = vst.msk [vmem:[#allocation2 + $0x50] sm:$0xff] %vm38, 0.0
  %51 = vst.msk [vmem:[#allocation2 + $0x58] sm:$0x3] %vm40, 0.0
  %52 = vst.msk [vmem:[#allocation2 + $0x60] sm:$0xff] %vm38, 0.0
  %53 = vst.msk [vmem:[#allocation2 + $0x68] sm:$0x3] %vm40, 0.0
  %54 = vst.msk [vmem:[#allocation2 + $0x70] sm:$0xff] %vm38, 0.0
  %55 = vst.msk [vmem:[#allocation2 + $0x78] sm:$0x3] %vm40, 0.0
  %56 = vst.msk [vmem:[#allocation2 + $0x80] sm:$0xff] %vm38, 0.0
  %57 = vst.msk [vmem:[#allocation2 + $0x88] sm:$0x3] %vm40, 0.0
  %58 = vst.msk [vmem:[#allocation2 + $0x90] sm:$0xff] %vm38, 0.0
  %59 = vst.msk [vmem:[#allocation2 + $0x98] sm:$0x3] %vm40, 0.0
  %60 = vst.msk [vmem:[#allocation2 + $0xa0] sm:$0xff] %vm38, 0.0
  %61 = vst.msk [vmem:[#allocation2 + $0xa8] sm:$0x3] %vm40, 0.0
  %62 = vst.msk [vmem:[#allocation2 + $0xb0] sm:$0xff] %vm38, 0.0
  %63 = vst.msk [vmem:[#allocation2 + $0xb8] sm:$0x3] %vm40, 0.0
  %64 = vst.msk [vmem:[#allocation2 + $0xc0] sm:$0xff] %vm38, 0.0
  %65 = vst.msk [vmem:[#allocation2 + $0xc8] sm:$0x3] %vm40, 0.0
  %66 = vst.msk [vmem:[#allocation2 + $0xd0] sm:$0xff] %vm38, 0.0
  %67 = vst.msk [vmem:[#allocation2 + $0xd8] sm:$0x3] %vm40, 0.0
  %68 = vst.msk [vmem:[#allocation2 + $0xe0] sm:$0xff] %vm38, 0.0
  %69 = vst.msk [vmem:[#allocation2 + $0xe8] sm:$0x3] %vm40, 0.0
  %70 = vst.msk [vmem:[#allocation2 + $0xf0] sm:$0xff] %vm38, 0.0
  %71 = vst.msk [vmem:[#allocation2 + $0xf8] sm:$0x3] %vm40, 0.0
  %72 = vst.msk [vmem:[#allocation2 + $0x100] sm:$0xff] %vm38, 0.0
  %73 = vst.msk [vmem:[#allocation2 + $0x108] sm:$0x3] %vm40, 0.0
  %74 = vst.msk [vmem:[#allocation2 + $0x110] sm:$0xff] %vm38, 0.0
  %75 = vst.msk [vmem:[#allocation2 + $0x118] sm:$0x3] %vm40, 0.0
  %76 = vst.msk [vmem:[#allocation2 + $0x120] sm:$0xff] %vm38, 0.0
  %77 = vst.msk [vmem:[#allocation2 + $0x128] sm:$0x3] %vm40, 0.0
  %78 = vst.msk [vmem:[#allocation2 + $0x130] sm:$0xff] %vm38, 0.0
  %79 = vst.msk [vmem:[#allocation2 + $0x138] sm:$0x3] %vm40, 0.0
  %s80 = scalar_lea.vmem %s0, 24
  %s81 = scalar_lea.vmem %s80, 1
  %v82 = vld [vmem:[%s81] ss:$2 sm:$0xff]
  %s83 = scalar_lea.vmem %s80, 49
  %v84 = vld [vmem:[%s83] ss:$2 sm:$0xff]
  %s85 = scalar_lea.vmem %s80, 97
  %v86 = vld [vmem:[%s85] ss:$2 sm:$0xff]
  %s87 = scalar_lea.vmem %s80, 145
  %v88 = vld [vmem:[%s87] ss:$2 sm:$0xff]
  %s89 = scalar_lea.vmem %s80, 193
  %v90 = vld [vmem:[%s89] ss:$2 sm:$0xff]
  %s91 = scalar_lea.vmem %s80, 241
  %v92 = vld [vmem:[%s91] ss:$2 sm:$0xff]
  %s93 = scalar_lea.vmem %s80, 289
  %v94 = vld [vmem:[%s93] ss:$2 sm:$0xff]
  %s95 = scalar_lea.vmem %s80, 337
  %v96 = vld [vmem:[%s95] ss:$2 sm:$0xff]
  %s97 = scalar_lea.vmem %s80, 433
  %v98 = vld [vmem:[%s97] ss:$2 sm:$0xff]
  %s99 = scalar_lea.vmem %s80, 481
  %v100 = vld [vmem:[%s99] ss:$2 sm:$0xff]
  %s101 = scalar_lea.vmem %s80, 529
  %v102 = vld [vmem:[%s101] ss:$2 sm:$0xff]
  %s103 = scalar_lea.vmem %s80, 577
  %v104 = vld [vmem:[%s103] ss:$2 sm:$0xff]
  %s105 = scalar_lea.vmem %s80, 625
  %v106 = vld [vmem:[%s105] ss:$2 sm:$0xff]
  %s107 = scalar_lea.vmem %s80, 673
  %v108 = vld [vmem:[%s107] ss:$2 sm:$0xff]
  %s109 = scalar_lea.vmem %s80, 721
  %v110 = vld [vmem:[%s109] ss:$2 sm:$0xff]
  %s111 = scalar_lea.vmem %s80, 769
  %v112 = vld [vmem:[%s111] ss:$2 sm:$0xff]
  %v113 = vld [vmem:[%s5] sm:$0xf]
  %v114 = vld [vmem:[%s6] sm:$0x1]
  %v116 = vperm.slane %v114, 0
  %vm118 = vcmask 31744
  %v120 = vsel %vm118, %v82, 0
  %v123 = vsel %vm118, %v84, 0
  %v126 = vsel %vm118, %v86, 0
  %v129 = vsel %vm118, %v88, 0
  %v132 = vsel %vm118, %v90, 0
  %v135 = vsel %vm118, %v92, 0
  %v138 = vsel %vm118, %v94, 0
  %v141 = vsel %vm118, %v96, 0
  %v144 = vsel %vm118, %v98, 0
  %v147 = vsel %vm118, %v100, 0
  %v150 = vsel %vm118, %v102, 0
  %v153 = vsel %vm118, %v104, 0
  %v156 = vsel %vm118, %v106, 0
  %v159 = vsel %vm118, %v108, 0
  %v162 = vsel %vm118, %v110, 0
  %v165 = vsel %vm118, %v112, 0
  %vm167 = vcmask 1043456
  %v169 = vsel %vm167, %v113, 0
  %171 = vmatpush.msra.mxu0 0.0
  %172 = vmatpush.msra.mxu0 0.0
  %173 = vmatpush.msra.mxu0 0.0
  %174 = vmatpush.msra.mxu0 0.0
  %175 = vmatpush.msra.mxu0 0.0
  %176 = vmatpush.msra.mxu0 0.0
  %177 = vmatpush.msra.mxu0 0.0
  %178 = vmatpush.msra.mxu0 0.0
  %179 = vmatpush.msra.mxu0 0.0
  %180 = vmatpush.msra.mxu0 0.0
  %181 = vmatpush.msra.mxu0 0.0
  %182 = vmatpush.msra.mxu0 0.0
  %183 = vmatpush.msra.mxu0 0.0
  %184 = vmatpush.msra.mxu0 0.0
  %185 = vmatpush.msra.mxu0 0.0
  %186 = vmatpush.msra.mxu0 %v169
  %187 = vmatmul.f32.gmra.mxu0 %v120
  %v188 = vpop.f32.mrf.mxu0
  %v189 = vadd.f32 %v116, %v188
  %190 = vmatmul.f32.gmra.mxu0 %v123
  %v191 = vpop.f32.mrf.mxu0
  %v192 = vadd.f32 %v116, %v191
  %193 = vmatmul.f32.gmra.mxu0 %v126
  %v194 = vpop.f32.mrf.mxu0
  %v195 = vadd.f32 %v116, %v194
  %196 = vmatmul.f32.gmra.mxu0 %v129
  %v197 = vpop.f32.mrf.mxu0
  %v198 = vadd.f32 %v116, %v197
  %199 = vmatmul.f32.gmra.mxu0 %v132
  %v200 = vpop.f32.mrf.mxu0
  %v201 = vadd.f32 %v116, %v200
  %202 = vmatmul.f32.gmra.mxu0 %v135
  %v203 = vpop.f32.mrf.mxu0
  %v204 = vadd.f32 %v116, %v203
  %205 = vmatmul.f32.gmra.mxu0 %v138
  %v206 = vpop.f32.mrf.mxu0
  %v207 = vadd.f32 %v116, %v206
  %208 = vmatmul.f32.gmra.mxu0 %v141
  %v209 = vpop.f32.mrf.mxu0
  %v210 = vadd.f32 %v116, %v209
  %211 = vmatmul.f32.gmra.mxu0 %v144
  %v212 = vpop.f32.mrf.mxu0
  %v213 = vadd.f32 %v116, %v212
  %214 = vmatmul.f32.gmra.mxu0 %v147
  %v215 = vpop.f32.mrf.mxu0
  %v216 = vadd.f32 %v116, %v215
  %217 = vmatmul.f32.gmra.mxu0 %v150
  %v218 = vpop.f32.mrf.mxu0
  %v219 = vadd.f32 %v116, %v218
  %220 = vmatmul.f32.gmra.mxu0 %v153
  %v221 = vpop.f32.mrf.mxu0
  %v222 = vadd.f32 %v116, %v221
  %223 = vmatmul.f32.gmra.mxu0 %v156
  %v224 = vpop.f32.mrf.mxu0
  %v225 = vadd.f32 %v116, %v224
  %226 = vmatmul.f32.gmra.mxu0 %v159
  %v227 = vpop.f32.mrf.mxu0
  %v228 = vadd.f32 %v116, %v227
  %229 = vmatmul.f32.gmra.mxu0 %v162
  %v230 = vpop.f32.mrf.mxu0
  %v231 = vadd.f32 %v116, %v230
  %232 = vmatmul.f32.gmra.mxu0 %v165
  %v233 = vpop.f32.mrf.mxu0
  %v234 = vadd.f32 %v116, %v233
  %235 = vdwg.mxu0
  %v236 = vld [vmem:[%s0] ss:$2 sm:$0xff]
  %s237 = scalar_lea.vmem %s0, 48
  %v238 = vld [vmem:[%s237] ss:$2 sm:$0xff]
  %s239 = scalar_lea.vmem %s0, 96
  %v240 = vld [vmem:[%s239] ss:$2 sm:$0xff]
  %s241 = scalar_lea.vmem %s0, 144
  %v242 = vld [vmem:[%s241] ss:$2 sm:$0xff]
  %s243 = scalar_lea.vmem %s0, 192
  %v244 = vld [vmem:[%s243] ss:$2 sm:$0xff]
  %s245 = scalar_lea.vmem %s0, 240
  %v246 = vld [vmem:[%s245] ss:$2 sm:$0xff]
  %s247 = scalar_lea.vmem %s0, 288
  %v248 = vld [vmem:[%s247] ss:$2 sm:$0xff]
  %s249 = scalar_lea.vmem %s0, 336
  %v250 = vld [vmem:[%s249] ss:$2 sm:$0xff]
  %s251 = scalar_lea.vmem %s0, 432
  %v252 = vld [vmem:[%s251] ss:$2 sm:$0xff]
  %s253 = scalar_lea.vmem %s0, 480
  %v254 = vld [vmem:[%s253] ss:$2 sm:$0xff]
  %s255 = scalar_lea.vmem %s0, 528
  %v256 = vld [vmem:[%s255] ss:$2 sm:$0xff]
  %s257 = scalar_lea.vmem %s0, 576
  %v258 = vld [vmem:[%s257] ss:$2 sm:$0xff]
  %s259 = scalar_lea.vmem %s0, 624
  %v260 = vld [vmem:[%s259] ss:$2 sm:$0xff]
  %s261 = scalar_lea.vmem %s0, 672
  %v262 = vld [vmem:[%s261] ss:$2 sm:$0xff]
  %s263 = scalar_lea.vmem %s0, 720
  %v264 = vld [vmem:[%s263] ss:$2 sm:$0xff]
  %s265 = scalar_lea.vmem %s0, 768
  %v266 = vld [vmem:[%s265] ss:$2 sm:$0xff]
  %v267 = vld [vmem:[%s1] sm:$0xf]
  %s268 = scalar_lea.vmem %s0, 1
  %v269 = vld [vmem:[%s268] ss:$2 sm:$0xff]
  %s270 = scalar_lea.vmem %s0, 49
  %v271 = vld [vmem:[%s270] ss:$2 sm:$0xff]
  %s272 = scalar_lea.vmem %s0, 97
  %v273 = vld [vmem:[%s272] ss:$2 sm:$0xff]
  %s274 = scalar_lea.vmem %s0, 145
  %v275 = vld [vmem:[%s274] ss:$2 sm:$0xff]
  %s276 = scalar_lea.vmem %s0, 193
  %v277 = vld [vmem:[%s276] ss:$2 sm:$0xff]
  %s278 = scalar_lea.vmem %s0, 241
  %v279 = vld [vmem:[%s278] ss:$2 sm:$0xff]
  %s280 = scalar_lea.vmem %s0, 289
  %v281 = vld [vmem:[%s280] ss:$2 sm:$0xff]
  %s282 = scalar_lea.vmem %s0, 337
  %v283 = vld [vmem:[%s282] ss:$2 sm:$0xff]
  %s284 = scalar_lea.vmem %s0, 433
  %v285 = vld [vmem:[%s284] ss:$2 sm:$0xff]
  %s286 = scalar_lea.vmem %s0, 481
  %v287 = vld [vmem:[%s286] ss:$2 sm:$0xff]
  %s288 = scalar_lea.vmem %s0, 529
  %v289 = vld [vmem:[%s288] ss:$2 sm:$0xff]
  %s290 = scalar_lea.vmem %s0, 577
  %v291 = vld [vmem:[%s290] ss:$2 sm:$0xff]
  %s292 = scalar_lea.vmem %s0, 625
  %v293 = vld [vmem:[%s292] ss:$2 sm:$0xff]
  %s294 = scalar_lea.vmem %s0, 673
  %v295 = vld [vmem:[%s294] ss:$2 sm:$0xff]
  %s296 = scalar_lea.vmem %s0, 721
  %v297 = vld [vmem:[%s296] ss:$2 sm:$0xff]
  %s298 = scalar_lea.vmem %s0, 769
  %v299 = vld [vmem:[%s298] ss:$2 sm:$0xff]
  %s300 = scalar_lea.vmem %s1, 4
  %v301 = vld [vmem:[%s300] sm:$0xf]
  %v303 = vsel %vm118, %v269, 0
  %v306 = vsel %vm118, %v271, 0
  %v309 = vsel %vm118, %v273, 0
  %v312 = vsel %vm118, %v275, 0
  %v315 = vsel %vm118, %v277, 0
  %v318 = vsel %vm118, %v279, 0
  %v321 = vsel %vm118, %v281, 0
  %v324 = vsel %vm118, %v283, 0
  %v327 = vsel %vm118, %v285, 0
  %v330 = vsel %vm118, %v287, 0
  %v333 = vsel %vm118, %v289, 0
  %v336 = vsel %vm118, %v291, 0
  %v339 = vsel %vm118, %v293, 0
  %v342 = vsel %vm118, %v295, 0
  %v345 = vsel %vm118, %v297, 0
  %v348 = vsel %vm118, %v299, 0
  %v351 = vsel %vm167, %v301, 0
  %353 = vmatpush.msra.mxu0 0.0
  %354 = vmatpush.msra.mxu0 0.0
  %355 = vmatpush.msra.mxu0 0.0
  %356 = vmatpush.msra.mxu0 0.0
  %357 = vmatpush.msra.mxu0 0.0
  %358 = vmatpush.msra.mxu0 0.0
  %359 = vmatpush.msra.mxu0 0.0
  %360 = vmatpush.msra.mxu0 0.0
  %361 = vmatpush.msra.mxu0 0.0
  %362 = vmatpush.msra.mxu0 0.0
  %363 = vmatpush.msra.mxu0 0.0
  %364 = vmatpush.msra.mxu0 0.0
  %365 = vmatpush.msra.mxu0 0.0
  %366 = vmatpush.msra.mxu0 0.0
  %367 = vmatpush.msra.mxu0 0.0
  %368 = vmatpush.msra.mxu0 %v351
  %369 = vmatmul.f32.gmra.mxu0 %v303
  %v370 = vpop.f32.mrf.mxu0
  %v371 = vadd.f32 0.0, %v370
  %372 = vmatmul.f32.gmra.mxu0 %v306
  %v373 = vpop.f32.mrf.mxu0
  %v374 = vadd.f32 0.0, %v373
  %375 = vmatmul.f32.gmra.mxu0 %v309
  %v376 = vpop.f32.mrf.mxu0
  %v377 = vadd.f32 0.0, %v376
  %378 = vmatmul.f32.gmra.mxu0 %v312
  %v379 = vpop.f32.mrf.mxu0
  %v380 = vadd.f32 0.0, %v379
  %381 = vmatmul.f32.gmra.mxu0 %v315
  %v382 = vpop.f32.mrf.mxu0
  %v383 = vadd.f32 0.0, %v382
  %384 = vmatmul.f32.gmra.mxu0 %v318
  %v385 = vpop.f32.mrf.mxu0
  %v386 = vadd.f32 0.0, %v385
  %387 = vmatmul.f32.gmra.mxu0 %v321
  %v388 = vpop.f32.mrf.mxu0
  %v389 = vadd.f32 0.0, %v388
  %390 = vmatmul.f32.gmra.mxu0 %v324
  %v391 = vpop.f32.mrf.mxu0
  %v392 = vadd.f32 0.0, %v391
  %393 = vmatmul.f32.gmra.mxu0 %v327
  %v394 = vpop.f32.mrf.mxu0
  %v395 = vadd.f32 0.0, %v394
  %396 = vmatmul.f32.gmra.mxu0 %v330
  %v397 = vpop.f32.mrf.mxu0
  %v398 = vadd.f32 0.0, %v397
  %399 = vmatmul.f32.gmra.mxu0 %v333
  %v400 = vpop.f32.mrf.mxu0
  %v401 = vadd.f32 0.0, %v400
  %402 = vmatmul.f32.gmra.mxu0 %v336
  %v403 = vpop.f32.mrf.mxu0
  %v404 = vadd.f32 0.0, %v403
  %405 = vmatmul.f32.gmra.mxu0 %v339
  %v406 = vpop.f32.mrf.mxu0
  %v407 = vadd.f32 0.0, %v406
  %408 = vmatmul.f32.gmra.mxu0 %v342
  %v409 = vpop.f32.mrf.mxu0
  %v410 = vadd.f32 0.0, %v409
  %411 = vmatmul.f32.gmra.mxu0 %v345
  %v412 = vpop.f32.mrf.mxu0
  %v413 = vadd.f32 0.0, %v412
  %414 = vmatmul.f32.gmra.mxu0 %v348
  %v415 = vpop.f32.mrf.mxu0
  %v416 = vadd.f32 0.0, %v415
  %417 = vdwg.mxu0
  %v419 = vsel %vm118, %v236, 0
  %v422 = vsel %vm118, %v238, 0
  %v425 = vsel %vm118, %v240, 0
  %v428 = vsel %vm118, %v242, 0
  %v431 = vsel %vm118, %v244, 0
  %v434 = vsel %vm118, %v246, 0
  %v437 = vsel %vm118, %v248, 0
  %v440 = vsel %vm118, %v250, 0
  %v443 = vsel %vm118, %v252, 0
  %v446 = vsel %vm118, %v254, 0
  %v449 = vsel %vm118, %v256, 0
  %v452 = vsel %vm118, %v258, 0
  %v455 = vsel %vm118, %v260, 0
  %v458 = vsel %vm118, %v262, 0
  %v461 = vsel %vm118, %v264, 0
  %v464 = vsel %vm118, %v266, 0
  %v467 = vsel %vm167, %v267, 0
  %469 = vmatpush.msra.mxu0 0.0
  %470 = vmatpush.msra.mxu0 0.0
  %471 = vmatpush.msra.mxu0 0.0
  %472 = vmatpush.msra.mxu0 0.0
  %473 = vmatpush.msra.mxu0 0.0
  %474 = vmatpush.msra.mxu0 0.0
  %475 = vmatpush.msra.mxu0 0.0
  %476 = vmatpush.msra.mxu0 0.0
  %477 = vmatpush.msra.mxu0 0.0
  %478 = vmatpush.msra.mxu0 0.0
  %479 = vmatpush.msra.mxu0 0.0
  %480 = vmatpush.msra.mxu0 0.0
  %481 = vmatpush.msra.mxu0 0.0
  %482 = vmatpush.msra.mxu0 0.0
  %483 = vmatpush.msra.mxu0 0.0
  %484 = vmatpush.msra.mxu0 %v467
  %485 = vmatmul.f32.gmra.mxu0 %v419
  %v486 = vpop.f32.mrf.mxu0
  %v487 = vadd.f32 %v371, %v486
  %488 = vmatmul.f32.gmra.mxu0 %v422
  %v489 = vpop.f32.mrf.mxu0
  %v490 = vadd.f32 %v374, %v489
  %491 = vmatmul.f32.gmra.mxu0 %v425
  %v492 = vpop.f32.mrf.mxu0
  %v493 = vadd.f32 %v377, %v492
  %494 = vmatmul.f32.gmra.mxu0 %v428
  %v495 = vpop.f32.mrf.mxu0
  %v496 = vadd.f32 %v380, %v495
  %497 = vmatmul.f32.gmra.mxu0 %v431
  %v498 = vpop.f32.mrf.mxu0
  %v499 = vadd.f32 %v383, %v498
  %500 = vmatmul.f32.gmra.mxu0 %v434
  %v501 = vpop.f32.mrf.mxu0
  %v502 = vadd.f32 %v386, %v501
  %503 = vmatmul.f32.gmra.mxu0 %v437
  %v504 = vpop.f32.mrf.mxu0
  %v505 = vadd.f32 %v389, %v504
  %506 = vmatmul.f32.gmra.mxu0 %v440
  %v507 = vpop.f32.mrf.mxu0
  %v508 = vadd.f32 %v392, %v507
  %509 = vmatmul.f32.gmra.mxu0 %v443
  %v510 = vpop.f32.mrf.mxu0
  %v511 = vadd.f32 %v395, %v510
  %512 = vmatmul.f32.gmra.mxu0 %v446
  %v513 = vpop.f32.mrf.mxu0
  %v514 = vadd.f32 %v398, %v513
  %515 = vmatmul.f32.gmra.mxu0 %v449
  %v516 = vpop.f32.mrf.mxu0
  %v517 = vadd.f32 %v401, %v516
  %518 = vmatmul.f32.gmra.mxu0 %v452
  %v519 = vpop.f32.mrf.mxu0
  %v520 = vadd.f32 %v404, %v519
  %521 = vmatmul.f32.gmra.mxu0 %v455
  %v522 = vpop.f32.mrf.mxu0
  %v523 = vadd.f32 %v407, %v522
  %524 = vmatmul.f32.gmra.mxu0 %v458
  %v525 = vpop.f32.mrf.mxu0
  %v526 = vadd.f32 %v410, %v525
  %527 = vmatmul.f32.gmra.mxu0 %v461
  %v528 = vpop.f32.mrf.mxu0
  %v529 = vadd.f32 %v413, %v528
  %530 = vmatmul.f32.gmra.mxu0 %v464
  %v531 = vpop.f32.mrf.mxu0
  %v532 = vadd.f32 %v416, %v531
  %533 = vdwg.mxu0
  %s534 = scalar_lea.vmem %s0, 2
  %v535 = vld [vmem:[%s534] ss:$2 sm:$0xff]
  %s536 = scalar_lea.vmem %s0, 50
  %v537 = vld [vmem:[%s536] ss:$2 sm:$0xff]
  %s538 = scalar_lea.vmem %s0, 98
  %v539 = vld [vmem:[%s538] ss:$2 sm:$0xff]
  %s540 = scalar_lea.vmem %s0, 146
  %v541 = vld [vmem:[%s540] ss:$2 sm:$0xff]
  %s542 = scalar_lea.vmem %s0, 194
  %v543 = vld [vmem:[%s542] ss:$2 sm:$0xff]
  %s544 = scalar_lea.vmem %s0, 242
  %v545 = vld [vmem:[%s544] ss:$2 sm:$0xff]
  %s546 = scalar_lea.vmem %s0, 290
  %v547 = vld [vmem:[%s546] ss:$2 sm:$0xff]
  %s548 = scalar_lea.vmem %s0, 338
  %v549 = vld [vmem:[%s548] ss:$2 sm:$0xff]
  %s550 = scalar_lea.vmem %s0, 434
  %v551 = vld [vmem:[%s550] ss:$2 sm:$0xff]
  %s552 = scalar_lea.vmem %s0, 482
  %v553 = vld [vmem:[%s552] ss:$2 sm:$0xff]
  %s554 = scalar_lea.vmem %s0, 530
  %v555 = vld [vmem:[%s554] ss:$2 sm:$0xff]
  %s556 = scalar_lea.vmem %s0, 578
  %v557 = vld [vmem:[%s556] ss:$2 sm:$0xff]
  %s558 = scalar_lea.vmem %s0, 626
  %v559 = vld [vmem:[%s558] ss:$2 sm:$0xff]
  %s560 = scalar_lea.vmem %s0, 674
  %v561 = vld [vmem:[%s560] ss:$2 sm:$0xff]
  %s562 = scalar_lea.vmem %s0, 722
  %v563 = vld [vmem:[%s562] ss:$2 sm:$0xff]
  %s564 = scalar_lea.vmem %s0, 770
  %v565 = vld [vmem:[%s564] ss:$2 sm:$0xff]
  %s566 = scalar_lea.vmem %s1, 8
  %v567 = vld [vmem:[%s566] sm:$0xf]
  %v569 = vsel %vm118, %v535, 0
  %v572 = vsel %vm118, %v537, 0
  %v575 = vsel %vm118, %v539, 0
  %v578 = vsel %vm118, %v541, 0
  %v581 = vsel %vm118, %v543, 0
  %v584 = vsel %vm118, %v545, 0
  %v587 = vsel %vm118, %v547, 0
  %v590 = vsel %vm118, %v549, 0
  %v593 = vsel %vm118, %v551, 0
  %v596 = vsel %vm118, %v553, 0
  %v599 = vsel %vm118, %v555, 0
  %v602 = vsel %vm118, %v557, 0
  %v605 = vsel %vm118, %v559, 0
  %v608 = vsel %vm118, %v561, 0
  %v611 = vsel %vm118, %v563, 0
  %v614 = vsel %vm118, %v565, 0
  %v617 = vsel %vm167, %v567, 0
  %619 = vmatpush.msra.mxu0 0.0
  %620 = vmatpush.msra.mxu0 0.0
  %621 = vmatpush.msra.mxu0 0.0
  %622 = vmatpush.msra.mxu0 0.0
  %623 = vmatpush.msra.mxu0 0.0
  %624 = vmatpush.msra.mxu0 0.0
  %625 = vmatpush.msra.mxu0 0.0
  %626 = vmatpush.msra.mxu0 0.0
  %627 = vmatpush.msra.mxu0 0.0
  %628 = vmatpush.msra.mxu0 0.0
  %629 = vmatpush.msra.mxu0 0.0
  %630 = vmatpush.msra.mxu0 0.0
  %631 = vmatpush.msra.mxu0 0.0
  %632 = vmatpush.msra.mxu0 0.0
  %633 = vmatpush.msra.mxu0 0.0
  %634 = vmatpush.msra.mxu0 %v617
  %635 = vmatmul.f32.gmra.mxu0 %v569
  %v636 = vpop.f32.mrf.mxu0
  %v637 = vadd.f32 0.0, %v636
  %638 = vmatmul.f32.gmra.mxu0 %v572
  %v639 = vpop.f32.mrf.mxu0
  %v640 = vadd.f32 0.0, %v639
  %641 = vmatmul.f32.gmra.mxu0 %v575
  %v642 = vpop.f32.mrf.mxu0
  %v643 = vadd.f32 0.0, %v642
  %644 = vmatmul.f32.gmra.mxu0 %v578
  %v645 = vpop.f32.mrf.mxu0
  %v646 = vadd.f32 0.0, %v645
  %647 = vmatmul.f32.gmra.mxu0 %v581
  %v648 = vpop.f32.mrf.mxu0
  %v649 = vadd.f32 0.0, %v648
  %650 = vmatmul.f32.gmra.mxu0 %v584
  %v651 = vpop.f32.mrf.mxu0
  %v652 = vadd.f32 0.0, %v651
  %653 = vmatmul.f32.gmra.mxu0 %v587
  %v654 = vpop.f32.mrf.mxu0
  %v655 = vadd.f32 0.0, %v654
  %656 = vmatmul.f32.gmra.mxu0 %v590
  %v657 = vpop.f32.mrf.mxu0
  %v658 = vadd.f32 0.0, %v657
  %659 = vmatmul.f32.gmra.mxu0 %v593
  %v660 = vpop.f32.mrf.mxu0
  %v661 = vadd.f32 0.0, %v660
  %662 = vmatmul.f32.gmra.mxu0 %v596
  %v663 = vpop.f32.mrf.mxu0
  %v664 = vadd.f32 0.0, %v663
  %665 = vmatmul.f32.gmra.mxu0 %v599
  %v666 = vpop.f32.mrf.mxu0
  %v667 = vadd.f32 0.0, %v666
  %668 = vmatmul.f32.gmra.mxu0 %v602
  %v669 = vpop.f32.mrf.mxu0
  %v670 = vadd.f32 0.0, %v669
  %671 = vmatmul.f32.gmra.mxu0 %v605
  %v672 = vpop.f32.mrf.mxu0
  %v673 = vadd.f32 0.0, %v672
  %674 = vmatmul.f32.gmra.mxu0 %v608
  %v675 = vpop.f32.mrf.mxu0
  %v676 = vadd.f32 0.0, %v675
  %677 = vmatmul.f32.gmra.mxu0 %v611
  %v678 = vpop.f32.mrf.mxu0
  %v679 = vadd.f32 0.0, %v678
  %680 = vmatmul.f32.gmra.mxu0 %v614
  %v681 = vpop.f32.mrf.mxu0
  %v682 = vadd.f32 0.0, %v681
  %683 = vdwg.mxu0
  %v684 = vadd.f32 %v487, %v637
  %v685 = vadd.f32 %v490, %v640
  %v686 = vadd.f32 %v493, %v643
  %v687 = vadd.f32 %v496, %v646
  %v688 = vadd.f32 %v499, %v649
  %v689 = vadd.f32 %v502, %v652
  %v690 = vadd.f32 %v505, %v655
  %v691 = vadd.f32 %v508, %v658
  %v692 = vadd.f32 %v511, %v661
  %v693 = vadd.f32 %v514, %v664
  %v694 = vadd.f32 %v517, %v667
  %v695 = vadd.f32 %v520, %v670
  %v696 = vadd.f32 %v523, %v673
  %v697 = vadd.f32 %v526, %v676
  %v698 = vadd.f32 %v529, %v679
  %v699 = vadd.f32 %v532, %v682
  %v700 = vld [vmem:[%s80] ss:$2 sm:$0xff]
  %s701 = scalar_lea.vmem %s80, 48
  %v702 = vld [vmem:[%s701] ss:$2 sm:$0xff]
  %s703 = scalar_lea.vmem %s80, 96
  %v704 = vld [vmem:[%s703] ss:$2 sm:$0xff]
  %s705 = scalar_lea.vmem %s80, 144
  %v706 = vld [vmem:[%s705] ss:$2 sm:$0xff]
  %s707 = scalar_lea.vmem %s80, 192
  %v708 = vld [vmem:[%s707] ss:$2 sm:$0xff]
  %s709 = scalar_lea.vmem %s80, 240
  %v710 = vld [vmem:[%s709] ss:$2 sm:$0xff]
  %s711 = scalar_lea.vmem %s80, 288
  %v712 = vld [vmem:[%s711] ss:$2 sm:$0xff]
  %s713 = scalar_lea.vmem %s80, 336
  %v714 = vld [vmem:[%s713] ss:$2 sm:$0xff]
  %s715 = scalar_lea.vmem %s80, 432
  %v716 = vld [vmem:[%s715] ss:$2 sm:$0xff]
  %s717 = scalar_lea.vmem %s80, 480
  %v718 = vld [vmem:[%s717] ss:$2 sm:$0xff]
  %s719 = scalar_lea.vmem %s80, 528
  %v720 = vld [vmem:[%s719] ss:$2 sm:$0xff]
  %s721 = scalar_lea.vmem %s80, 576
  %v722 = vld [vmem:[%s721] ss:$2 sm:$0xff]
  %s723 = scalar_lea.vmem %s80, 624
  %v724 = vld [vmem:[%s723] ss:$2 sm:$0xff]
  %s725 = scalar_lea.vmem %s80, 672
  %v726 = vld [vmem:[%s725] ss:$2 sm:$0xff]
  %s727 = scalar_lea.vmem %s80, 720
  %v728 = vld [vmem:[%s727] ss:$2 sm:$0xff]
  %s729 = scalar_lea.vmem %s80, 768
  %v730 = vld [vmem:[%s729] ss:$2 sm:$0xff]
  %s731 = scalar_lea.vmem %s1, 12
  %v732 = vld [vmem:[%s731] sm:$0xf]
  %v734 = vsel %vm118, %v700, 0
  %v737 = vsel %vm118, %v702, 0
  %v740 = vsel %vm118, %v704, 0
  %v743 = vsel %vm118, %v706, 0
  %v746 = vsel %vm118, %v708, 0
  %v749 = vsel %vm118, %v710, 0
  %v752 = vsel %vm118, %v712, 0
  %v755 = vsel %vm118, %v714, 0
  %v758 = vsel %vm118, %v716, 0
  %v761 = vsel %vm118, %v718, 0
  %v764 = vsel %vm118, %v720, 0
  %v767 = vsel %vm118, %v722, 0
  %v770 = vsel %vm118, %v724, 0
  %v773 = vsel %vm118, %v726, 0
  %v776 = vsel %vm118, %v728, 0
  %v779 = vsel %vm118, %v730, 0
  %v782 = vsel %vm167, %v732, 0
  %784 = vmatpush.msra.mxu0 0.0
  %785 = vmatpush.msra.mxu0 0.0
  %786 = vmatpush.msra.mxu0 0.0
  %787 = vmatpush.msra.mxu0 0.0
  %788 = vmatpush.msra.mxu0 0.0
  %789 = vmatpush.msra.mxu0 0.0
  %790 = vmatpush.msra.mxu0 0.0
  %791 = vmatpush.msra.mxu0 0.0
  %792 = vmatpush.msra.mxu0 0.0
  %793 = vmatpush.msra.mxu0 0.0
  %794 = vmatpush.msra.mxu0 0.0
  %795 = vmatpush.msra.mxu0 0.0
  %796 = vmatpush.msra.mxu0 0.0
  %797 = vmatpush.msra.mxu0 0.0
  %798 = vmatpush.msra.mxu0 0.0
  %799 = vmatpush.msra.mxu0 %v782
  %800 = vmatmul.f32.gmra.mxu0 %v734
  %v801 = vpop.f32.mrf.mxu0
  %v802 = vadd.f32 0.0, %v801
  %803 = vmatmul.f32.gmra.mxu0 %v737
  %v804 = vpop.f32.mrf.mxu0
  %v805 = vadd.f32 0.0, %v804
  %806 = vmatmul.f32.gmra.mxu0 %v740
  %v807 = vpop.f32.mrf.mxu0
  %v808 = vadd.f32 0.0, %v807
  %809 = vmatmul.f32.gmra.mxu0 %v743
  %v810 = vpop.f32.mrf.mxu0
  %v811 = vadd.f32 0.0, %v810
  %812 = vmatmul.f32.gmra.mxu0 %v746
  %v813 = vpop.f32.mrf.mxu0
  %v814 = vadd.f32 0.0, %v813
  %815 = vmatmul.f32.gmra.mxu0 %v749
  %v816 = vpop.f32.mrf.mxu0
  %v817 = vadd.f32 0.0, %v816
  %818 = vmatmul.f32.gmra.mxu0 %v752
  %v819 = vpop.f32.mrf.mxu0
  %v820 = vadd.f32 0.0, %v819
  %821 = vmatmul.f32.gmra.mxu0 %v755
  %v822 = vpop.f32.mrf.mxu0
  %v823 = vadd.f32 0.0, %v822
  %824 = vmatmul.f32.gmra.mxu0 %v758
  %v825 = vpop.f32.mrf.mxu0
  %v826 = vadd.f32 0.0, %v825
  %827 = vmatmul.f32.gmra.mxu0 %v761
  %v828 = vpop.f32.mrf.mxu0
  %v829 = vadd.f32 0.0, %v828
  %830 = vmatmul.f32.gmra.mxu0 %v764
  %v831 = vpop.f32.mrf.mxu0
  %v832 = vadd.f32 0.0, %v831
  %833 = vmatmul.f32.gmra.mxu0 %v767
  %v834 = vpop.f32.mrf.mxu0
  %v835 = vadd.f32 0.0, %v834
  %836 = vmatmul.f32.gmra.mxu0 %v770
  %v837 = vpop.f32.mrf.mxu0
  %v838 = vadd.f32 0.0, %v837
  %839 = vmatmul.f32.gmra.mxu0 %v773
  %v840 = vpop.f32.mrf.mxu0
  %v841 = vadd.f32 0.0, %v840
  %842 = vmatmul.f32.gmra.mxu0 %v776
  %v843 = vpop.f32.mrf.mxu0
  %v844 = vadd.f32 0.0, %v843
  %845 = vmatmul.f32.gmra.mxu0 %v779
  %v846 = vpop.f32.mrf.mxu0
  %v847 = vadd.f32 0.0, %v846
  %848 = vdwg.mxu0
  %v849 = vadd.f32 %v684, %v802
  %v850 = vadd.f32 %v685, %v805
  %v851 = vadd.f32 %v686, %v808
  %v852 = vadd.f32 %v687, %v811
  %v853 = vadd.f32 %v688, %v814
  %v854 = vadd.f32 %v689, %v817
  %v855 = vadd.f32 %v690, %v820
  %v856 = vadd.f32 %v691, %v823
  %v857 = vadd.f32 %v692, %v826
  %v858 = vadd.f32 %v693, %v829
  %v859 = vadd.f32 %v694, %v832
  %v860 = vadd.f32 %v695, %v835
  %v861 = vadd.f32 %v696, %v838
  %v862 = vadd.f32 %v697, %v841
  %v863 = vadd.f32 %v698, %v844
  %v864 = vadd.f32 %v699, %v847
  %s865 = scalar_lea.vmem %s1, 16
  %v866 = vld [vmem:[%s865] sm:$0xf]
  %v868 = vsel %vm167, %v866, 0
  %870 = vmatpush.msra.mxu0 0.0
  %871 = vmatpush.msra.mxu0 0.0
  %872 = vmatpush.msra.mxu0 0.0
  %873 = vmatpush.msra.mxu0 0.0
  %874 = vmatpush.msra.mxu0 0.0
  %875 = vmatpush.msra.mxu0 0.0
  %876 = vmatpush.msra.mxu0 0.0
  %877 = vmatpush.msra.mxu0 0.0
  %878 = vmatpush.msra.mxu0 0.0
  %879 = vmatpush.msra.mxu0 0.0
  %880 = vmatpush.msra.mxu0 0.0
  %881 = vmatpush.msra.mxu0 0.0
  %882 = vmatpush.msra.mxu0 0.0
  %883 = vmatpush.msra.mxu0 0.0
  %884 = vmatpush.msra.mxu0 0.0
  %885 = vmatpush.msra.mxu0 %v868
  %886 = vmatmul.f32.gmra.mxu0 %v120
  %v887 = vpop.f32.mrf.mxu0
  %v888 = vadd.f32 0.0, %v887
  %889 = vmatmul.f32.gmra.mxu0 %v123
  %v890 = vpop.f32.mrf.mxu0
  %v891 = vadd.f32 0.0, %v890
  %892 = vmatmul.f32.gmra.mxu0 %v126
  %v893 = vpop.f32.mrf.mxu0
  %v894 = vadd.f32 0.0, %v893
  %895 = vmatmul.f32.gmra.mxu0 %v129
  %v896 = vpop.f32.mrf.mxu0
  %v897 = vadd.f32 0.0, %v896
  %898 = vmatmul.f32.gmra.mxu0 %v132
  %v899 = vpop.f32.mrf.mxu0
  %v900 = vadd.f32 0.0, %v899
  %901 = vmatmul.f32.gmra.mxu0 %v135
  %v902 = vpop.f32.mrf.mxu0
  %v903 = vadd.f32 0.0, %v902
  %904 = vmatmul.f32.gmra.mxu0 %v138
  %v905 = vpop.f32.mrf.mxu0
  %v906 = vadd.f32 0.0, %v905
  %907 = vmatmul.f32.gmra.mxu0 %v141
  %v908 = vpop.f32.mrf.mxu0
  %v909 = vadd.f32 0.0, %v908
  %910 = vmatmul.f32.gmra.mxu0 %v144
  %v911 = vpop.f32.mrf.mxu0
  %v912 = vadd.f32 0.0, %v911
  %913 = vmatmul.f32.gmra.mxu0 %v147
  %v914 = vpop.f32.mrf.mxu0
  %v915 = vadd.f32 0.0, %v914
  %916 = vmatmul.f32.gmra.mxu0 %v150
  %v917 = vpop.f32.mrf.mxu0
  %v918 = vadd.f32 0.0, %v917
  %919 = vmatmul.f32.gmra.mxu0 %v153
  %v920 = vpop.f32.mrf.mxu0
  %v921 = vadd.f32 0.0, %v920
  %922 = vmatmul.f32.gmra.mxu0 %v156
  %v923 = vpop.f32.mrf.mxu0
  %v924 = vadd.f32 0.0, %v923
  %925 = vmatmul.f32.gmra.mxu0 %v159
  %v926 = vpop.f32.mrf.mxu0
  %v927 = vadd.f32 0.0, %v926
  %928 = vmatmul.f32.gmra.mxu0 %v162
  %v929 = vpop.f32.mrf.mxu0
  %v930 = vadd.f32 0.0, %v929
  %931 = vmatmul.f32.gmra.mxu0 %v165
  %v932 = vpop.f32.mrf.mxu0
  %v933 = vadd.f32 0.0, %v932
  %934 = vdwg.mxu0
  %v935 = vadd.f32 %v849, %v888
  %v936 = vadd.f32 %v850, %v891
  %v937 = vadd.f32 %v851, %v894
  %v938 = vadd.f32 %v852, %v897
  %v939 = vadd.f32 %v853, %v900
  %v940 = vadd.f32 %v854, %v903
  %v941 = vadd.f32 %v855, %v906
  %v942 = vadd.f32 %v856, %v909
  %v943 = vadd.f32 %v857, %v912
  %v944 = vadd.f32 %v858, %v915
  %v945 = vadd.f32 %v859, %v918
  %v946 = vadd.f32 %v860, %v921
  %v947 = vadd.f32 %v861, %v924
  %v948 = vadd.f32 %v862, %v927
  %v949 = vadd.f32 %v863, %v930
  %v950 = vadd.f32 %v864, %v933
  %s951 = scalar_lea.vmem %s80, 2
  %v952 = vld [vmem:[%s951] ss:$2 sm:$0xff]
  %s953 = scalar_lea.vmem %s80, 50
  %v954 = vld [vmem:[%s953] ss:$2 sm:$0xff]
  %s955 = scalar_lea.vmem %s80, 98
  %v956 = vld [vmem:[%s955] ss:$2 sm:$0xff]
  %s957 = scalar_lea.vmem %s80, 146
  %v958 = vld [vmem:[%s957] ss:$2 sm:$0xff]
  %s959 = scalar_lea.vmem %s80, 194
  %v960 = vld [vmem:[%s959] ss:$2 sm:$0xff]
  %s961 = scalar_lea.vmem %s80, 242
  %v962 = vld [vmem:[%s961] ss:$2 sm:$0xff]
  %s963 = scalar_lea.vmem %s80, 290
  %v964 = vld [vmem:[%s963] ss:$2 sm:$0xff]
  %s965 = scalar_lea.vmem %s80, 338
  %v966 = vld [vmem:[%s965] ss:$2 sm:$0xff]
  %s967 = scalar_lea.vmem %s80, 434
  %v968 = vld [vmem:[%s967] ss:$2 sm:$0xff]
  %s969 = scalar_lea.vmem %s80, 482
  %v970 = vld [vmem:[%s969] ss:$2 sm:$0xff]
  %s971 = scalar_lea.vmem %s80, 530
  %v972 = vld [vmem:[%s971] ss:$2 sm:$0xff]
  %s973 = scalar_lea.vmem %s80, 578
  %v974 = vld [vmem:[%s973] ss:$2 sm:$0xff]
  %s975 = scalar_lea.vmem %s80, 626
  %v976 = vld [vmem:[%s975] ss:$2 sm:$0xff]
  %s977 = scalar_lea.vmem %s80, 674
  %v978 = vld [vmem:[%s977] ss:$2 sm:$0xff]
  %s979 = scalar_lea.vmem %s80, 722
  %v980 = vld [vmem:[%s979] ss:$2 sm:$0xff]
  %s981 = scalar_lea.vmem %s80, 770
  %v982 = vld [vmem:[%s981] ss:$2 sm:$0xff]
  %s983 = scalar_lea.vmem %s1, 20
  %v984 = vld [vmem:[%s983] sm:$0xf]
  %v986 = vsel %vm118, %v952, 0
  %v989 = vsel %vm118, %v954, 0
  %v992 = vsel %vm118, %v956, 0
  %v995 = vsel %vm118, %v958, 0
  %v998 = vsel %vm118, %v960, 0
  %v1001 = vsel %vm118, %v962, 0
  %v1004 = vsel %vm118, %v964, 0
  %v1007 = vsel %vm118, %v966, 0
  %v1010 = vsel %vm118, %v968, 0
  %v1013 = vsel %vm118, %v970, 0
  %v1016 = vsel %vm118, %v972, 0
  %v1019 = vsel %vm118, %v974, 0
  %v1022 = vsel %vm118, %v976, 0
  %v1025 = vsel %vm118, %v978, 0
  %v1028 = vsel %vm118, %v980, 0
  %v1031 = vsel %vm118, %v982, 0
  %v1034 = vsel %vm167, %v984, 0
  %1036 = vmatpush.msra.mxu0 0.0
  %1037 = vmatpush.msra.mxu0 0.0
  %1038 = vmatpush.msra.mxu0 0.0
  %1039 = vmatpush.msra.mxu0 0.0
  %1040 = vmatpush.msra.mxu0 0.0
  %1041 = vmatpush.msra.mxu0 0.0
  %1042 = vmatpush.msra.mxu0 0.0
  %1043 = vmatpush.msra.mxu0 0.0
  %1044 = vmatpush.msra.mxu0 0.0
  %1045 = vmatpush.msra.mxu0 0.0
  %1046 = vmatpush.msra.mxu0 0.0
  %1047 = vmatpush.msra.mxu0 0.0
  %1048 = vmatpush.msra.mxu0 0.0
  %1049 = vmatpush.msra.mxu0 0.0
  %1050 = vmatpush.msra.mxu0 0.0
  %1051 = vmatpush.msra.mxu0 %v1034
  %1052 = vmatmul.f32.gmra.mxu0 %v986
  %v1053 = vpop.f32.mrf.mxu0
  %v1054 = vadd.f32 0.0, %v1053
  %1055 = vmatmul.f32.gmra.mxu0 %v989
  %v1056 = vpop.f32.mrf.mxu0
  %v1057 = vadd.f32 0.0, %v1056
  %1058 = vmatmul.f32.gmra.mxu0 %v992
  %v1059 = vpop.f32.mrf.mxu0
  %v1060 = vadd.f32 0.0, %v1059
  %1061 = vmatmul.f32.gmra.mxu0 %v995
  %v1062 = vpop.f32.mrf.mxu0
  %v1063 = vadd.f32 0.0, %v1062
  %1064 = vmatmul.f32.gmra.mxu0 %v998
  %v1065 = vpop.f32.mrf.mxu0
  %v1066 = vadd.f32 0.0, %v1065
  %1067 = vmatmul.f32.gmra.mxu0 %v1001
  %v1068 = vpop.f32.mrf.mxu0
  %v1069 = vadd.f32 0.0, %v1068
  %1070 = vmatmul.f32.gmra.mxu0 %v1004
  %v1071 = vpop.f32.mrf.mxu0
  %v1072 = vadd.f32 0.0, %v1071
  %1073 = vmatmul.f32.gmra.mxu0 %v1007
  %v1074 = vpop.f32.mrf.mxu0
  %v1075 = vadd.f32 0.0, %v1074
  %1076 = vmatmul.f32.gmra.mxu0 %v1010
  %v1077 = vpop.f32.mrf.mxu0
  %v1078 = vadd.f32 0.0, %v1077
  %1079 = vmatmul.f32.gmra.mxu0 %v1013
  %v1080 = vpop.f32.mrf.mxu0
  %v1081 = vadd.f32 0.0, %v1080
  %1082 = vmatmul.f32.gmra.mxu0 %v1016
  %v1083 = vpop.f32.mrf.mxu0
  %v1084 = vadd.f32 0.0, %v1083
  %1085 = vmatmul.f32.gmra.mxu0 %v1019
  %v1086 = vpop.f32.mrf.mxu0
  %v1087 = vadd.f32 0.0, %v1086
  %1088 = vmatmul.f32.gmra.mxu0 %v1022
  %v1089 = vpop.f32.mrf.mxu0
  %v1090 = vadd.f32 0.0, %v1089
  %1091 = vmatmul.f32.gmra.mxu0 %v1025
  %v1092 = vpop.f32.mrf.mxu0
  %v1093 = vadd.f32 0.0, %v1092
  %1094 = vmatmul.f32.gmra.mxu0 %v1028
  %v1095 = vpop.f32.mrf.mxu0
  %v1096 = vadd.f32 0.0, %v1095
  %1097 = vmatmul.f32.gmra.mxu0 %v1031
  %v1098 = vpop.f32.mrf.mxu0
  %v1099 = vadd.f32 0.0, %v1098
  %1100 = vdwg.mxu0
  %v1101 = vadd.f32 %v935, %v1054
  %v1102 = vadd.f32 %v936, %v1057
  %v1103 = vadd.f32 %v937, %v1060
  %v1104 = vadd.f32 %v938, %v1063
  %v1105 = vadd.f32 %v939, %v1066
  %v1106 = vadd.f32 %v940, %v1069
  %v1107 = vadd.f32 %v941, %v1072
  %v1108 = vadd.f32 %v942, %v1075
  %v1109 = vadd.f32 %v943, %v1078
  %v1110 = vadd.f32 %v944, %v1081
  %v1111 = vadd.f32 %v945, %v1084
  %v1112 = vadd.f32 %v946, %v1087
  %v1113 = vadd.f32 %v947, %v1090
  %v1114 = vadd.f32 %v948, %v1093
  %v1115 = vadd.f32 %v949, %v1096
  %v1116 = vadd.f32 %v950, %v1099
  %s1117 = scalar_lea.vmem %s0, 48
  %v1118 = vld [vmem:[%s1117] ss:$2 sm:$0xff]
  %s1119 = scalar_lea.vmem %s1117, 48
  %v1120 = vld [vmem:[%s1119] ss:$2 sm:$0xff]
  %s1121 = scalar_lea.vmem %s1117, 96
  %v1122 = vld [vmem:[%s1121] ss:$2 sm:$0xff]
  %s1123 = scalar_lea.vmem %s1117, 144
  %v1124 = vld [vmem:[%s1123] ss:$2 sm:$0xff]
  %s1125 = scalar_lea.vmem %s1117, 192
  %v1126 = vld [vmem:[%s1125] ss:$2 sm:$0xff]
  %s1127 = scalar_lea.vmem %s1117, 240
  %v1128 = vld [vmem:[%s1127] ss:$2 sm:$0xff]
  %s1129 = scalar_lea.vmem %s1117, 288
  %v1130 = vld [vmem:[%s1129] ss:$2 sm:$0xff]
  %s1131 = scalar_lea.vmem %s1117, 336
  %v1132 = vld [vmem:[%s1131] ss:$2 sm:$0xff]
  %s1133 = scalar_lea.vmem %s1117, 432
  %v1134 = vld [vmem:[%s1133] ss:$2 sm:$0xff]
  %s1135 = scalar_lea.vmem %s1117, 480
  %v1136 = vld [vmem:[%s1135] ss:$2 sm:$0xff]
  %s1137 = scalar_lea.vmem %s1117, 528
  %v1138 = vld [vmem:[%s1137] ss:$2 sm:$0xff]
  %s1139 = scalar_lea.vmem %s1117, 576
  %v1140 = vld [vmem:[%s1139] ss:$2 sm:$0xff]
  %s1141 = scalar_lea.vmem %s1117, 624
  %v1142 = vld [vmem:[%s1141] ss:$2 sm:$0xff]
  %s1143 = scalar_lea.vmem %s1117, 672
  %v1144 = vld [vmem:[%s1143] ss:$2 sm:$0xff]
  %s1145 = scalar_lea.vmem %s1117, 720
  %v1146 = vld [vmem:[%s1145] ss:$2 sm:$0xff]
  %s1147 = scalar_lea.vmem %s1117, 768
  %v1148 = vld [vmem:[%s1147] ss:$2 sm:$0xff]
  %s1149 = scalar_lea.vmem %s1, 24
  %v1150 = vld [vmem:[%s1149] sm:$0xf]
  %v1152 = vsel %vm118, %v1118, 0
  %v1155 = vsel %vm118, %v1120, 0
  %v1158 = vsel %vm118, %v1122, 0
  %v1161 = vsel %vm118, %v1124, 0
  %v1164 = vsel %vm118, %v1126, 0
  %v1167 = vsel %vm118, %v1128, 0
  %v1170 = vsel %vm118, %v1130, 0
  %v1173 = vsel %vm118, %v1132, 0
  %v1176 = vsel %vm118, %v1134, 0
  %v1179 = vsel %vm118, %v1136, 0
  %v1182 = vsel %vm118, %v1138, 0
  %v1185 = vsel %vm118, %v1140, 0
  %v1188 = vsel %vm118, %v1142, 0
  %v1191 = vsel %vm118, %v1144, 0
  %v1194 = vsel %vm118, %v1146, 0
  %v1197 = vsel %vm118, %v1148, 0
  %v1200 = vsel %vm167, %v1150, 0
  %1202 = vmatpush.msra.mxu0 0.0
  %1203 = vmatpush.msra.mxu0 0.0
  %1204 = vmatpush.msra.mxu0 0.0
  %1205 = vmatpush.msra.mxu0 0.0
  %1206 = vmatpush.msra.mxu0 0.0
  %1207 = vmatpush.msra.mxu0 0.0
  %1208 = vmatpush.msra.mxu0 0.0
  %1209 = vmatpush.msra.mxu0 0.0
  %1210 = vmatpush.msra.mxu0 0.0
  %1211 = vmatpush.msra.mxu0 0.0
  %1212 = vmatpush.msra.mxu0 0.0
  %1213 = vmatpush.msra.mxu0 0.0
  %1214 = vmatpush.msra.mxu0 0.0
  %1215 = vmatpush.msra.mxu0 0.0
  %1216 = vmatpush.msra.mxu0 0.0
  %1217 = vmatpush.msra.mxu0 %v1200
  %1218 = vmatmul.f32.gmra.mxu0 %v1152
  %v1219 = vpop.f32.mrf.mxu0
  %v1220 = vadd.f32 0.0, %v1219
  %1221 = vmatmul.f32.gmra.mxu0 %v1155
  %v1222 = vpop.f32.mrf.mxu0
  %v1223 = vadd.f32 0.0, %v1222
  %1224 = vmatmul.f32.gmra.mxu0 %v1158
  %v1225 = vpop.f32.mrf.mxu0
  %v1226 = vadd.f32 0.0, %v1225
  %1227 = vmatmul.f32.gmra.mxu0 %v1161
  %v1228 = vpop.f32.mrf.mxu0
  %v1229 = vadd.f32 0.0, %v1228
  %1230 = vmatmul.f32.gmra.mxu0 %v1164
  %v1231 = vpop.f32.mrf.mxu0
  %v1232 = vadd.f32 0.0, %v1231
  %1233 = vmatmul.f32.gmra.mxu0 %v1167
  %v1234 = vpop.f32.mrf.mxu0
  %v1235 = vadd.f32 0.0, %v1234
  %1236 = vmatmul.f32.gmra.mxu0 %v1170
  %v1237 = vpop.f32.mrf.mxu0
  %v1238 = vadd.f32 0.0, %v1237
  %1239 = vmatmul.f32.gmra.mxu0 %v1173
  %v1240 = vpop.f32.mrf.mxu0
  %v1241 = vadd.f32 0.0, %v1240
  %1242 = vmatmul.f32.gmra.mxu0 %v1176
  %v1243 = vpop.f32.mrf.mxu0
  %v1244 = vadd.f32 0.0, %v1243
  %1245 = vmatmul.f32.gmra.mxu0 %v1179
  %v1246 = vpop.f32.mrf.mxu0
  %v1247 = vadd.f32 0.0, %v1246
  %1248 = vmatmul.f32.gmra.mxu0 %v1182
  %v1249 = vpop.f32.mrf.mxu0
  %v1250 = vadd.f32 0.0, %v1249
  %1251 = vmatmul.f32.gmra.mxu0 %v1185
  %v1252 = vpop.f32.mrf.mxu0
  %v1253 = vadd.f32 0.0, %v1252
  %1254 = vmatmul.f32.gmra.mxu0 %v1188
  %v1255 = vpop.f32.mrf.mxu0
  %v1256 = vadd.f32 0.0, %v1255
  %1257 = vmatmul.f32.gmra.mxu0 %v1191
  %v1258 = vpop.f32.mrf.mxu0
  %v1259 = vadd.f32 0.0, %v1258
  %1260 = vmatmul.f32.gmra.mxu0 %v1194
  %v1261 = vpop.f32.mrf.mxu0
  %v1262 = vadd.f32 0.0, %v1261
  %1263 = vmatmul.f32.gmra.mxu0 %v1197
  %v1264 = vpop.f32.mrf.mxu0
  %v1265 = vadd.f32 0.0, %v1264
  %1266 = vdwg.mxu0
  %v1267 = vadd.f32 %v1101, %v1220
  %v1268 = vadd.f32 %v1102, %v1223
  %v1269 = vadd.f32 %v1103, %v1226
  %v1270 = vadd.f32 %v1104, %v1229
  %v1271 = vadd.f32 %v1105, %v1232
  %v1272 = vadd.f32 %v1106, %v1235
  %v1273 = vadd.f32 %v1107, %v1238
  %v1274 = vadd.f32 %v1108, %v1241
  %v1275 = vadd.f32 %v1109, %v1244
  %v1276 = vadd.f32 %v1110, %v1247
  %v1277 = vadd.f32 %v1111, %v1250
  %v1278 = vadd.f32 %v1112, %v1253
  %v1279 = vadd.f32 %v1113, %v1256
  %v1280 = vadd.f32 %v1114, %v1259
  %v1281 = vadd.f32 %v1115, %v1262
  %v1282 = vadd.f32 %v1116, %v1265
  %s1283 = scalar_lea.vmem %s1117, 1
  %v1284 = vld [vmem:[%s1283] ss:$2 sm:$0xff]
  %s1285 = scalar_lea.vmem %s1117, 49
  %v1286 = vld [vmem:[%s1285] ss:$2 sm:$0xff]
  %s1287 = scalar_lea.vmem %s1117, 97
  %v1288 = vld [vmem:[%s1287] ss:$2 sm:$0xff]
  %s1289 = scalar_lea.vmem %s1117, 145
  %v1290 = vld [vmem:[%s1289] ss:$2 sm:$0xff]
  %s1291 = scalar_lea.vmem %s1117, 193
  %v1292 = vld [vmem:[%s1291] ss:$2 sm:$0xff]
  %s1293 = scalar_lea.vmem %s1117, 241
  %v1294 = vld [vmem:[%s1293] ss:$2 sm:$0xff]
  %s1295 = scalar_lea.vmem %s1117, 289
  %v1296 = vld [vmem:[%s1295] ss:$2 sm:$0xff]
  %s1297 = scalar_lea.vmem %s1117, 337
  %v1298 = vld [vmem:[%s1297] ss:$2 sm:$0xff]
  %s1299 = scalar_lea.vmem %s1117, 433
  %v1300 = vld [vmem:[%s1299] ss:$2 sm:$0xff]
  %s1301 = scalar_lea.vmem %s1117, 481
  %v1302 = vld [vmem:[%s1301] ss:$2 sm:$0xff]
  %s1303 = scalar_lea.vmem %s1117, 529
  %v1304 = vld [vmem:[%s1303] ss:$2 sm:$0xff]
  %s1305 = scalar_lea.vmem %s1117, 577
  %v1306 = vld [vmem:[%s1305] ss:$2 sm:$0xff]
  %s1307 = scalar_lea.vmem %s1117, 625
  %v1308 = vld [vmem:[%s1307] ss:$2 sm:$0xff]
  %s1309 = scalar_lea.vmem %s1117, 673
  %v1310 = vld [vmem:[%s1309] ss:$2 sm:$0xff]
  %s1311 = scalar_lea.vmem %s1117, 721
  %v1312 = vld [vmem:[%s1311] ss:$2 sm:$0xff]
  %s1313 = scalar_lea.vmem %s1117, 769
  %v1314 = vld [vmem:[%s1313] ss:$2 sm:$0xff]
  %s1315 = scalar_lea.vmem %s1, 28
  %v1316 = vld [vmem:[%s1315] sm:$0xf]
  %v1318 = vsel %vm118, %v1284, 0
  %v1321 = vsel %vm118, %v1286, 0
  %v1324 = vsel %vm118, %v1288, 0
  %v1327 = vsel %vm118, %v1290, 0
  %v1330 = vsel %vm118, %v1292, 0
  %v1333 = vsel %vm118, %v1294, 0
  %v1336 = vsel %vm118, %v1296, 0
  %v1339 = vsel %vm118, %v1298, 0
  %v1342 = vsel %vm118, %v1300, 0
  %v1345 = vsel %vm118, %v1302, 0
  %v1348 = vsel %vm118, %v1304, 0
  %v1351 = vsel %vm118, %v1306, 0
  %v1354 = vsel %vm118, %v1308, 0
  %v1357 = vsel %vm118, %v1310, 0
  %v1360 = vsel %vm118, %v1312, 0
  %v1363 = vsel %vm118, %v1314, 0
  %v1366 = vsel %vm167, %v1316, 0
  %1368 = vmatpush.msra.mxu0 0.0
  %1369 = vmatpush.msra.mxu0 0.0
  %1370 = vmatpush.msra.mxu0 0.0
  %1371 = vmatpush.msra.mxu0 0.0
  %1372 = vmatpush.msra.mxu0 0.0
  %1373 = vmatpush.msra.mxu0 0.0
  %1374 = vmatpush.msra.mxu0 0.0
  %1375 = vmatpush.msra.mxu0 0.0
  %1376 = vmatpush.msra.mxu0 0.0
  %1377 = vmatpush.msra.mxu0 0.0
  %1378 = vmatpush.msra.mxu0 0.0
  %1379 = vmatpush.msra.mxu0 0.0
  %1380 = vmatpush.msra.mxu0 0.0
  %1381 = vmatpush.msra.mxu0 0.0
  %1382 = vmatpush.msra.mxu0 0.0
  %1383 = vmatpush.msra.mxu0 %v1366
  %1384 = vmatmul.f32.gmra.mxu0 %v1318
  %v1385 = vpop.f32.mrf.mxu0
  %v1386 = vadd.f32 0.0, %v1385
  %1387 = vmatmul.f32.gmra.mxu0 %v1321
  %v1388 = vpop.f32.mrf.mxu0
  %v1389 = vadd.f32 0.0, %v1388
  %1390 = vmatmul.f32.gmra.mxu0 %v1324
  %v1391 = vpop.f32.mrf.mxu0
  %v1392 = vadd.f32 0.0, %v1391
  %1393 = vmatmul.f32.gmra.mxu0 %v1327
  %v1394 = vpop.f32.mrf.mxu0
  %v1395 = vadd.f32 0.0, %v1394
  %1396 = vmatmul.f32.gmra.mxu0 %v1330
  %v1397 = vpop.f32.mrf.mxu0
  %v1398 = vadd.f32 0.0, %v1397
  %1399 = vmatmul.f32.gmra.mxu0 %v1333
  %v1400 = vpop.f32.mrf.mxu0
  %v1401 = vadd.f32 0.0, %v1400
  %1402 = vmatmul.f32.gmra.mxu0 %v1336
  %v1403 = vpop.f32.mrf.mxu0
  %v1404 = vadd.f32 0.0, %v1403
  %1405 = vmatmul.f32.gmra.mxu0 %v1339
  %v1406 = vpop.f32.mrf.mxu0
  %v1407 = vadd.f32 0.0, %v1406
  %1408 = vmatmul.f32.gmra.mxu0 %v1342
  %v1409 = vpop.f32.mrf.mxu0
  %v1410 = vadd.f32 0.0, %v1409
  %1411 = vmatmul.f32.gmra.mxu0 %v1345
  %v1412 = vpop.f32.mrf.mxu0
  %v1413 = vadd.f32 0.0, %v1412
  %1414 = vmatmul.f32.gmra.mxu0 %v1348
  %v1415 = vpop.f32.mrf.mxu0
  %v1416 = vadd.f32 0.0, %v1415
  %1417 = vmatmul.f32.gmra.mxu0 %v1351
  %v1418 = vpop.f32.mrf.mxu0
  %v1419 = vadd.f32 0.0, %v1418
  %1420 = vmatmul.f32.gmra.mxu0 %v1354
  %v1421 = vpop.f32.mrf.mxu0
  %v1422 = vadd.f32 0.0, %v1421
  %1423 = vmatmul.f32.gmra.mxu0 %v1357
  %v1424 = vpop.f32.mrf.mxu0
  %v1425 = vadd.f32 0.0, %v1424
  %1426 = vmatmul.f32.gmra.mxu0 %v1360
  %v1427 = vpop.f32.mrf.mxu0
  %v1428 = vadd.f32 0.0, %v1427
  %1429 = vmatmul.f32.gmra.mxu0 %v1363
  %v1430 = vpop.f32.mrf.mxu0
  %v1431 = vadd.f32 0.0, %v1430
  %1432 = vdwg.mxu0
  %v1433 = vadd.f32 %v1267, %v1386
  %v1434 = vadd.f32 %v1268, %v1389
  %v1435 = vadd.f32 %v1269, %v1392
  %v1436 = vadd.f32 %v1270, %v1395
  %v1437 = vadd.f32 %v1271, %v1398
  %v1438 = vadd.f32 %v1272, %v1401
  %v1439 = vadd.f32 %v1273, %v1404
  %v1440 = vadd.f32 %v1274, %v1407
  %v1441 = vadd.f32 %v1275, %v1410
  %v1442 = vadd.f32 %v1276, %v1413
  %v1443 = vadd.f32 %v1277, %v1416
  %v1444 = vadd.f32 %v1278, %v1419
  %v1445 = vadd.f32 %v1279, %v1422
  %v1446 = vadd.f32 %v1280, %v1425
  %v1447 = vadd.f32 %v1281, %v1428
  %v1448 = vadd.f32 %v1282, %v1431
  %s1449 = scalar_lea.vmem %s1117, 2
  %v1450 = vld [vmem:[%s1449] ss:$2 sm:$0xff]
  %s1451 = scalar_lea.vmem %s1117, 50
  %v1452 = vld [vmem:[%s1451] ss:$2 sm:$0xff]
  %s1453 = scalar_lea.vmem %s1117, 98
  %v1454 = vld [vmem:[%s1453] ss:$2 sm:$0xff]
  %s1455 = scalar_lea.vmem %s1117, 146
  %v1456 = vld [vmem:[%s1455] ss:$2 sm:$0xff]
  %s1457 = scalar_lea.vmem %s1117, 194
  %v1458 = vld [vmem:[%s1457] ss:$2 sm:$0xff]
  %s1459 = scalar_lea.vmem %s1117, 242
  %v1460 = vld [vmem:[%s1459] ss:$2 sm:$0xff]
  %s1461 = scalar_lea.vmem %s1117, 290
  %v1462 = vld [vmem:[%s1461] ss:$2 sm:$0xff]
  %s1463 = scalar_lea.vmem %s1117, 338
  %v1464 = vld [vmem:[%s1463] ss:$2 sm:$0xff]
  %s1465 = scalar_lea.vmem %s1117, 434
  %v1466 = vld [vmem:[%s1465] ss:$2 sm:$0xff]
  %s1467 = scalar_lea.vmem %s1117, 482
  %v1468 = vld [vmem:[%s1467] ss:$2 sm:$0xff]
  %s1469 = scalar_lea.vmem %s1117, 530
  %v1470 = vld [vmem:[%s1469] ss:$2 sm:$0xff]
  %s1471 = scalar_lea.vmem %s1117, 578
  %v1472 = vld [vmem:[%s1471] ss:$2 sm:$0xff]
  %s1473 = scalar_lea.vmem %s1117, 626
  %v1474 = vld [vmem:[%s1473] ss:$2 sm:$0xff]
  %s1475 = scalar_lea.vmem %s1117, 674
  %v1476 = vld [vmem:[%s1475] ss:$2 sm:$0xff]
  %s1477 = scalar_lea.vmem %s1117, 722
  %v1478 = vld [vmem:[%s1477] ss:$2 sm:$0xff]
  %s1479 = scalar_lea.vmem %s1117, 770
  %v1480 = vld [vmem:[%s1479] ss:$2 sm:$0xff]
  %s1481 = scalar_lea.vmem %s1, 32
  %v1482 = vld [vmem:[%s1481] sm:$0xf]
  %v1484 = vsel %vm118, %v1450, 0
  %v1487 = vsel %vm118, %v1452, 0
  %v1490 = vsel %vm118, %v1454, 0
  %v1493 = vsel %vm118, %v1456, 0
  %v1496 = vsel %vm118, %v1458, 0
  %v1499 = vsel %vm118, %v1460, 0
  %v1502 = vsel %vm118, %v1462, 0
  %v1505 = vsel %vm118, %v1464, 0
  %v1508 = vsel %vm118, %v1466, 0
  %v1511 = vsel %vm118, %v1468, 0
  %v1514 = vsel %vm118, %v1470, 0
  %v1517 = vsel %vm118, %v1472, 0
  %v1520 = vsel %vm118, %v1474, 0
  %v1523 = vsel %vm118, %v1476, 0
  %v1526 = vsel %vm118, %v1478, 0
  %v1529 = vsel %vm118, %v1480, 0
  %v1532 = vsel %vm167, %v1482, 0
  %1534 = vmatpush.msra.mxu0 0.0
  %1535 = vmatpush.msra.mxu0 0.0
  %1536 = vmatpush.msra.mxu0 0.0
  %1537 = vmatpush.msra.mxu0 0.0
  %1538 = vmatpush.msra.mxu0 0.0
  %1539 = vmatpush.msra.mxu0 0.0
  %1540 = vmatpush.msra.mxu0 0.0
  %1541 = vmatpush.msra.mxu0 0.0
  %1542 = vmatpush.msra.mxu0 0.0
  %1543 = vmatpush.msra.mxu0 0.0
  %1544 = vmatpush.msra.mxu0 0.0
  %1545 = vmatpush.msra.mxu0 0.0
  %1546 = vmatpush.msra.mxu0 0.0
  %1547 = vmatpush.msra.mxu0 0.0
  %1548 = vmatpush.msra.mxu0 0.0
  %1549 = vmatpush.msra.mxu0 %v1532
  %1550 = vmatmul.f32.gmra.mxu0 %v1484
  %v1551 = vpop.f32.mrf.mxu0
  %v1552 = vadd.f32 0.0, %v1551
  %1553 = vmatmul.f32.gmra.mxu0 %v1487
  %v1554 = vpop.f32.mrf.mxu0
  %v1555 = vadd.f32 0.0, %v1554
  %1556 = vmatmul.f32.gmra.mxu0 %v1490
  %v1557 = vpop.f32.mrf.mxu0
  %v1558 = vadd.f32 0.0, %v1557
  %1559 = vmatmul.f32.gmra.mxu0 %v1493
  %v1560 = vpop.f32.mrf.mxu0
  %v1561 = vadd.f32 0.0, %v1560
  %1562 = vmatmul.f32.gmra.mxu0 %v1496
  %v1563 = vpop.f32.mrf.mxu0
  %v1564 = vadd.f32 0.0, %v1563
  %1565 = vmatmul.f32.gmra.mxu0 %v1499
  %v1566 = vpop.f32.mrf.mxu0
  %v1567 = vadd.f32 0.0, %v1566
  %1568 = vmatmul.f32.gmra.mxu0 %v1502
  %v1569 = vpop.f32.mrf.mxu0
  %v1570 = vadd.f32 0.0, %v1569
  %1571 = vmatmul.f32.gmra.mxu0 %v1505
  %v1572 = vpop.f32.mrf.mxu0
  %v1573 = vadd.f32 0.0, %v1572
  %1574 = vmatmul.f32.gmra.mxu0 %v1508
  %v1575 = vpop.f32.mrf.mxu0
  %v1576 = vadd.f32 0.0, %v1575
  %1577 = vmatmul.f32.gmra.mxu0 %v1511
  %v1578 = vpop.f32.mrf.mxu0
  %v1579 = vadd.f32 0.0, %v1578
  %1580 = vmatmul.f32.gmra.mxu0 %v1514
  %v1581 = vpop.f32.mrf.mxu0
  %v1582 = vadd.f32 0.0, %v1581
  %1583 = vmatmul.f32.gmra.mxu0 %v1517
  %v1584 = vpop.f32.mrf.mxu0
  %v1585 = vadd.f32 0.0, %v1584
  %1586 = vmatmul.f32.gmra.mxu0 %v1520
  %v1587 = vpop.f32.mrf.mxu0
  %v1588 = vadd.f32 0.0, %v1587
  %1589 = vmatmul.f32.gmra.mxu0 %v1523
  %v1590 = vpop.f32.mrf.mxu0
  %v1591 = vadd.f32 0.0, %v1590
  %1592 = vmatmul.f32.gmra.mxu0 %v1526
  %v1593 = vpop.f32.mrf.mxu0
  %v1594 = vadd.f32 0.0, %v1593
  %1595 = vmatmul.f32.gmra.mxu0 %v1529
  %v1596 = vpop.f32.mrf.mxu0
  %v1597 = vadd.f32 0.0, %v1596
  %1598 = vdwg.mxu0
  %v1599 = vadd.f32 %v1433, %v1552
  %v1600 = vadd.f32 %v1434, %v1555
  %v1601 = vadd.f32 %v1435, %v1558
  %v1602 = vadd.f32 %v1436, %v1561
  %v1603 = vadd.f32 %v1437, %v1564
  %v1604 = vadd.f32 %v1438, %v1567
  %v1605 = vadd.f32 %v1439, %v1570
  %v1606 = vadd.f32 %v1440, %v1573
  %v1607 = vadd.f32 %v1441, %v1576
  %v1608 = vadd.f32 %v1442, %v1579
  %v1609 = vadd.f32 %v1443, %v1582
  %v1610 = vadd.f32 %v1444, %v1585
  %v1611 = vadd.f32 %v1445, %v1588
  %v1612 = vadd.f32 %v1446, %v1591
  %v1613 = vadd.f32 %v1447, %v1594
  %v1614 = vadd.f32 %v1448, %v1597
  %v1615 = vld [vmem:[%s2] sm:$0x1]
  %v1617 = vperm.slane %v1615, 0
  %v1619 = vadd.f32 %v1599, %v1617
  %v1620 = vadd.f32 %v1600, %v1617
  %v1621 = vadd.f32 %v1601, %v1617
  %v1622 = vadd.f32 %v1602, %v1617
  %v1623 = vadd.f32 %v1603, %v1617
  %v1624 = vadd.f32 %v1604, %v1617
  %v1625 = vadd.f32 %v1605, %v1617
  %v1626 = vadd.f32 %v1606, %v1617
  %v1627 = vadd.f32 %v1607, %v1617
  %v1628 = vadd.f32 %v1608, %v1617
  %v1629 = vadd.f32 %v1609, %v1617
  %v1630 = vadd.f32 %v1610, %v1617
  %v1631 = vadd.f32 %v1611, %v1617
  %v1632 = vadd.f32 %v1612, %v1617
  %v1633 = vadd.f32 %v1613, %v1617
  %v1634 = vadd.f32 %v1614, %v1617
  %v1635 = vmax.f32 %v1619, 0.0
  %v1636 = vmax.f32 %v1620, 0.0
  %v1637 = vmax.f32 %v1621, 0.0
  %v1638 = vmax.f32 %v1622, 0.0
  %v1639 = vmax.f32 %v1623, 0.0
  %v1640 = vmax.f32 %v1624, 0.0
  %v1641 = vmax.f32 %v1625, 0.0
  %v1642 = vmax.f32 %v1626, 0.0
  %v1643 = vmax.f32 %v1627, 0.0
  %v1644 = vmax.f32 %v1628, 0.0
  %v1645 = vmax.f32 %v1629, 0.0
  %v1646 = vmax.f32 %v1630, 0.0
  %v1647 = vmax.f32 %v1631, 0.0
  %v1648 = vmax.f32 %v1632, 0.0
  %v1649 = vmax.f32 %v1633, 0.0
  %v1650 = vmax.f32 %v1634, 0.0
  %s1651 = scalar_lea.vmem [#allocation2], 16
  %1652 = vst.msk [vmem:[%s1651 + $0x1] sm:$0xff] %vm38, %v1635
  %1653 = vst.msk [vmem:[%s1651 + $0x11] sm:$0xff] %vm38, %v1636
  %1654 = vst.msk [vmem:[%s1651 + $0x21] sm:$0xff] %vm38, %v1637
  %1655 = vst.msk [vmem:[%s1651 + $0x31] sm:$0xff] %vm38, %v1638
  %1656 = vst.msk [vmem:[%s1651 + $0x41] sm:$0xff] %vm38, %v1639
  %1657 = vst.msk [vmem:[%s1651 + $0x51] sm:$0xff] %vm38, %v1640
  %1658 = vst.msk [vmem:[%s1651 + $0x61] sm:$0xff] %vm38, %v1641
  %1659 = vst.msk [vmem:[%s1651 + $0x71] sm:$0xff] %vm38, %v1642
  %1660 = vst.msk [vmem:[%s1651 + $0xa1] sm:$0xff] %vm38, %v1643
  %1661 = vst.msk [vmem:[%s1651 + $0xb1] sm:$0xff] %vm38, %v1644
  %1662 = vst.msk [vmem:[%s1651 + $0xc1] sm:$0xff] %vm38, %v1645
  %1663 = vst.msk [vmem:[%s1651 + $0xd1] sm:$0xff] %vm38, %v1646
  %1664 = vst.msk [vmem:[%s1651 + $0xe1] sm:$0xff] %vm38, %v1647
  %1665 = vst.msk [vmem:[%s1651 + $0xf1] sm:$0xff] %vm38, %v1648
  %1666 = vst.msk [vmem:[%s1651 + $0x101] sm:$0xff] %vm38, %v1649
  %1667 = vst.msk [vmem:[%s1651 + $0x111] sm:$0xff] %vm38, %v1650
  %v1668 = vld [vmem:[#allocation2] sm:$0xff]
  %v1669 = vld [vmem:[#allocation2 + $0x10] sm:$0xff]
  %v1670 = vld [vmem:[#allocation2 + $0x20] sm:$0xff]
  %v1671 = vld [vmem:[#allocation2 + $0x30] sm:$0xff]
  %v1672 = vld [vmem:[#allocation2 + $0x40] sm:$0xff]
  %v1673 = vld [vmem:[#allocation2 + $0x50] sm:$0xff]
  %v1674 = vld [vmem:[#allocation2 + $0x60] sm:$0xff]
  %v1675 = vld [vmem:[#allocation2 + $0x70] sm:$0xff]
  %v1676 = vld [vmem:[#allocation2 + $0xa0] sm:$0xff]
  %v1677 = vld [vmem:[#allocation2 + $0xb0] sm:$0xff]
  %v1678 = vld [vmem:[#allocation2 + $0xc0] sm:$0xff]
  %v1679 = vld [vmem:[#allocation2 + $0xd0] sm:$0xff]
  %v1680 = vld [vmem:[#allocation2 + $0xe0] sm:$0xff]
  %v1681 = vld [vmem:[#allocation2 + $0xf0] sm:$0xff]
  %v1682 = vld [vmem:[#allocation2 + $0x100] sm:$0xff]
  %v1683 = vld [vmem:[#allocation2 + $0x110] sm:$0xff]
  %v1684 = vld [vmem:[%s3] sm:$0xff]
  %v1685 = vld [vmem:[#allocation2 + $0x1] sm:$0xff]
  %v1686 = vld [vmem:[#allocation2 + $0x11] sm:$0xff]
  %v1687 = vld [vmem:[#allocation2 + $0x21] sm:$0xff]
  %v1688 = vld [vmem:[#allocation2 + $0x31] sm:$0xff]
  %v1689 = vld [vmem:[#allocation2 + $0x41] sm:$0xff]
  %v1690 = vld [vmem:[#allocation2 + $0x51] sm:$0xff]
  %v1691 = vld [vmem:[#allocation2 + $0x61] sm:$0xff]
  %v1692 = vld [vmem:[#allocation2 + $0x71] sm:$0xff]
  %v1693 = vld [vmem:[#allocation2 + $0xa1] sm:$0xff]
  %v1694 = vld [vmem:[#allocation2 + $0xb1] sm:$0xff]
  %v1695 = vld [vmem:[#allocation2 + $0xc1] sm:$0xff]
  %v1696 = vld [vmem:[#allocation2 + $0xd1] sm:$0xff]
  %v1697 = vld [vmem:[#allocation2 + $0xe1] sm:$0xff]
  %v1698 = vld [vmem:[#allocation2 + $0xf1] sm:$0xff]
  %v1699 = vld [vmem:[#allocation2 + $0x101] sm:$0xff]
  %v1700 = vld [vmem:[#allocation2 + $0x111] sm:$0xff]
  %s1701 = scalar_lea.vmem %s3, 8
  %v1702 = vld [vmem:[%s1701] sm:$0xff]
  %v1704 = vsel %vm38, %v1685, 0
  %v1707 = vsel %vm38, %v1686, 0
  %v1710 = vsel %vm38, %v1687, 0
  %v1713 = vsel %vm38, %v1688, 0
  %v1716 = vsel %vm38, %v1689, 0
  %v1719 = vsel %vm38, %v1690, 0
  %v1722 = vsel %vm38, %v1691, 0
  %v1725 = vsel %vm38, %v1692, 0
  %v1728 = vsel %vm38, %v1693, 0
  %v1731 = vsel %vm38, %v1694, 0
  %v1734 = vsel %vm38, %v1695, 0
  %v1737 = vsel %vm38, %v1696, 0
  %v1740 = vsel %vm38, %v1697, 0
  %v1743 = vsel %vm38, %v1698, 0
  %v1746 = vsel %vm38, %v1699, 0
  %v1749 = vsel %vm38, %v1700, 0
  %1751 = vmatpush.msra.mxu0 0.0
  %1752 = vmatpush.msra.mxu0 0.0
  %1753 = vmatpush.msra.mxu0 0.0
  %1754 = vmatpush.msra.mxu0 0.0
  %1755 = vmatpush.msra.mxu0 0.0
  %1756 = vmatpush.msra.mxu0 0.0
  %1757 = vmatpush.msra.mxu0 0.0
  %1758 = vmatpush.msra.mxu0 0.0
  %1759 = vmatpush.msra.mxu0 0.0
  %1760 = vmatpush.msra.mxu0 0.0
  %1761 = vmatpush.msra.mxu0 0.0
  %1762 = vmatpush.msra.mxu0 0.0
  %1763 = vmatpush.msra.mxu0 0.0
  %1764 = vmatpush.msra.mxu0 0.0
  %1765 = vmatpush.msra.mxu0 0.0
  %1766 = vmatpush.msra.mxu0 %v1702
  %1767 = vmatmul.f32.gmra.mxu0 %v1704
  %v1768 = vpop.f32.mrf.mxu0
  %v1769 = vadd.f32 0.0, %v1768
  %1770 = vmatmul.f32.gmra.mxu0 %v1707
  %v1771 = vpop.f32.mrf.mxu0
  %v1772 = vadd.f32 0.0, %v1771
  %1773 = vmatmul.f32.gmra.mxu0 %v1710
  %v1774 = vpop.f32.mrf.mxu0
  %v1775 = vadd.f32 0.0, %v1774
  %1776 = vmatmul.f32.gmra.mxu0 %v1713
  %v1777 = vpop.f32.mrf.mxu0
  %v1778 = vadd.f32 0.0, %v1777
  %1779 = vmatmul.f32.gmra.mxu0 %v1716
  %v1780 = vpop.f32.mrf.mxu0
  %v1781 = vadd.f32 0.0, %v1780
  %1782 = vmatmul.f32.gmra.mxu0 %v1719
  %v1783 = vpop.f32.mrf.mxu0
  %v1784 = vadd.f32 0.0, %v1783
  %1785 = vmatmul.f32.gmra.mxu0 %v1722
  %v1786 = vpop.f32.mrf.mxu0
  %v1787 = vadd.f32 0.0, %v1786
  %1788 = vmatmul.f32.gmra.mxu0 %v1725
  %v1789 = vpop.f32.mrf.mxu0
  %v1790 = vadd.f32 0.0, %v1789
  %1791 = vmatmul.f32.gmra.mxu0 %v1728
  %v1792 = vpop.f32.mrf.mxu0
  %v1793 = vadd.f32 0.0, %v1792
  %1794 = vmatmul.f32.gmra.mxu0 %v1731
  %v1795 = vpop.f32.mrf.mxu0
  %v1796 = vadd.f32 0.0, %v1795
  %1797 = vmatmul.f32.gmra.mxu0 %v1734
  %v1798 = vpop.f32.mrf.mxu0
  %v1799 = vadd.f32 0.0, %v1798
  %1800 = vmatmul.f32.gmra.mxu0 %v1737
  %v1801 = vpop.f32.mrf.mxu0
  %v1802 = vadd.f32 0.0, %v1801
  %1803 = vmatmul.f32.gmra.mxu0 %v1740
  %v1804 = vpop.f32.mrf.mxu0
  %v1805 = vadd.f32 0.0, %v1804
  %1806 = vmatmul.f32.gmra.mxu0 %v1743
  %v1807 = vpop.f32.mrf.mxu0
  %v1808 = vadd.f32 0.0, %v1807
  %1809 = vmatmul.f32.gmra.mxu0 %v1746
  %v1810 = vpop.f32.mrf.mxu0
  %v1811 = vadd.f32 0.0, %v1810
  %1812 = vmatmul.f32.gmra.mxu0 %v1749
  %v1813 = vpop.f32.mrf.mxu0
  %v1814 = vadd.f32 0.0, %v1813
  %1815 = vdwg.mxu0
  %v1817 = vsel %vm38, %v1668, 0
  %v1820 = vsel %vm38, %v1669, 0
  %v1823 = vsel %vm38, %v1670, 0
  %v1826 = vsel %vm38, %v1671, 0
  %v1829 = vsel %vm38, %v1672, 0
  %v1832 = vsel %vm38, %v1673, 0
  %v1835 = vsel %vm38, %v1674, 0
  %v1838 = vsel %vm38, %v1675, 0
  %v1841 = vsel %vm38, %v1676, 0
  %v1844 = vsel %vm38, %v1677, 0
  %v1847 = vsel %vm38, %v1678, 0
  %v1850 = vsel %vm38, %v1679, 0
  %v1853 = vsel %vm38, %v1680, 0
  %v1856 = vsel %vm38, %v1681, 0
  %v1859 = vsel %vm38, %v1682, 0
  %v1862 = vsel %vm38, %v1683, 0
  %1864 = vmatpush.msra.mxu0 0.0
  %1865 = vmatpush.msra.mxu0 0.0
  %1866 = vmatpush.msra.mxu0 0.0
  %1867 = vmatpush.msra.mxu0 0.0
  %1868 = vmatpush.msra.mxu0 0.0
  %1869 = vmatpush.msra.mxu0 0.0
  %1870 = vmatpush.msra.mxu0 0.0
  %1871 = vmatpush.msra.mxu0 0.0
  %1872 = vmatpush.msra.mxu0 0.0
  %1873 = vmatpush.msra.mxu0 0.0
  %1874 = vmatpush.msra.mxu0 0.0
  %1875 = vmatpush.msra.mxu0 0.0
  %1876 = vmatpush.msra.mxu0 0.0
  %1877 = vmatpush.msra.mxu0 0.0
  %1878 = vmatpush.msra.mxu0 0.0
  %1879 = vmatpush.msra.mxu0 %v1684
  %1880 = vmatmul.f32.gmra.mxu0 %v1817
  %v1881 = vpop.f32.mrf.mxu0
  %v1882 = vadd.f32 %v1769, %v1881
  %1883 = vmatmul.f32.gmra.mxu0 %v1820
  %v1884 = vpop.f32.mrf.mxu0
  %v1885 = vadd.f32 %v1772, %v1884
  %1886 = vmatmul.f32.gmra.mxu0 %v1823
  %v1887 = vpop.f32.mrf.mxu0
  %v1888 = vadd.f32 %v1775, %v1887
  %1889 = vmatmul.f32.gmra.mxu0 %v1826
  %v1890 = vpop.f32.mrf.mxu0
  %v1891 = vadd.f32 %v1778, %v1890
  %1892 = vmatmul.f32.gmra.mxu0 %v1829
  %v1893 = vpop.f32.mrf.mxu0
  %v1894 = vadd.f32 %v1781, %v1893
  %1895 = vmatmul.f32.gmra.mxu0 %v1832
  %v1896 = vpop.f32.mrf.mxu0
  %v1897 = vadd.f32 %v1784, %v1896
  %1898 = vmatmul.f32.gmra.mxu0 %v1835
  %v1899 = vpop.f32.mrf.mxu0
  %v1900 = vadd.f32 %v1787, %v1899
  %1901 = vmatmul.f32.gmra.mxu0 %v1838
  %v1902 = vpop.f32.mrf.mxu0
  %v1903 = vadd.f32 %v1790, %v1902
  %1904 = vmatmul.f32.gmra.mxu0 %v1841
  %v1905 = vpop.f32.mrf.mxu0
  %v1906 = vadd.f32 %v1793, %v1905
  %1907 = vmatmul.f32.gmra.mxu0 %v1844
  %v1908 = vpop.f32.mrf.mxu0
  %v1909 = vadd.f32 %v1796, %v1908
  %1910 = vmatmul.f32.gmra.mxu0 %v1847
  %v1911 = vpop.f32.mrf.mxu0
  %v1912 = vadd.f32 %v1799, %v1911
  %1913 = vmatmul.f32.gmra.mxu0 %v1850
  %v1914 = vpop.f32.mrf.mxu0
  %v1915 = vadd.f32 %v1802, %v1914
  %1916 = vmatmul.f32.gmra.mxu0 %v1853
  %v1917 = vpop.f32.mrf.mxu0
  %v1918 = vadd.f32 %v1805, %v1917
  %1919 = vmatmul.f32.gmra.mxu0 %v1856
  %v1920 = vpop.f32.mrf.mxu0
  %v1921 = vadd.f32 %v1808, %v1920
  %1922 = vmatmul.f32.gmra.mxu0 %v1859
  %v1923 = vpop.f32.mrf.mxu0
  %v1924 = vadd.f32 %v1811, %v1923
  %1925 = vmatmul.f32.gmra.mxu0 %v1862
  %v1926 = vpop.f32.mrf.mxu0
  %v1927 = vadd.f32 %v1814, %v1926
  %1928 = vdwg.mxu0
  %v1929 = vld [vmem:[#allocation2 + $0x2] sm:$0xff]
  %v1930 = vld [vmem:[#allocation2 + $0x12] sm:$0xff]
  %v1931 = vld [vmem:[#allocation2 + $0x22] sm:$0xff]
  %v1932 = vld [vmem:[#allocation2 + $0x32] sm:$0xff]
  %v1933 = vld [vmem:[#allocation2 + $0x42] sm:$0xff]
  %v1934 = vld [vmem:[#allocation2 + $0x52] sm:$0xff]
  %v1935 = vld [vmem:[#allocation2 + $0x62] sm:$0xff]
  %v1936 = vld [vmem:[#allocation2 + $0x72] sm:$0xff]
  %v1937 = vld [vmem:[#allocation2 + $0xa2] sm:$0xff]
  %v1938 = vld [vmem:[#allocation2 + $0xb2] sm:$0xff]
  %v1939 = vld [vmem:[#allocation2 + $0xc2] sm:$0xff]
  %v1940 = vld [vmem:[#allocation2 + $0xd2] sm:$0xff]
  %v1941 = vld [vmem:[#allocation2 + $0xe2] sm:$0xff]
  %v1942 = vld [vmem:[#allocation2 + $0xf2] sm:$0xff]
  %v1943 = vld [vmem:[#allocation2 + $0x102] sm:$0xff]
  %v1944 = vld [vmem:[#allocation2 + $0x112] sm:$0xff]
  %s1945 = scalar_lea.vmem %s3, 16
  %v1946 = vld [vmem:[%s1945] sm:$0xff]
  %v1948 = vsel %vm38, %v1929, 0
  %v1951 = vsel %vm38, %v1930, 0
  %v1954 = vsel %vm38, %v1931, 0
  %v1957 = vsel %vm38, %v1932, 0
  %v1960 = vsel %vm38, %v1933, 0
  %v1963 = vsel %vm38, %v1934, 0
  %v1966 = vsel %vm38, %v1935, 0
  %v1969 = vsel %vm38, %v1936, 0
  %v1972 = vsel %vm38, %v1937, 0
  %v1975 = vsel %vm38, %v1938, 0
  %v1978 = vsel %vm38, %v1939, 0
  %v1981 = vsel %vm38, %v1940, 0
  %v1984 = vsel %vm38, %v1941, 0
  %v1987 = vsel %vm38, %v1942, 0
  %v1990 = vsel %vm38, %v1943, 0
  %v1993 = vsel %vm38, %v1944, 0
  %1995 = vmatpush.msra.mxu0 0.0
  %1996 = vmatpush.msra.mxu0 0.0
  %1997 = vmatpush.msra.mxu0 0.0
  %1998 = vmatpush.msra.mxu0 0.0
  %1999 = vmatpush.msra.mxu0 0.0
  %2000 = vmatpush.msra.mxu0 0.0
  %2001 = vmatpush.msra.mxu0 0.0
  %2002 = vmatpush.msra.mxu0 0.0
  %2003 = vmatpush.msra.mxu0 0.0
  %2004 = vmatpush.msra.mxu0 0.0
  %2005 = vmatpush.msra.mxu0 0.0
  %2006 = vmatpush.msra.mxu0 0.0
  %2007 = vmatpush.msra.mxu0 0.0
  %2008 = vmatpush.msra.mxu0 0.0
  %2009 = vmatpush.msra.mxu0 0.0
  %2010 = vmatpush.msra.mxu0 %v1946
  %2011 = vmatmul.f32.gmra.mxu0 %v1948
  %v2012 = vpop.f32.mrf.mxu0
  %v2013 = vadd.f32 0.0, %v2012
  %2014 = vmatmul.f32.gmra.mxu0 %v1951
  %v2015 = vpop.f32.mrf.mxu0
  %v2016 = vadd.f32 0.0, %v2015
  %2017 = vmatmul.f32.gmra.mxu0 %v1954
  %v2018 = vpop.f32.mrf.mxu0
  %v2019 = vadd.f32 0.0, %v2018
  %2020 = vmatmul.f32.gmra.mxu0 %v1957
  %v2021 = vpop.f32.mrf.mxu0
  %v2022 = vadd.f32 0.0, %v2021
  %2023 = vmatmul.f32.gmra.mxu0 %v1960
  %v2024 = vpop.f32.mrf.mxu0
  %v2025 = vadd.f32 0.0, %v2024
  %2026 = vmatmul.f32.gmra.mxu0 %v1963
  %v2027 = vpop.f32.mrf.mxu0
  %v2028 = vadd.f32 0.0, %v2027
  %2029 = vmatmul.f32.gmra.mxu0 %v1966
  %v2030 = vpop.f32.mrf.mxu0
  %v2031 = vadd.f32 0.0, %v2030
  %2032 = vmatmul.f32.gmra.mxu0 %v1969
  %v2033 = vpop.f32.mrf.mxu0
  %v2034 = vadd.f32 0.0, %v2033
  %2035 = vmatmul.f32.gmra.mxu0 %v1972
  %v2036 = vpop.f32.mrf.mxu0
  %v2037 = vadd.f32 0.0, %v2036
  %2038 = vmatmul.f32.gmra.mxu0 %v1975
  %v2039 = vpop.f32.mrf.mxu0
  %v2040 = vadd.f32 0.0, %v2039
  %2041 = vmatmul.f32.gmra.mxu0 %v1978
  %v2042 = vpop.f32.mrf.mxu0
  %v2043 = vadd.f32 0.0, %v2042
  %2044 = vmatmul.f32.gmra.mxu0 %v1981
  %v2045 = vpop.f32.mrf.mxu0
  %v2046 = vadd.f32 0.0, %v2045
  %2047 = vmatmul.f32.gmra.mxu0 %v1984
  %v2048 = vpop.f32.mrf.mxu0
  %v2049 = vadd.f32 0.0, %v2048
  %2050 = vmatmul.f32.gmra.mxu0 %v1987
  %v2051 = vpop.f32.mrf.mxu0
  %v2052 = vadd.f32 0.0, %v2051
  %2053 = vmatmul.f32.gmra.mxu0 %v1990
  %v2054 = vpop.f32.mrf.mxu0
  %v2055 = vadd.f32 0.0, %v2054
  %2056 = vmatmul.f32.gmra.mxu0 %v1993
  %v2057 = vpop.f32.mrf.mxu0
  %v2058 = vadd.f32 0.0, %v2057
  %2059 = vdwg.mxu0
  %v2060 = vadd.f32 %v1882, %v2013
  %v2061 = vadd.f32 %v1885, %v2016
  %v2062 = vadd.f32 %v1888, %v2019
  %v2063 = vadd.f32 %v1891, %v2022
  %v2064 = vadd.f32 %v1894, %v2025
  %v2065 = vadd.f32 %v1897, %v2028
  %v2066 = vadd.f32 %v1900, %v2031
  %v2067 = vadd.f32 %v1903, %v2034
  %v2068 = vadd.f32 %v1906, %v2037
  %v2069 = vadd.f32 %v1909, %v2040
  %v2070 = vadd.f32 %v1912, %v2043
  %v2071 = vadd.f32 %v1915, %v2046
  %v2072 = vadd.f32 %v1918, %v2049
  %v2073 = vadd.f32 %v1921, %v2052
  %v2074 = vadd.f32 %v1924, %v2055
  %v2075 = vadd.f32 %v1927, %v2058
  %v2076 = vld [vmem:[%s1651] sm:$0xff]
  %v2077 = vld [vmem:[%s1651 + $0x10] sm:$0xff]
  %v2078 = vld [vmem:[%s1651 + $0x20] sm:$0xff]
  %v2079 = vld [vmem:[%s1651 + $0x30] sm:$0xff]
  %v2080 = vld [vmem:[%s1651 + $0x40] sm:$0xff]
  %v2081 = vld [vmem:[%s1651 + $0x50] sm:$0xff]
  %v2082 = vld [vmem:[%s1651 + $0x60] sm:$0xff]
  %v2083 = vld [vmem:[%s1651 + $0x70] sm:$0xff]
  %v2084 = vld [vmem:[%s1651 + $0xa0] sm:$0xff]
  %v2085 = vld [vmem:[%s1651 + $0xb0] sm:$0xff]
  %v2086 = vld [vmem:[%s1651 + $0xc0] sm:$0xff]
  %v2087 = vld [vmem:[%s1651 + $0xd0] sm:$0xff]
  %v2088 = vld [vmem:[%s1651 + $0xe0] sm:$0xff]
  %v2089 = vld [vmem:[%s1651 + $0xf0] sm:$0xff]
  %v2090 = vld [vmem:[%s1651 + $0x100] sm:$0xff]
  %v2091 = vld [vmem:[%s1651 + $0x110] sm:$0xff]
  %s2092 = scalar_lea.vmem %s3, 24
  %v2093 = vld [vmem:[%s2092] sm:$0xff]
  %v2095 = vsel %vm38, %v2076, 0
  %v2098 = vsel %vm38, %v2077, 0
  %v2101 = vsel %vm38, %v2078, 0
  %v2104 = vsel %vm38, %v2079, 0
  %v2107 = vsel %vm38, %v2080, 0
  %v2110 = vsel %vm38, %v2081, 0
  %v2113 = vsel %vm38, %v2082, 0
  %v2116 = vsel %vm38, %v2083, 0
  %v2119 = vsel %vm38, %v2084, 0
  %v2122 = vsel %vm38, %v2085, 0
  %v2125 = vsel %vm38, %v2086, 0
  %v2128 = vsel %vm38, %v2087, 0
  %v2131 = vsel %vm38, %v2088, 0
  %v2134 = vsel %vm38, %v2089, 0
  %v2137 = vsel %vm38, %v2090, 0
  %v2140 = vsel %vm38, %v2091, 0
  %2142 = vmatpush.msra.mxu0 0.0
  %2143 = vmatpush.msra.mxu0 0.0
  %2144 = vmatpush.msra.mxu0 0.0
  %2145 = vmatpush.msra.mxu0 0.0
  %2146 = vmatpush.msra.mxu0 0.0
  %2147 = vmatpush.msra.mxu0 0.0
  %2148 = vmatpush.msra.mxu0 0.0
  %2149 = vmatpush.msra.mxu0 0.0
  %2150 = vmatpush.msra.mxu0 0.0
  %2151 = vmatpush.msra.mxu0 0.0
  %2152 = vmatpush.msra.mxu0 0.0
  %2153 = vmatpush.msra.mxu0 0.0
  %2154 = vmatpush.msra.mxu0 0.0
  %2155 = vmatpush.msra.mxu0 0.0
  %2156 = vmatpush.msra.mxu0 0.0
  %2157 = vmatpush.msra.mxu0 %v2093
  %2158 = vmatmul.f32.gmra.mxu0 %v2095
  %v2159 = vpop.f32.mrf.mxu0
  %v2160 = vadd.f32 0.0, %v2159
  %2161 = vmatmul.f32.gmra.mxu0 %v2098
  %v2162 = vpop.f32.mrf.mxu0
  %v2163 = vadd.f32 0.0, %v2162
  %2164 = vmatmul.f32.gmra.mxu0 %v2101
  %v2165 = vpop.f32.mrf.mxu0
  %v2166 = vadd.f32 0.0, %v2165
  %2167 = vmatmul.f32.gmra.mxu0 %v2104
  %v2168 = vpop.f32.mrf.mxu0
  %v2169 = vadd.f32 0.0, %v2168
  %2170 = vmatmul.f32.gmra.mxu0 %v2107
  %v2171 = vpop.f32.mrf.mxu0
  %v2172 = vadd.f32 0.0, %v2171
  %2173 = vmatmul.f32.gmra.mxu0 %v2110
  %v2174 = vpop.f32.mrf.mxu0
  %v2175 = vadd.f32 0.0, %v2174
  %2176 = vmatmul.f32.gmra.mxu0 %v2113
  %v2177 = vpop.f32.mrf.mxu0
  %v2178 = vadd.f32 0.0, %v2177
  %2179 = vmatmul.f32.gmra.mxu0 %v2116
  %v2180 = vpop.f32.mrf.mxu0
  %v2181 = vadd.f32 0.0, %v2180
  %2182 = vmatmul.f32.gmra.mxu0 %v2119
  %v2183 = vpop.f32.mrf.mxu0
  %v2184 = vadd.f32 0.0, %v2183
  %2185 = vmatmul.f32.gmra.mxu0 %v2122
  %v2186 = vpop.f32.mrf.mxu0
  %v2187 = vadd.f32 0.0, %v2186
  %2188 = vmatmul.f32.gmra.mxu0 %v2125
  %v2189 = vpop.f32.mrf.mxu0
  %v2190 = vadd.f32 0.0, %v2189
  %2191 = vmatmul.f32.gmra.mxu0 %v2128
  %v2192 = vpop.f32.mrf.mxu0
  %v2193 = vadd.f32 0.0, %v2192
  %2194 = vmatmul.f32.gmra.mxu0 %v2131
  %v2195 = vpop.f32.mrf.mxu0
  %v2196 = vadd.f32 0.0, %v2195
  %2197 = vmatmul.f32.gmra.mxu0 %v2134
  %v2198 = vpop.f32.mrf.mxu0
  %v2199 = vadd.f32 0.0, %v2198
  %2200 = vmatmul.f32.gmra.mxu0 %v2137
  %v2201 = vpop.f32.mrf.mxu0
  %v2202 = vadd.f32 0.0, %v2201
  %2203 = vmatmul.f32.gmra.mxu0 %v2140
  %v2204 = vpop.f32.mrf.mxu0
  %v2205 = vadd.f32 0.0, %v2204
  %2206 = vdwg.mxu0
  %v2207 = vadd.f32 %v2060, %v2160
  %v2208 = vadd.f32 %v2061, %v2163
  %v2209 = vadd.f32 %v2062, %v2166
  %v2210 = vadd.f32 %v2063, %v2169
  %v2211 = vadd.f32 %v2064, %v2172
  %v2212 = vadd.f32 %v2065, %v2175
  %v2213 = vadd.f32 %v2066, %v2178
  %v2214 = vadd.f32 %v2067, %v2181
  %v2215 = vadd.f32 %v2068, %v2184
  %v2216 = vadd.f32 %v2069, %v2187
  %v2217 = vadd.f32 %v2070, %v2190
  %v2218 = vadd.f32 %v2071, %v2193
  %v2219 = vadd.f32 %v2072, %v2196
  %v2220 = vadd.f32 %v2073, %v2199
  %v2221 = vadd.f32 %v2074, %v2202
  %v2222 = vadd.f32 %v2075, %v2205
  %v2223 = vld [vmem:[%s1651 + $0x1] sm:$0xff]
  %v2224 = vld [vmem:[%s1651 + $0x11] sm:$0xff]
  %v2225 = vld [vmem:[%s1651 + $0x21] sm:$0xff]
  %v2226 = vld [vmem:[%s1651 + $0x31] sm:$0xff]
  %v2227 = vld [vmem:[%s1651 + $0x41] sm:$0xff]
  %v2228 = vld [vmem:[%s1651 + $0x51] sm:$0xff]
  %v2229 = vld [vmem:[%s1651 + $0x61] sm:$0xff]
  %v2230 = vld [vmem:[%s1651 + $0x71] sm:$0xff]
  %v2231 = vld [vmem:[%s1651 + $0xa1] sm:$0xff]
  %v2232 = vld [vmem:[%s1651 + $0xb1] sm:$0xff]
  %v2233 = vld [vmem:[%s1651 + $0xc1] sm:$0xff]
  %v2234 = vld [vmem:[%s1651 + $0xd1] sm:$0xff]
  %v2235 = vld [vmem:[%s1651 + $0xe1] sm:$0xff]
  %v2236 = vld [vmem:[%s1651 + $0xf1] sm:$0xff]
  %v2237 = vld [vmem:[%s1651 + $0x101] sm:$0xff]
  %v2238 = vld [vmem:[%s1651 + $0x111] sm:$0xff]
  %s2239 = scalar_lea.vmem %s3, 32
  %v2240 = vld [vmem:[%s2239] sm:$0xff]
  %v2242 = vsel %vm38, %v2223, 0
  %v2245 = vsel %vm38, %v2224, 0
  %v2248 = vsel %vm38, %v2225, 0
  %v2251 = vsel %vm38, %v2226, 0
  %v2254 = vsel %vm38, %v2227, 0
  %v2257 = vsel %vm38, %v2228, 0
  %v2260 = vsel %vm38, %v2229, 0
  %v2263 = vsel %vm38, %v2230, 0
  %v2266 = vsel %vm38, %v2231, 0
  %v2269 = vsel %vm38, %v2232, 0
  %v2272 = vsel %vm38, %v2233, 0
  %v2275 = vsel %vm38, %v2234, 0
  %v2278 = vsel %vm38, %v2235, 0
  %v2281 = vsel %vm38, %v2236, 0
  %v2284 = vsel %vm38, %v2237, 0
  %v2287 = vsel %vm38, %v2238, 0
  %2289 = vmatpush.msra.mxu0 0.0
  %2290 = vmatpush.msra.mxu0 0.0
  %2291 = vmatpush.msra.mxu0 0.0
  %2292 = vmatpush.msra.mxu0 0.0
  %2293 = vmatpush.msra.mxu0 0.0
  %2294 = vmatpush.msra.mxu0 0.0
  %2295 = vmatpush.msra.mxu0 0.0
  %2296 = vmatpush.msra.mxu0 0.0
  %2297 = vmatpush.msra.mxu0 0.0
  %2298 = vmatpush.msra.mxu0 0.0
  %2299 = vmatpush.msra.mxu0 0.0
  %2300 = vmatpush.msra.mxu0 0.0
  %2301 = vmatpush.msra.mxu0 0.0
  %2302 = vmatpush.msra.mxu0 0.0
  %2303 = vmatpush.msra.mxu0 0.0
  %2304 = vmatpush.msra.mxu0 %v2240
  %2305 = vmatmul.f32.gmra.mxu0 %v2242
  %v2306 = vpop.f32.mrf.mxu0
  %v2307 = vadd.f32 0.0, %v2306
  %2308 = vmatmul.f32.gmra.mxu0 %v2245
  %v2309 = vpop.f32.mrf.mxu0
  %v2310 = vadd.f32 0.0, %v2309
  %2311 = vmatmul.f32.gmra.mxu0 %v2248
  %v2312 = vpop.f32.mrf.mxu0
  %v2313 = vadd.f32 0.0, %v2312
  %2314 = vmatmul.f32.gmra.mxu0 %v2251
  %v2315 = vpop.f32.mrf.mxu0
  %v2316 = vadd.f32 0.0, %v2315
  %2317 = vmatmul.f32.gmra.mxu0 %v2254
  %v2318 = vpop.f32.mrf.mxu0
  %v2319 = vadd.f32 0.0, %v2318
  %2320 = vmatmul.f32.gmra.mxu0 %v2257
  %v2321 = vpop.f32.mrf.mxu0
  %v2322 = vadd.f32 0.0, %v2321
  %2323 = vmatmul.f32.gmra.mxu0 %v2260
  %v2324 = vpop.f32.mrf.mxu0
  %v2325 = vadd.f32 0.0, %v2324
  %2326 = vmatmul.f32.gmra.mxu0 %v2263
  %v2327 = vpop.f32.mrf.mxu0
  %v2328 = vadd.f32 0.0, %v2327
  %2329 = vmatmul.f32.gmra.mxu0 %v2266
  %v2330 = vpop.f32.mrf.mxu0
  %v2331 = vadd.f32 0.0, %v2330
  %2332 = vmatmul.f32.gmra.mxu0 %v2269
  %v2333 = vpop.f32.mrf.mxu0
  %v2334 = vadd.f32 0.0, %v2333
  %2335 = vmatmul.f32.gmra.mxu0 %v2272
  %v2336 = vpop.f32.mrf.mxu0
  %v2337 = vadd.f32 0.0, %v2336
  %2338 = vmatmul.f32.gmra.mxu0 %v2275
  %v2339 = vpop.f32.mrf.mxu0
  %v2340 = vadd.f32 0.0, %v2339
  %2341 = vmatmul.f32.gmra.mxu0 %v2278
  %v2342 = vpop.f32.mrf.mxu0
  %v2343 = vadd.f32 0.0, %v2342
  %2344 = vmatmul.f32.gmra.mxu0 %v2281
  %v2345 = vpop.f32.mrf.mxu0
  %v2346 = vadd.f32 0.0, %v2345
  %2347 = vmatmul.f32.gmra.mxu0 %v2284
  %v2348 = vpop.f32.mrf.mxu0
  %v2349 = vadd.f32 0.0, %v2348
  %2350 = vmatmul.f32.gmra.mxu0 %v2287
  %v2351 = vpop.f32.mrf.mxu0
  %v2352 = vadd.f32 0.0, %v2351
  %2353 = vdwg.mxu0
  %v2354 = vadd.f32 %v2207, %v2307
  %v2355 = vadd.f32 %v2208, %v2310
  %v2356 = vadd.f32 %v2209, %v2313
  %v2357 = vadd.f32 %v2210, %v2316
  %v2358 = vadd.f32 %v2211, %v2319
  %v2359 = vadd.f32 %v2212, %v2322
  %v2360 = vadd.f32 %v2213, %v2325
  %v2361 = vadd.f32 %v2214, %v2328
  %v2362 = vadd.f32 %v2215, %v2331
  %v2363 = vadd.f32 %v2216, %v2334
  %v2364 = vadd.f32 %v2217, %v2337
  %v2365 = vadd.f32 %v2218, %v2340
  %v2366 = vadd.f32 %v2219, %v2343
  %v2367 = vadd.f32 %v2220, %v2346
  %v2368 = vadd.f32 %v2221, %v2349
  %v2369 = vadd.f32 %v2222, %v2352
  %v2370 = vld [vmem:[%s1651 + $0x2] sm:$0xff]
  %v2371 = vld [vmem:[%s1651 + $0x12] sm:$0xff]
  %v2372 = vld [vmem:[%s1651 + $0x22] sm:$0xff]
  %v2373 = vld [vmem:[%s1651 + $0x32] sm:$0xff]
  %v2374 = vld [vmem:[%s1651 + $0x42] sm:$0xff]
  %v2375 = vld [vmem:[%s1651 + $0x52] sm:$0xff]
  %v2376 = vld [vmem:[%s1651 + $0x62] sm:$0xff]
  %v2377 = vld [vmem:[%s1651 + $0x72] sm:$0xff]
  %v2378 = vld [vmem:[%s1651 + $0xa2] sm:$0xff]
  %v2379 = vld [vmem:[%s1651 + $0xb2] sm:$0xff]
  %v2380 = vld [vmem:[%s1651 + $0xc2] sm:$0xff]
  %v2381 = vld [vmem:[%s1651 + $0xd2] sm:$0xff]
  %v2382 = vld [vmem:[%s1651 + $0xe2] sm:$0xff]
  %v2383 = vld [vmem:[%s1651 + $0xf2] sm:$0xff]
  %v2384 = vld [vmem:[%s1651 + $0x102] sm:$0xff]
  %v2385 = vld [vmem:[%s1651 + $0x112] sm:$0xff]
  %s2386 = scalar_lea.vmem %s3, 40
  %v2387 = vld [vmem:[%s2386] sm:$0xff]
  %v2389 = vsel %vm38, %v2370, 0
  %v2392 = vsel %vm38, %v2371, 0
  %v2395 = vsel %vm38, %v2372, 0
  %v2398 = vsel %vm38, %v2373, 0
  %v2401 = vsel %vm38, %v2374, 0
  %v2404 = vsel %vm38, %v2375, 0
  %v2407 = vsel %vm38, %v2376, 0
  %v2410 = vsel %vm38, %v2377, 0
  %v2413 = vsel %vm38, %v2378, 0
  %v2416 = vsel %vm38, %v2379, 0
  %v2419 = vsel %vm38, %v2380, 0
  %v2422 = vsel %vm38, %v2381, 0
  %v2425 = vsel %vm38, %v2382, 0
  %v2428 = vsel %vm38, %v2383, 0
  %v2431 = vsel %vm38, %v2384, 0
  %v2434 = vsel %vm38, %v2385, 0
  %2436 = vmatpush.msra.mxu0 0.0
  %2437 = vmatpush.msra.mxu0 0.0
  %2438 = vmatpush.msra.mxu0 0.0
  %2439 = vmatpush.msra.mxu0 0.0
  %2440 = vmatpush.msra.mxu0 0.0
  %2441 = vmatpush.msra.mxu0 0.0
  %2442 = vmatpush.msra.mxu0 0.0
  %2443 = vmatpush.msra.mxu0 0.0
  %2444 = vmatpush.msra.mxu0 0.0
  %2445 = vmatpush.msra.mxu0 0.0
  %2446 = vmatpush.msra.mxu0 0.0
  %2447 = vmatpush.msra.mxu0 0.0
  %2448 = vmatpush.msra.mxu0 0.0
  %2449 = vmatpush.msra.mxu0 0.0
  %2450 = vmatpush.msra.mxu0 0.0
  %2451 = vmatpush.msra.mxu0 %v2387
  %2452 = vmatmul.f32.gmra.mxu0 %v2389
  %v2453 = vpop.f32.mrf.mxu0
  %v2454 = vadd.f32 0.0, %v2453
  %2455 = vmatmul.f32.gmra.mxu0 %v2392
  %v2456 = vpop.f32.mrf.mxu0
  %v2457 = vadd.f32 0.0, %v2456
  %2458 = vmatmul.f32.gmra.mxu0 %v2395
  %v2459 = vpop.f32.mrf.mxu0
  %v2460 = vadd.f32 0.0, %v2459
  %2461 = vmatmul.f32.gmra.mxu0 %v2398
  %v2462 = vpop.f32.mrf.mxu0
  %v2463 = vadd.f32 0.0, %v2462
  %2464 = vmatmul.f32.gmra.mxu0 %v2401
  %v2465 = vpop.f32.mrf.mxu0
  %v2466 = vadd.f32 0.0, %v2465
  %2467 = vmatmul.f32.gmra.mxu0 %v2404
  %v2468 = vpop.f32.mrf.mxu0
  %v2469 = vadd.f32 0.0, %v2468
  %2470 = vmatmul.f32.gmra.mxu0 %v2407
  %v2471 = vpop.f32.mrf.mxu0
  %v2472 = vadd.f32 0.0, %v2471
  %2473 = vmatmul.f32.gmra.mxu0 %v2410
  %v2474 = vpop.f32.mrf.mxu0
  %v2475 = vadd.f32 0.0, %v2474
  %2476 = vmatmul.f32.gmra.mxu0 %v2413
  %v2477 = vpop.f32.mrf.mxu0
  %v2478 = vadd.f32 0.0, %v2477
  %2479 = vmatmul.f32.gmra.mxu0 %v2416
  %v2480 = vpop.f32.mrf.mxu0
  %v2481 = vadd.f32 0.0, %v2480
  %2482 = vmatmul.f32.gmra.mxu0 %v2419
  %v2483 = vpop.f32.mrf.mxu0
  %v2484 = vadd.f32 0.0, %v2483
  %2485 = vmatmul.f32.gmra.mxu0 %v2422
  %v2486 = vpop.f32.mrf.mxu0
  %v2487 = vadd.f32 0.0, %v2486
  %2488 = vmatmul.f32.gmra.mxu0 %v2425
  %v2489 = vpop.f32.mrf.mxu0
  %v2490 = vadd.f32 0.0, %v2489
  %2491 = vmatmul.f32.gmra.mxu0 %v2428
  %v2492 = vpop.f32.mrf.mxu0
  %v2493 = vadd.f32 0.0, %v2492
  %2494 = vmatmul.f32.gmra.mxu0 %v2431
  %v2495 = vpop.f32.mrf.mxu0
  %v2496 = vadd.f32 0.0, %v2495
  %2497 = vmatmul.f32.gmra.mxu0 %v2434
  %v2498 = vpop.f32.mrf.mxu0
  %v2499 = vadd.f32 0.0, %v2498
  %2500 = vdwg.mxu0
  %v2501 = vadd.f32 %v2354, %v2454
  %v2502 = vadd.f32 %v2355, %v2457
  %v2503 = vadd.f32 %v2356, %v2460
  %v2504 = vadd.f32 %v2357, %v2463
  %v2505 = vadd.f32 %v2358, %v2466
  %v2506 = vadd.f32 %v2359, %v2469
  %v2507 = vadd.f32 %v2360, %v2472
  %v2508 = vadd.f32 %v2361, %v2475
  %v2509 = vadd.f32 %v2362, %v2478
  %v2510 = vadd.f32 %v2363, %v2481
  %v2511 = vadd.f32 %v2364, %v2484
  %v2512 = vadd.f32 %v2365, %v2487
  %v2513 = vadd.f32 %v2366, %v2490
  %v2514 = vadd.f32 %v2367, %v2493
  %v2515 = vadd.f32 %v2368, %v2496
  %v2516 = vadd.f32 %v2369, %v2499
  %s2517 = scalar_lea.vmem [#allocation2], 32
  %v2518 = vld [vmem:[%s2517] sm:$0xff]
  %v2519 = vld [vmem:[%s2517 + $0x10] sm:$0xff]
  %v2520 = vld [vmem:[%s2517 + $0x20] sm:$0xff]
  %v2521 = vld [vmem:[%s2517 + $0x30] sm:$0xff]
  %v2522 = vld [vmem:[%s2517 + $0x40] sm:$0xff]
  %v2523 = vld [vmem:[%s2517 + $0x50] sm:$0xff]
  %v2524 = vld [vmem:[%s2517 + $0x60] sm:$0xff]
  %v2525 = vld [vmem:[%s2517 + $0x70] sm:$0xff]
  %v2526 = vld [vmem:[%s2517 + $0xa0] sm:$0xff]
  %v2527 = vld [vmem:[%s2517 + $0xb0] sm:$0xff]
  %v2528 = vld [vmem:[%s2517 + $0xc0] sm:$0xff]
  %v2529 = vld [vmem:[%s2517 + $0xd0] sm:$0xff]
  %v2530 = vld [vmem:[%s2517 + $0xe0] sm:$0xff]
  %v2531 = vld [vmem:[%s2517 + $0xf0] sm:$0xff]
  %v2532 = vld [vmem:[%s2517 + $0x100] sm:$0xff]
  %v2533 = vld [vmem:[%s2517 + $0x110] sm:$0xff]
  %s2534 = scalar_lea.vmem %s3, 48
  %v2535 = vld [vmem:[%s2534] sm:$0xff]
  %v2537 = vsel %vm38, %v2518, 0
  %v2540 = vsel %vm38, %v2519, 0
  %v2543 = vsel %vm38, %v2520, 0
  %v2546 = vsel %vm38, %v2521, 0
  %v2549 = vsel %vm38, %v2522, 0
  %v2552 = vsel %vm38, %v2523, 0
  %v2555 = vsel %vm38, %v2524, 0
  %v2558 = vsel %vm38, %v2525, 0
  %v2561 = vsel %vm38, %v2526, 0
  %v2564 = vsel %vm38, %v2527, 0
  %v2567 = vsel %vm38, %v2528, 0
  %v2570 = vsel %vm38, %v2529, 0
  %v2573 = vsel %vm38, %v2530, 0
  %v2576 = vsel %vm38, %v2531, 0
  %v2579 = vsel %vm38, %v2532, 0
  %v2582 = vsel %vm38, %v2533, 0
  %2584 = vmatpush.msra.mxu0 0.0
  %2585 = vmatpush.msra.mxu0 0.0
  %2586 = vmatpush.msra.mxu0 0.0
  %2587 = vmatpush.msra.mxu0 0.0
  %2588 = vmatpush.msra.mxu0 0.0
  %2589 = vmatpush.msra.mxu0 0.0
  %2590 = vmatpush.msra.mxu0 0.0
  %2591 = vmatpush.msra.mxu0 0.0
  %2592 = vmatpush.msra.mxu0 0.0
  %2593 = vmatpush.msra.mxu0 0.0
  %2594 = vmatpush.msra.mxu0 0.0
  %2595 = vmatpush.msra.mxu0 0.0
  %2596 = vmatpush.msra.mxu0 0.0
  %2597 = vmatpush.msra.mxu0 0.0
  %2598 = vmatpush.msra.mxu0 0.0
  %2599 = vmatpush.msra.mxu0 %v2535
  %2600 = vmatmul.f32.gmra.mxu0 %v2537
  %v2601 = vpop.f32.mrf.mxu0
  %v2602 = vadd.f32 0.0, %v2601
  %2603 = vmatmul.f32.gmra.mxu0 %v2540
  %v2604 = vpop.f32.mrf.mxu0
  %v2605 = vadd.f32 0.0, %v2604
  %2606 = vmatmul.f32.gmra.mxu0 %v2543
  %v2607 = vpop.f32.mrf.mxu0
  %v2608 = vadd.f32 0.0, %v2607
  %2609 = vmatmul.f32.gmra.mxu0 %v2546
  %v2610 = vpop.f32.mrf.mxu0
  %v2611 = vadd.f32 0.0, %v2610
  %2612 = vmatmul.f32.gmra.mxu0 %v2549
  %v2613 = vpop.f32.mrf.mxu0
  %v2614 = vadd.f32 0.0, %v2613
  %2615 = vmatmul.f32.gmra.mxu0 %v2552
  %v2616 = vpop.f32.mrf.mxu0
  %v2617 = vadd.f32 0.0, %v2616
  %2618 = vmatmul.f32.gmra.mxu0 %v2555
  %v2619 = vpop.f32.mrf.mxu0
  %v2620 = vadd.f32 0.0, %v2619
  %2621 = vmatmul.f32.gmra.mxu0 %v2558
  %v2622 = vpop.f32.mrf.mxu0
  %v2623 = vadd.f32 0.0, %v2622
  %2624 = vmatmul.f32.gmra.mxu0 %v2561
  %v2625 = vpop.f32.mrf.mxu0
  %v2626 = vadd.f32 0.0, %v2625
  %2627 = vmatmul.f32.gmra.mxu0 %v2564
  %v2628 = vpop.f32.mrf.mxu0
  %v2629 = vadd.f32 0.0, %v2628
  %2630 = vmatmul.f32.gmra.mxu0 %v2567
  %v2631 = vpop.f32.mrf.mxu0
  %v2632 = vadd.f32 0.0, %v2631
  %2633 = vmatmul.f32.gmra.mxu0 %v2570
  %v2634 = vpop.f32.mrf.mxu0
  %v2635 = vadd.f32 0.0, %v2634
  %2636 = vmatmul.f32.gmra.mxu0 %v2573
  %v2637 = vpop.f32.mrf.mxu0
  %v2638 = vadd.f32 0.0, %v2637
  %2639 = vmatmul.f32.gmra.mxu0 %v2576
  %v2640 = vpop.f32.mrf.mxu0
  %v2641 = vadd.f32 0.0, %v2640
  %2642 = vmatmul.f32.gmra.mxu0 %v2579
  %v2643 = vpop.f32.mrf.mxu0
  %v2644 = vadd.f32 0.0, %v2643
  %2645 = vmatmul.f32.gmra.mxu0 %v2582
  %v2646 = vpop.f32.mrf.mxu0
  %v2647 = vadd.f32 0.0, %v2646
  %2648 = vdwg.mxu0
  %v2649 = vadd.f32 %v2501, %v2602
  %v2650 = vadd.f32 %v2502, %v2605
  %v2651 = vadd.f32 %v2503, %v2608
  %v2652 = vadd.f32 %v2504, %v2611
  %v2653 = vadd.f32 %v2505, %v2614
  %v2654 = vadd.f32 %v2506, %v2617
  %v2655 = vadd.f32 %v2507, %v2620
  %v2656 = vadd.f32 %v2508, %v2623
  %v2657 = vadd.f32 %v2509, %v2626
  %v2658 = vadd.f32 %v2510, %v2629
  %v2659 = vadd.f32 %v2511, %v2632
  %v2660 = vadd.f32 %v2512, %v2635
  %v2661 = vadd.f32 %v2513, %v2638
  %v2662 = vadd.f32 %v2514, %v2641
  %v2663 = vadd.f32 %v2515, %v2644
  %v2664 = vadd.f32 %v2516, %v2647
  %v2665 = vld [vmem:[%s2517 + $0x1] sm:$0xff]
  %v2666 = vld [vmem:[%s2517 + $0x11] sm:$0xff]
  %v2667 = vld [vmem:[%s2517 + $0x21] sm:$0xff]
  %v2668 = vld [vmem:[%s2517 + $0x31] sm:$0xff]
  %v2669 = vld [vmem:[%s2517 + $0x41] sm:$0xff]
  %v2670 = vld [vmem:[%s2517 + $0x51] sm:$0xff]
  %v2671 = vld [vmem:[%s2517 + $0x61] sm:$0xff]
  %v2672 = vld [vmem:[%s2517 + $0x71] sm:$0xff]
  %v2673 = vld [vmem:[%s2517 + $0xa1] sm:$0xff]
  %v2674 = vld [vmem:[%s2517 + $0xb1] sm:$0xff]
  %v2675 = vld [vmem:[%s2517 + $0xc1] sm:$0xff]
  %v2676 = vld [vmem:[%s2517 + $0xd1] sm:$0xff]
  %v2677 = vld [vmem:[%s2517 + $0xe1] sm:$0xff]
  %v2678 = vld [vmem:[%s2517 + $0xf1] sm:$0xff]
  %v2679 = vld [vmem:[%s2517 + $0x101] sm:$0xff]
  %v2680 = vld [vmem:[%s2517 + $0x111] sm:$0xff]
  %s2681 = scalar_lea.vmem %s3, 56
  %v2682 = vld [vmem:[%s2681] sm:$0xff]
  %v2684 = vsel %vm38, %v2665, 0
  %v2687 = vsel %vm38, %v2666, 0
  %v2690 = vsel %vm38, %v2667, 0
  %v2693 = vsel %vm38, %v2668, 0
  %v2696 = vsel %vm38, %v2669, 0
  %v2699 = vsel %vm38, %v2670, 0
  %v2702 = vsel %vm38, %v2671, 0
  %v2705 = vsel %vm38, %v2672, 0
  %v2708 = vsel %vm38, %v2673, 0
  %v2711 = vsel %vm38, %v2674, 0
  %v2714 = vsel %vm38, %v2675, 0
  %v2717 = vsel %vm38, %v2676, 0
  %v2720 = vsel %vm38, %v2677, 0
  %v2723 = vsel %vm38, %v2678, 0
  %v2726 = vsel %vm38, %v2679, 0
  %v2729 = vsel %vm38, %v2680, 0
  %2731 = vmatpush.msra.mxu0 0.0
  %2732 = vmatpush.msra.mxu0 0.0
  %2733 = vmatpush.msra.mxu0 0.0
  %2734 = vmatpush.msra.mxu0 0.0
  %2735 = vmatpush.msra.mxu0 0.0
  %2736 = vmatpush.msra.mxu0 0.0
  %2737 = vmatpush.msra.mxu0 0.0
  %2738 = vmatpush.msra.mxu0 0.0
  %2739 = vmatpush.msra.mxu0 0.0
  %2740 = vmatpush.msra.mxu0 0.0
  %2741 = vmatpush.msra.mxu0 0.0
  %2742 = vmatpush.msra.mxu0 0.0
  %2743 = vmatpush.msra.mxu0 0.0
  %2744 = vmatpush.msra.mxu0 0.0
  %2745 = vmatpush.msra.mxu0 0.0
  %2746 = vmatpush.msra.mxu0 %v2682
  %2747 = vmatmul.f32.gmra.mxu0 %v2684
  %v2748 = vpop.f32.mrf.mxu0
  %v2749 = vadd.f32 0.0, %v2748
  %2750 = vmatmul.f32.gmra.mxu0 %v2687
  %v2751 = vpop.f32.mrf.mxu0
  %v2752 = vadd.f32 0.0, %v2751
  %2753 = vmatmul.f32.gmra.mxu0 %v2690
  %v2754 = vpop.f32.mrf.mxu0
  %v2755 = vadd.f32 0.0, %v2754
  %2756 = vmatmul.f32.gmra.mxu0 %v2693
  %v2757 = vpop.f32.mrf.mxu0
  %v2758 = vadd.f32 0.0, %v2757
  %2759 = vmatmul.f32.gmra.mxu0 %v2696
  %v2760 = vpop.f32.mrf.mxu0
  %v2761 = vadd.f32 0.0, %v2760
  %2762 = vmatmul.f32.gmra.mxu0 %v2699
  %v2763 = vpop.f32.mrf.mxu0
  %v2764 = vadd.f32 0.0, %v2763
  %2765 = vmatmul.f32.gmra.mxu0 %v2702
  %v2766 = vpop.f32.mrf.mxu0
  %v2767 = vadd.f32 0.0, %v2766
  %2768 = vmatmul.f32.gmra.mxu0 %v2705
  %v2769 = vpop.f32.mrf.mxu0
  %v2770 = vadd.f32 0.0, %v2769
  %2771 = vmatmul.f32.gmra.mxu0 %v2708
  %v2772 = vpop.f32.mrf.mxu0
  %v2773 = vadd.f32 0.0, %v2772
  %2774 = vmatmul.f32.gmra.mxu0 %v2711
  %v2775 = vpop.f32.mrf.mxu0
  %v2776 = vadd.f32 0.0, %v2775
  %2777 = vmatmul.f32.gmra.mxu0 %v2714
  %v2778 = vpop.f32.mrf.mxu0
  %v2779 = vadd.f32 0.0, %v2778
  %2780 = vmatmul.f32.gmra.mxu0 %v2717
  %v2781 = vpop.f32.mrf.mxu0
  %v2782 = vadd.f32 0.0, %v2781
  %2783 = vmatmul.f32.gmra.mxu0 %v2720
  %v2784 = vpop.f32.mrf.mxu0
  %v2785 = vadd.f32 0.0, %v2784
  %2786 = vmatmul.f32.gmra.mxu0 %v2723
  %v2787 = vpop.f32.mrf.mxu0
  %v2788 = vadd.f32 0.0, %v2787
  %2789 = vmatmul.f32.gmra.mxu0 %v2726
  %v2790 = vpop.f32.mrf.mxu0
  %v2791 = vadd.f32 0.0, %v2790
  %2792 = vmatmul.f32.gmra.mxu0 %v2729
  %v2793 = vpop.f32.mrf.mxu0
  %v2794 = vadd.f32 0.0, %v2793
  %2795 = vdwg.mxu0
  %v2796 = vadd.f32 %v2649, %v2749
  %v2797 = vadd.f32 %v2650, %v2752
  %v2798 = vadd.f32 %v2651, %v2755
  %v2799 = vadd.f32 %v2652, %v2758
  %v2800 = vadd.f32 %v2653, %v2761
  %v2801 = vadd.f32 %v2654, %v2764
  %v2802 = vadd.f32 %v2655, %v2767
  %v2803 = vadd.f32 %v2656, %v2770
  %v2804 = vadd.f32 %v2657, %v2773
  %v2805 = vadd.f32 %v2658, %v2776
  %v2806 = vadd.f32 %v2659, %v2779
  %v2807 = vadd.f32 %v2660, %v2782
  %v2808 = vadd.f32 %v2661, %v2785
  %v2809 = vadd.f32 %v2662, %v2788
  %v2810 = vadd.f32 %v2663, %v2791
  %v2811 = vadd.f32 %v2664, %v2794
  %v2812 = vld [vmem:[%s2517 + $0x2] sm:$0xff]
  %v2813 = vld [vmem:[%s2517 + $0x12] sm:$0xff]
  %v2814 = vld [vmem:[%s2517 + $0x22] sm:$0xff]
  %v2815 = vld [vmem:[%s2517 + $0x32] sm:$0xff]
  %v2816 = vld [vmem:[%s2517 + $0x42] sm:$0xff]
  %v2817 = vld [vmem:[%s2517 + $0x52] sm:$0xff]
  %v2818 = vld [vmem:[%s2517 + $0x62] sm:$0xff]
  %v2819 = vld [vmem:[%s2517 + $0x72] sm:$0xff]
  %v2820 = vld [vmem:[%s2517 + $0xa2] sm:$0xff]
  %v2821 = vld [vmem:[%s2517 + $0xb2] sm:$0xff]
  %v2822 = vld [vmem:[%s2517 + $0xc2] sm:$0xff]
  %v2823 = vld [vmem:[%s2517 + $0xd2] sm:$0xff]
  %v2824 = vld [vmem:[%s2517 + $0xe2] sm:$0xff]
  %v2825 = vld [vmem:[%s2517 + $0xf2] sm:$0xff]
  %v2826 = vld [vmem:[%s2517 + $0x102] sm:$0xff]
  %v2827 = vld [vmem:[%s2517 + $0x112] sm:$0xff]
  %s2828 = scalar_lea.vmem %s3, 64
  %v2829 = vld [vmem:[%s2828] sm:$0xff]
  %v2831 = vsel %vm38, %v2812, 0
  %v2834 = vsel %vm38, %v2813, 0
  %v2837 = vsel %vm38, %v2814, 0
  %v2840 = vsel %vm38, %v2815, 0
  %v2843 = vsel %vm38, %v2816, 0
  %v2846 = vsel %vm38, %v2817, 0
  %v2849 = vsel %vm38, %v2818, 0
  %v2852 = vsel %vm38, %v2819, 0
  %v2855 = vsel %vm38, %v2820, 0
  %v2858 = vsel %vm38, %v2821, 0
  %v2861 = vsel %vm38, %v2822, 0
  %v2864 = vsel %vm38, %v2823, 0
  %v2867 = vsel %vm38, %v2824, 0
  %v2870 = vsel %vm38, %v2825, 0
  %v2873 = vsel %vm38, %v2826, 0
  %v2876 = vsel %vm38, %v2827, 0
  %2878 = vmatpush.msra.mxu0 0.0
  %2879 = vmatpush.msra.mxu0 0.0
  %2880 = vmatpush.msra.mxu0 0.0
  %2881 = vmatpush.msra.mxu0 0.0
  %2882 = vmatpush.msra.mxu0 0.0
  %2883 = vmatpush.msra.mxu0 0.0
  %2884 = vmatpush.msra.mxu0 0.0
  %2885 = vmatpush.msra.mxu0 0.0
  %2886 = vmatpush.msra.mxu0 0.0
  %2887 = vmatpush.msra.mxu0 0.0
  %2888 = vmatpush.msra.mxu0 0.0
  %2889 = vmatpush.msra.mxu0 0.0
  %2890 = vmatpush.msra.mxu0 0.0
  %2891 = vmatpush.msra.mxu0 0.0
  %2892 = vmatpush.msra.mxu0 0.0
  %2893 = vmatpush.msra.mxu0 %v2829
  %2894 = vmatmul.f32.gmra.mxu0 %v2831
  %v2895 = vpop.f32.mrf.mxu0
  %v2896 = vadd.f32 0.0, %v2895
  %2897 = vmatmul.f32.gmra.mxu0 %v2834
  %v2898 = vpop.f32.mrf.mxu0
  %v2899 = vadd.f32 0.0, %v2898
  %2900 = vmatmul.f32.gmra.mxu0 %v2837
  %v2901 = vpop.f32.mrf.mxu0
  %v2902 = vadd.f32 0.0, %v2901
  %2903 = vmatmul.f32.gmra.mxu0 %v2840
  %v2904 = vpop.f32.mrf.mxu0
  %v2905 = vadd.f32 0.0, %v2904
  %2906 = vmatmul.f32.gmra.mxu0 %v2843
  %v2907 = vpop.f32.mrf.mxu0
  %v2908 = vadd.f32 0.0, %v2907
  %2909 = vmatmul.f32.gmra.mxu0 %v2846
  %v2910 = vpop.f32.mrf.mxu0
  %v2911 = vadd.f32 0.0, %v2910
  %2912 = vmatmul.f32.gmra.mxu0 %v2849
  %v2913 = vpop.f32.mrf.mxu0
  %v2914 = vadd.f32 0.0, %v2913
  %2915 = vmatmul.f32.gmra.mxu0 %v2852
  %v2916 = vpop.f32.mrf.mxu0
  %v2917 = vadd.f32 0.0, %v2916
  %2918 = vmatmul.f32.gmra.mxu0 %v2855
  %v2919 = vpop.f32.mrf.mxu0
  %v2920 = vadd.f32 0.0, %v2919
  %2921 = vmatmul.f32.gmra.mxu0 %v2858
  %v2922 = vpop.f32.mrf.mxu0
  %v2923 = vadd.f32 0.0, %v2922
  %2924 = vmatmul.f32.gmra.mxu0 %v2861
  %v2925 = vpop.f32.mrf.mxu0
  %v2926 = vadd.f32 0.0, %v2925
  %2927 = vmatmul.f32.gmra.mxu0 %v2864
  %v2928 = vpop.f32.mrf.mxu0
  %v2929 = vadd.f32 0.0, %v2928
  %2930 = vmatmul.f32.gmra.mxu0 %v2867
  %v2931 = vpop.f32.mrf.mxu0
  %v2932 = vadd.f32 0.0, %v2931
  %2933 = vmatmul.f32.gmra.mxu0 %v2870
  %v2934 = vpop.f32.mrf.mxu0
  %v2935 = vadd.f32 0.0, %v2934
  %2936 = vmatmul.f32.gmra.mxu0 %v2873
  %v2937 = vpop.f32.mrf.mxu0
  %v2938 = vadd.f32 0.0, %v2937
  %2939 = vmatmul.f32.gmra.mxu0 %v2876
  %v2940 = vpop.f32.mrf.mxu0
  %v2941 = vadd.f32 0.0, %v2940
  %2942 = vdwg.mxu0
  %v2943 = vadd.f32 %v2796, %v2896
  %v2944 = vadd.f32 %v2797, %v2899
  %v2945 = vadd.f32 %v2798, %v2902
  %v2946 = vadd.f32 %v2799, %v2905
  %v2947 = vadd.f32 %v2800, %v2908
  %v2948 = vadd.f32 %v2801, %v2911
  %v2949 = vadd.f32 %v2802, %v2914
  %v2950 = vadd.f32 %v2803, %v2917
  %v2951 = vadd.f32 %v2804, %v2920
  %v2952 = vadd.f32 %v2805, %v2923
  %v2953 = vadd.f32 %v2806, %v2926
  %v2954 = vadd.f32 %v2807, %v2929
  %v2955 = vadd.f32 %v2808, %v2932
  %v2956 = vadd.f32 %v2809, %v2935
  %v2957 = vadd.f32 %v2810, %v2938
  %v2958 = vadd.f32 %v2811, %v2941
  %v2959 = vld [vmem:[%s4] sm:$0x1]
  %v2961 = vperm.slane %v2959, 0
  %v2963 = vadd.f32 %v2943, %v2961
  %v2964 = vadd.f32 %v2944, %v2961
  %v2965 = vadd.f32 %v2945, %v2961
  %v2966 = vadd.f32 %v2946, %v2961
  %v2967 = vadd.f32 %v2947, %v2961
  %v2968 = vadd.f32 %v2948, %v2961
  %v2969 = vadd.f32 %v2949, %v2961
  %v2970 = vadd.f32 %v2950, %v2961
  %v2971 = vadd.f32 %v2951, %v2961
  %v2972 = vadd.f32 %v2952, %v2961
  %v2973 = vadd.f32 %v2953, %v2961
  %v2974 = vadd.f32 %v2954, %v2961
  %v2975 = vadd.f32 %v2955, %v2961
  %v2976 = vadd.f32 %v2956, %v2961
  %v2977 = vadd.f32 %v2957, %v2961
  %v2978 = vadd.f32 %v2958, %v2961
  %v2979 = vadd.f32 %v2963, %v189
  %v2980 = vadd.f32 %v2964, %v192
  %v2981 = vadd.f32 %v2965, %v195
  %v2982 = vadd.f32 %v2966, %v198
  %v2983 = vadd.f32 %v2967, %v201
  %v2984 = vadd.f32 %v2968, %v204
  %v2985 = vadd.f32 %v2969, %v207
  %v2986 = vadd.f32 %v2970, %v210
  %v2987 = vadd.f32 %v2971, %v213
  %v2988 = vadd.f32 %v2972, %v216
  %v2989 = vadd.f32 %v2973, %v219
  %v2990 = vadd.f32 %v2974, %v222
  %v2991 = vadd.f32 %v2975, %v225
  %v2992 = vadd.f32 %v2976, %v228
  %v2993 = vadd.f32 %v2977, %v231
  %v2994 = vadd.f32 %v2978, %v234
  %v2995 = vmax.f32 %v2979, 0.0
  %v2996 = vmax.f32 %v2980, 0.0
  %v2997 = vmax.f32 %v2981, 0.0
  %v2998 = vmax.f32 %v2982, 0.0
  %v2999 = vmax.f32 %v2983, 0.0
  %v3000 = vmax.f32 %v2984, 0.0
  %v3001 = vmax.f32 %v2985, 0.0
  %v3002 = vmax.f32 %v2986, 0.0
  %v3003 = vmax.f32 %v2987, 0.0
  %v3004 = vmax.f32 %v2988, 0.0
  %v3005 = vmax.f32 %v2989, 0.0
  %v3006 = vmax.f32 %v2990, 0.0
  %v3007 = vmax.f32 %v2991, 0.0
  %v3008 = vmax.f32 %v2992, 0.0
  %v3009 = vmax.f32 %v2993, 0.0
  %v3010 = vmax.f32 %v2994, 0.0
  %3011 = vst.msk [vmem:[%s1651 + $0x1] sm:$0xff] %vm38, %v2995
  %3012 = vst.msk [vmem:[%s1651 + $0x11] sm:$0xff] %vm38, %v2996
  %3013 = vst.msk [vmem:[%s1651 + $0x21] sm:$0xff] %vm38, %v2997
  %3014 = vst.msk [vmem:[%s1651 + $0x31] sm:$0xff] %vm38, %v2998
  %3015 = vst.msk [vmem:[%s1651 + $0x41] sm:$0xff] %vm38, %v2999
  %3016 = vst.msk [vmem:[%s1651 + $0x51] sm:$0xff] %vm38, %v3000
  %3017 = vst.msk [vmem:[%s1651 + $0x61] sm:$0xff] %vm38, %v3001
  %3018 = vst.msk [vmem:[%s1651 + $0x71] sm:$0xff] %vm38, %v3002
  %3019 = vst.msk [vmem:[%s1651 + $0xa1] sm:$0xff] %vm38, %v3003
  %3020 = vst.msk [vmem:[%s1651 + $0xb1] sm:$0xff] %vm38, %v3004
  %3021 = vst.msk [vmem:[%s1651 + $0xc1] sm:$0xff] %vm38, %v3005
  %3022 = vst.msk [vmem:[%s1651 + $0xd1] sm:$0xff] %vm38, %v3006
  %3023 = vst.msk [vmem:[%s1651 + $0xe1] sm:$0xff] %vm38, %v3007
  %3024 = vst.msk [vmem:[%s1651 + $0xf1] sm:$0xff] %vm38, %v3008
  %3025 = vst.msk [vmem:[%s1651 + $0x101] sm:$0xff] %vm38, %v3009
  %3026 = vst.msk [vmem:[%s1651 + $0x111] sm:$0xff] %vm38, %v3010
  %v3027 = vld [vmem:[#allocation2] sm:$0xff]
  %v3028 = vld [vmem:[#allocation2 + $0x10] sm:$0xff]
  %v3029 = vld [vmem:[#allocation2 + $0x20] sm:$0xff]
  %v3030 = vld [vmem:[#allocation2 + $0x30] sm:$0xff]
  %v3031 = vld [vmem:[#allocation2 + $0x40] sm:$0xff]
  %v3032 = vld [vmem:[#allocation2 + $0x50] sm:$0xff]
  %v3033 = vld [vmem:[#allocation2 + $0x60] sm:$0xff]
  %v3034 = vld [vmem:[#allocation2 + $0x70] sm:$0xff]
  %v3035 = vld [vmem:[#allocation2 + $0xa0] sm:$0xff]
  %v3036 = vld [vmem:[#allocation2 + $0xb0] sm:$0xff]
  %v3037 = vld [vmem:[#allocation2 + $0xc0] sm:$0xff]
  %v3038 = vld [vmem:[#allocation2 + $0xd0] sm:$0xff]
  %v3039 = vld [vmem:[#allocation2 + $0xe0] sm:$0xff]
  %v3040 = vld [vmem:[#allocation2 + $0xf0] sm:$0xff]
  %v3041 = vld [vmem:[#allocation2 + $0x100] sm:$0xff]
  %v3042 = vld [vmem:[#allocation2 + $0x110] sm:$0xff]
  %v3043 = vld [vmem:[%s7] sm:$0xff]
  %v3044 = vld [vmem:[#allocation2 + $0x1] sm:$0xff]
  %v3045 = vld [vmem:[#allocation2 + $0x11] sm:$0xff]
  %v3046 = vld [vmem:[#allocation2 + $0x21] sm:$0xff]
  %v3047 = vld [vmem:[#allocation2 + $0x31] sm:$0xff]
  %v3048 = vld [vmem:[#allocation2 + $0x41] sm:$0xff]
  %v3049 = vld [vmem:[#allocation2 + $0x51] sm:$0xff]
  %v3050 = vld [vmem:[#allocation2 + $0x61] sm:$0xff]
  %v3051 = vld [vmem:[#allocation2 + $0x71] sm:$0xff]
  %v3052 = vld [vmem:[#allocation2 + $0xa1] sm:$0xff]
  %v3053 = vld [vmem:[#allocation2 + $0xb1] sm:$0xff]
  %v3054 = vld [vmem:[#allocation2 + $0xc1] sm:$0xff]
  %v3055 = vld [vmem:[#allocation2 + $0xd1] sm:$0xff]
  %v3056 = vld [vmem:[#allocation2 + $0xe1] sm:$0xff]
  %v3057 = vld [vmem:[#allocation2 + $0xf1] sm:$0xff]
  %v3058 = vld [vmem:[#allocation2 + $0x101] sm:$0xff]
  %v3059 = vld [vmem:[#allocation2 + $0x111] sm:$0xff]
  %s3060 = scalar_lea.vmem %s7, 8
  %v3061 = vld [vmem:[%s3060] sm:$0xff]
  %v3063 = vsel %vm38, %v3044, 0
  %v3066 = vsel %vm38, %v3045, 0
  %v3069 = vsel %vm38, %v3046, 0
  %v3072 = vsel %vm38, %v3047, 0
  %v3075 = vsel %vm38, %v3048, 0
  %v3078 = vsel %vm38, %v3049, 0
  %v3081 = vsel %vm38, %v3050, 0
  %v3084 = vsel %vm38, %v3051, 0
  %v3087 = vsel %vm38, %v3052, 0
  %v3090 = vsel %vm38, %v3053, 0
  %v3093 = vsel %vm38, %v3054, 0
  %v3096 = vsel %vm38, %v3055, 0
  %v3099 = vsel %vm38, %v3056, 0
  %v3102 = vsel %vm38, %v3057, 0
  %v3105 = vsel %vm38, %v3058, 0
  %v3108 = vsel %vm38, %v3059, 0
  %3110 = vmatpush.msra.mxu0 0.0
  %3111 = vmatpush.msra.mxu0 0.0
  %3112 = vmatpush.msra.mxu0 0.0
  %3113 = vmatpush.msra.mxu0 0.0
  %3114 = vmatpush.msra.mxu0 0.0
  %3115 = vmatpush.msra.mxu0 0.0
  %3116 = vmatpush.msra.mxu0 0.0
  %3117 = vmatpush.msra.mxu0 0.0
  %3118 = vmatpush.msra.mxu0 0.0
  %3119 = vmatpush.msra.mxu0 0.0
  %3120 = vmatpush.msra.mxu0 0.0
  %3121 = vmatpush.msra.mxu0 0.0
  %3122 = vmatpush.msra.mxu0 0.0
  %3123 = vmatpush.msra.mxu0 0.0
  %3124 = vmatpush.msra.mxu0 0.0
  %3125 = vmatpush.msra.mxu0 %v3061
  %3126 = vmatmul.f32.gmra.mxu0 %v3063
  %v3127 = vpop.f32.mrf.mxu0
  %v3128 = vadd.f32 0.0, %v3127
  %3129 = vmatmul.f32.gmra.mxu0 %v3066
  %v3130 = vpop.f32.mrf.mxu0
  %v3131 = vadd.f32 0.0, %v3130
  %3132 = vmatmul.f32.gmra.mxu0 %v3069
  %v3133 = vpop.f32.mrf.mxu0
  %v3134 = vadd.f32 0.0, %v3133
  %3135 = vmatmul.f32.gmra.mxu0 %v3072
  %v3136 = vpop.f32.mrf.mxu0
  %v3137 = vadd.f32 0.0, %v3136
  %3138 = vmatmul.f32.gmra.mxu0 %v3075
  %v3139 = vpop.f32.mrf.mxu0
  %v3140 = vadd.f32 0.0, %v3139
  %3141 = vmatmul.f32.gmra.mxu0 %v3078
  %v3142 = vpop.f32.mrf.mxu0
  %v3143 = vadd.f32 0.0, %v3142
  %3144 = vmatmul.f32.gmra.mxu0 %v3081
  %v3145 = vpop.f32.mrf.mxu0
  %v3146 = vadd.f32 0.0, %v3145
  %3147 = vmatmul.f32.gmra.mxu0 %v3084
  %v3148 = vpop.f32.mrf.mxu0
  %v3149 = vadd.f32 0.0, %v3148
  %3150 = vmatmul.f32.gmra.mxu0 %v3087
  %v3151 = vpop.f32.mrf.mxu0
  %v3152 = vadd.f32 0.0, %v3151
  %3153 = vmatmul.f32.gmra.mxu0 %v3090
  %v3154 = vpop.f32.mrf.mxu0
  %v3155 = vadd.f32 0.0, %v3154
  %3156 = vmatmul.f32.gmra.mxu0 %v3093
  %v3157 = vpop.f32.mrf.mxu0
  %v3158 = vadd.f32 0.0, %v3157
  %3159 = vmatmul.f32.gmra.mxu0 %v3096
  %v3160 = vpop.f32.mrf.mxu0
  %v3161 = vadd.f32 0.0, %v3160
  %3162 = vmatmul.f32.gmra.mxu0 %v3099
  %v3163 = vpop.f32.mrf.mxu0
  %v3164 = vadd.f32 0.0, %v3163
  %3165 = vmatmul.f32.gmra.mxu0 %v3102
  %v3166 = vpop.f32.mrf.mxu0
  %v3167 = vadd.f32 0.0, %v3166
  %3168 = vmatmul.f32.gmra.mxu0 %v3105
  %v3169 = vpop.f32.mrf.mxu0
  %v3170 = vadd.f32 0.0, %v3169
  %3171 = vmatmul.f32.gmra.mxu0 %v3108
  %v3172 = vpop.f32.mrf.mxu0
  %v3173 = vadd.f32 0.0, %v3172
  %3174 = vdwg.mxu0
  %v3176 = vsel %vm38, %v3027, 0
  %v3179 = vsel %vm38, %v3028, 0
  %v3182 = vsel %vm38, %v3029, 0
  %v3185 = vsel %vm38, %v3030, 0
  %v3188 = vsel %vm38, %v3031, 0
  %v3191 = vsel %vm38, %v3032, 0
  %v3194 = vsel %vm38, %v3033, 0
  %v3197 = vsel %vm38, %v3034, 0
  %v3200 = vsel %vm38, %v3035, 0
  %v3203 = vsel %vm38, %v3036, 0
  %v3206 = vsel %vm38, %v3037, 0
  %v3209 = vsel %vm38, %v3038, 0
  %v3212 = vsel %vm38, %v3039, 0
  %v3215 = vsel %vm38, %v3040, 0
  %v3218 = vsel %vm38, %v3041, 0
  %v3221 = vsel %vm38, %v3042, 0
  %3223 = vmatpush.msra.mxu0 0.0
  %3224 = vmatpush.msra.mxu0 0.0
  %3225 = vmatpush.msra.mxu0 0.0
  %3226 = vmatpush.msra.mxu0 0.0
  %3227 = vmatpush.msra.mxu0 0.0
  %3228 = vmatpush.msra.mxu0 0.0
  %3229 = vmatpush.msra.mxu0 0.0
  %3230 = vmatpush.msra.mxu0 0.0
  %3231 = vmatpush.msra.mxu0 0.0
  %3232 = vmatpush.msra.mxu0 0.0
  %3233 = vmatpush.msra.mxu0 0.0
  %3234 = vmatpush.msra.mxu0 0.0
  %3235 = vmatpush.msra.mxu0 0.0
  %3236 = vmatpush.msra.mxu0 0.0
  %3237 = vmatpush.msra.mxu0 0.0
  %3238 = vmatpush.msra.mxu0 %v3043
  %3239 = vmatmul.f32.gmra.mxu0 %v3176
  %v3240 = vpop.f32.mrf.mxu0
  %v3241 = vadd.f32 %v3128, %v3240
  %3242 = vmatmul.f32.gmra.mxu0 %v3179
  %v3243 = vpop.f32.mrf.mxu0
  %v3244 = vadd.f32 %v3131, %v3243
  %3245 = vmatmul.f32.gmra.mxu0 %v3182
  %v3246 = vpop.f32.mrf.mxu0
  %v3247 = vadd.f32 %v3134, %v3246
  %3248 = vmatmul.f32.gmra.mxu0 %v3185
  %v3249 = vpop.f32.mrf.mxu0
  %v3250 = vadd.f32 %v3137, %v3249
  %3251 = vmatmul.f32.gmra.mxu0 %v3188
  %v3252 = vpop.f32.mrf.mxu0
  %v3253 = vadd.f32 %v3140, %v3252
  %3254 = vmatmul.f32.gmra.mxu0 %v3191
  %v3255 = vpop.f32.mrf.mxu0
  %v3256 = vadd.f32 %v3143, %v3255
  %3257 = vmatmul.f32.gmra.mxu0 %v3194
  %v3258 = vpop.f32.mrf.mxu0
  %v3259 = vadd.f32 %v3146, %v3258
  %3260 = vmatmul.f32.gmra.mxu0 %v3197
  %v3261 = vpop.f32.mrf.mxu0
  %v3262 = vadd.f32 %v3149, %v3261
  %3263 = vmatmul.f32.gmra.mxu0 %v3200
  %v3264 = vpop.f32.mrf.mxu0
  %v3265 = vadd.f32 %v3152, %v3264
  %3266 = vmatmul.f32.gmra.mxu0 %v3203
  %v3267 = vpop.f32.mrf.mxu0
  %v3268 = vadd.f32 %v3155, %v3267
  %3269 = vmatmul.f32.gmra.mxu0 %v3206
  %v3270 = vpop.f32.mrf.mxu0
  %v3271 = vadd.f32 %v3158, %v3270
  %3272 = vmatmul.f32.gmra.mxu0 %v3209
  %v3273 = vpop.f32.mrf.mxu0
  %v3274 = vadd.f32 %v3161, %v3273
  %3275 = vmatmul.f32.gmra.mxu0 %v3212
  %v3276 = vpop.f32.mrf.mxu0
  %v3277 = vadd.f32 %v3164, %v3276
  %3278 = vmatmul.f32.gmra.mxu0 %v3215
  %v3279 = vpop.f32.mrf.mxu0
  %v3280 = vadd.f32 %v3167, %v3279
  %3281 = vmatmul.f32.gmra.mxu0 %v3218
  %v3282 = vpop.f32.mrf.mxu0
  %v3283 = vadd.f32 %v3170, %v3282
  %3284 = vmatmul.f32.gmra.mxu0 %v3221
  %v3285 = vpop.f32.mrf.mxu0
  %v3286 = vadd.f32 %v3173, %v3285
  %3287 = vdwg.mxu0
  %v3288 = vld [vmem:[#allocation2 + $0x2] sm:$0xff]
  %v3289 = vld [vmem:[#allocation2 + $0x12] sm:$0xff]
  %v3290 = vld [vmem:[#allocation2 + $0x22] sm:$0xff]
  %v3291 = vld [vmem:[#allocation2 + $0x32] sm:$0xff]
  %v3292 = vld [vmem:[#allocation2 + $0x42] sm:$0xff]
  %v3293 = vld [vmem:[#allocation2 + $0x52] sm:$0xff]
  %v3294 = vld [vmem:[#allocation2 + $0x62] sm:$0xff]
  %v3295 = vld [vmem:[#allocation2 + $0x72] sm:$0xff]
  %v3296 = vld [vmem:[#allocation2 + $0xa2] sm:$0xff]
  %v3297 = vld [vmem:[#allocation2 + $0xb2] sm:$0xff]
  %v3298 = vld [vmem:[#allocation2 + $0xc2] sm:$0xff]
  %v3299 = vld [vmem:[#allocation2 + $0xd2] sm:$0xff]
  %v3300 = vld [vmem:[#allocation2 + $0xe2] sm:$0xff]
  %v3301 = vld [vmem:[#allocation2 + $0xf2] sm:$0xff]
  %v3302 = vld [vmem:[#allocation2 + $0x102] sm:$0xff]
  %v3303 = vld [vmem:[#allocation2 + $0x112] sm:$0xff]
  %s3304 = scalar_lea.vmem %s7, 16
  %v3305 = vld [vmem:[%s3304] sm:$0xff]
  %v3307 = vsel %vm38, %v3288, 0
  %v3310 = vsel %vm38, %v3289, 0
  %v3313 = vsel %vm38, %v3290, 0
  %v3316 = vsel %vm38, %v3291, 0
  %v3319 = vsel %vm38, %v3292, 0
  %v3322 = vsel %vm38, %v3293, 0
  %v3325 = vsel %vm38, %v3294, 0
  %v3328 = vsel %vm38, %v3295, 0
  %v3331 = vsel %vm38, %v3296, 0
  %v3334 = vsel %vm38, %v3297, 0
  %v3337 = vsel %vm38, %v3298, 0
  %v3340 = vsel %vm38, %v3299, 0
  %v3343 = vsel %vm38, %v3300, 0
  %v3346 = vsel %vm38, %v3301, 0
  %v3349 = vsel %vm38, %v3302, 0
  %v3352 = vsel %vm38, %v3303, 0
  %3354 = vmatpush.msra.mxu0 0.0
  %3355 = vmatpush.msra.mxu0 0.0
  %3356 = vmatpush.msra.mxu0 0.0
  %3357 = vmatpush.msra.mxu0 0.0
  %3358 = vmatpush.msra.mxu0 0.0
  %3359 = vmatpush.msra.mxu0 0.0
  %3360 = vmatpush.msra.mxu0 0.0
  %3361 = vmatpush.msra.mxu0 0.0
  %3362 = vmatpush.msra.mxu0 0.0
  %3363 = vmatpush.msra.mxu0 0.0
  %3364 = vmatpush.msra.mxu0 0.0
  %3365 = vmatpush.msra.mxu0 0.0
  %3366 = vmatpush.msra.mxu0 0.0
  %3367 = vmatpush.msra.mxu0 0.0
  %3368 = vmatpush.msra.mxu0 0.0
  %3369 = vmatpush.msra.mxu0 %v3305
  %3370 = vmatmul.f32.gmra.mxu0 %v3307
  %v3371 = vpop.f32.mrf.mxu0
  %v3372 = vadd.f32 0.0, %v3371
  %3373 = vmatmul.f32.gmra.mxu0 %v3310
  %v3374 = vpop.f32.mrf.mxu0
  %v3375 = vadd.f32 0.0, %v3374
  %3376 = vmatmul.f32.gmra.mxu0 %v3313
  %v3377 = vpop.f32.mrf.mxu0
  %v3378 = vadd.f32 0.0, %v3377
  %3379 = vmatmul.f32.gmra.mxu0 %v3316
  %v3380 = vpop.f32.mrf.mxu0
  %v3381 = vadd.f32 0.0, %v3380
  %3382 = vmatmul.f32.gmra.mxu0 %v3319
  %v3383 = vpop.f32.mrf.mxu0
  %v3384 = vadd.f32 0.0, %v3383
  %3385 = vmatmul.f32.gmra.mxu0 %v3322
  %v3386 = vpop.f32.mrf.mxu0
  %v3387 = vadd.f32 0.0, %v3386
  %3388 = vmatmul.f32.gmra.mxu0 %v3325
  %v3389 = vpop.f32.mrf.mxu0
  %v3390 = vadd.f32 0.0, %v3389
  %3391 = vmatmul.f32.gmra.mxu0 %v3328
  %v3392 = vpop.f32.mrf.mxu0
  %v3393 = vadd.f32 0.0, %v3392
  %3394 = vmatmul.f32.gmra.mxu0 %v3331
  %v3395 = vpop.f32.mrf.mxu0
  %v3396 = vadd.f32 0.0, %v3395
  %3397 = vmatmul.f32.gmra.mxu0 %v3334
  %v3398 = vpop.f32.mrf.mxu0
  %v3399 = vadd.f32 0.0, %v3398
  %3400 = vmatmul.f32.gmra.mxu0 %v3337
  %v3401 = vpop.f32.mrf.mxu0
  %v3402 = vadd.f32 0.0, %v3401
  %3403 = vmatmul.f32.gmra.mxu0 %v3340
  %v3404 = vpop.f32.mrf.mxu0
  %v3405 = vadd.f32 0.0, %v3404
  %3406 = vmatmul.f32.gmra.mxu0 %v3343
  %v3407 = vpop.f32.mrf.mxu0
  %v3408 = vadd.f32 0.0, %v3407
  %3409 = vmatmul.f32.gmra.mxu0 %v3346
  %v3410 = vpop.f32.mrf.mxu0
  %v3411 = vadd.f32 0.0, %v3410
  %3412 = vmatmul.f32.gmra.mxu0 %v3349
  %v3413 = vpop.f32.mrf.mxu0
  %v3414 = vadd.f32 0.0, %v3413
  %3415 = vmatmul.f32.gmra.mxu0 %v3352
  %v3416 = vpop.f32.mrf.mxu0
  %v3417 = vadd.f32 0.0, %v3416
  %3418 = vdwg.mxu0
  %v3419 = vadd.f32 %v3241, %v3372
  %v3420 = vadd.f32 %v3244, %v3375
  %v3421 = vadd.f32 %v3247, %v3378
  %v3422 = vadd.f32 %v3250, %v3381
  %v3423 = vadd.f32 %v3253, %v3384
  %v3424 = vadd.f32 %v3256, %v3387
  %v3425 = vadd.f32 %v3259, %v3390
  %v3426 = vadd.f32 %v3262, %v3393
  %v3427 = vadd.f32 %v3265, %v3396
  %v3428 = vadd.f32 %v3268, %v3399
  %v3429 = vadd.f32 %v3271, %v3402
  %v3430 = vadd.f32 %v3274, %v3405
  %v3431 = vadd.f32 %v3277, %v3408
  %v3432 = vadd.f32 %v3280, %v3411
  %v3433 = vadd.f32 %v3283, %v3414
  %v3434 = vadd.f32 %v3286, %v3417
  %v3435 = vld [vmem:[%s1651] sm:$0xff]
  %v3436 = vld [vmem:[%s1651 + $0x10] sm:$0xff]
  %v3437 = vld [vmem:[%s1651 + $0x20] sm:$0xff]
  %v3438 = vld [vmem:[%s1651 + $0x30] sm:$0xff]
  %v3439 = vld [vmem:[%s1651 + $0x40] sm:$0xff]
  %v3440 = vld [vmem:[%s1651 + $0x50] sm:$0xff]
  %v3441 = vld [vmem:[%s1651 + $0x60] sm:$0xff]
  %v3442 = vld [vmem:[%s1651 + $0x70] sm:$0xff]
  %v3443 = vld [vmem:[%s1651 + $0xa0] sm:$0xff]
  %v3444 = vld [vmem:[%s1651 + $0xb0] sm:$0xff]
  %v3445 = vld [vmem:[%s1651 + $0xc0] sm:$0xff]
  %v3446 = vld [vmem:[%s1651 + $0xd0] sm:$0xff]
  %v3447 = vld [vmem:[%s1651 + $0xe0] sm:$0xff]
  %v3448 = vld [vmem:[%s1651 + $0xf0] sm:$0xff]
  %v3449 = vld [vmem:[%s1651 + $0x100] sm:$0xff]
  %v3450 = vld [vmem:[%s1651 + $0x110] sm:$0xff]
  %s3451 = scalar_lea.vmem %s7, 24
  %v3452 = vld [vmem:[%s3451] sm:$0xff]
  %v3454 = vsel %vm38, %v3435, 0
  %v3457 = vsel %vm38, %v3436, 0
  %v3460 = vsel %vm38, %v3437, 0
  %v3463 = vsel %vm38, %v3438, 0
  %v3466 = vsel %vm38, %v3439, 0
  %v3469 = vsel %vm38, %v3440, 0
  %v3472 = vsel %vm38, %v3441, 0
  %v3475 = vsel %vm38, %v3442, 0
  %v3478 = vsel %vm38, %v3443, 0
  %v3481 = vsel %vm38, %v3444, 0
  %v3484 = vsel %vm38, %v3445, 0
  %v3487 = vsel %vm38, %v3446, 0
  %v3490 = vsel %vm38, %v3447, 0
  %v3493 = vsel %vm38, %v3448, 0
  %v3496 = vsel %vm38, %v3449, 0
  %v3499 = vsel %vm38, %v3450, 0
  %3501 = vmatpush.msra.mxu0 0.0
  %3502 = vmatpush.msra.mxu0 0.0
  %3503 = vmatpush.msra.mxu0 0.0
  %3504 = vmatpush.msra.mxu0 0.0
  %3505 = vmatpush.msra.mxu0 0.0
  %3506 = vmatpush.msra.mxu0 0.0
  %3507 = vmatpush.msra.mxu0 0.0
  %3508 = vmatpush.msra.mxu0 0.0
  %3509 = vmatpush.msra.mxu0 0.0
  %3510 = vmatpush.msra.mxu0 0.0
  %3511 = vmatpush.msra.mxu0 0.0
  %3512 = vmatpush.msra.mxu0 0.0
  %3513 = vmatpush.msra.mxu0 0.0
  %3514 = vmatpush.msra.mxu0 0.0
  %3515 = vmatpush.msra.mxu0 0.0
  %3516 = vmatpush.msra.mxu0 %v3452
  %3517 = vmatmul.f32.gmra.mxu0 %v3454
  %v3518 = vpop.f32.mrf.mxu0
  %v3519 = vadd.f32 0.0, %v3518
  %3520 = vmatmul.f32.gmra.mxu0 %v3457
  %v3521 = vpop.f32.mrf.mxu0
  %v3522 = vadd.f32 0.0, %v3521
  %3523 = vmatmul.f32.gmra.mxu0 %v3460
  %v3524 = vpop.f32.mrf.mxu0
  %v3525 = vadd.f32 0.0, %v3524
  %3526 = vmatmul.f32.gmra.mxu0 %v3463
  %v3527 = vpop.f32.mrf.mxu0
  %v3528 = vadd.f32 0.0, %v3527
  %3529 = vmatmul.f32.gmra.mxu0 %v3466
  %v3530 = vpop.f32.mrf.mxu0
  %v3531 = vadd.f32 0.0, %v3530
  %3532 = vmatmul.f32.gmra.mxu0 %v3469
  %v3533 = vpop.f32.mrf.mxu0
  %v3534 = vadd.f32 0.0, %v3533
  %3535 = vmatmul.f32.gmra.mxu0 %v3472
  %v3536 = vpop.f32.mrf.mxu0
  %v3537 = vadd.f32 0.0, %v3536
  %3538 = vmatmul.f32.gmra.mxu0 %v3475
  %v3539 = vpop.f32.mrf.mxu0
  %v3540 = vadd.f32 0.0, %v3539
  %3541 = vmatmul.f32.gmra.mxu0 %v3478
  %v3542 = vpop.f32.mrf.mxu0
  %v3543 = vadd.f32 0.0, %v3542
  %3544 = vmatmul.f32.gmra.mxu0 %v3481
  %v3545 = vpop.f32.mrf.mxu0
  %v3546 = vadd.f32 0.0, %v3545
  %3547 = vmatmul.f32.gmra.mxu0 %v3484
  %v3548 = vpop.f32.mrf.mxu0
  %v3549 = vadd.f32 0.0, %v3548
  %3550 = vmatmul.f32.gmra.mxu0 %v3487
  %v3551 = vpop.f32.mrf.mxu0
  %v3552 = vadd.f32 0.0, %v3551
  %3553 = vmatmul.f32.gmra.mxu0 %v3490
  %v3554 = vpop.f32.mrf.mxu0
  %v3555 = vadd.f32 0.0, %v3554
  %3556 = vmatmul.f32.gmra.mxu0 %v3493
  %v3557 = vpop.f32.mrf.mxu0
  %v3558 = vadd.f32 0.0, %v3557
  %3559 = vmatmul.f32.gmra.mxu0 %v3496
  %v3560 = vpop.f32.mrf.mxu0
  %v3561 = vadd.f32 0.0, %v3560
  %3562 = vmatmul.f32.gmra.mxu0 %v3499
  %v3563 = vpop.f32.mrf.mxu0
  %v3564 = vadd.f32 0.0, %v3563
  %3565 = vdwg.mxu0
  %v3566 = vadd.f32 %v3419, %v3519
  %v3567 = vadd.f32 %v3420, %v3522
  %v3568 = vadd.f32 %v3421, %v3525
  %v3569 = vadd.f32 %v3422, %v3528
  %v3570 = vadd.f32 %v3423, %v3531
  %v3571 = vadd.f32 %v3424, %v3534
  %v3572 = vadd.f32 %v3425, %v3537
  %v3573 = vadd.f32 %v3426, %v3540
  %v3574 = vadd.f32 %v3427, %v3543
  %v3575 = vadd.f32 %v3428, %v3546
  %v3576 = vadd.f32 %v3429, %v3549
  %v3577 = vadd.f32 %v3430, %v3552
  %v3578 = vadd.f32 %v3431, %v3555
  %v3579 = vadd.f32 %v3432, %v3558
  %v3580 = vadd.f32 %v3433, %v3561
  %v3581 = vadd.f32 %v3434, %v3564
  %v3582 = vld [vmem:[%s1651 + $0x1] sm:$0xff]
  %v3583 = vld [vmem:[%s1651 + $0x11] sm:$0xff]
  %v3584 = vld [vmem:[%s1651 + $0x21] sm:$0xff]
  %v3585 = vld [vmem:[%s1651 + $0x31] sm:$0xff]
  %v3586 = vld [vmem:[%s1651 + $0x41] sm:$0xff]
  %v3587 = vld [vmem:[%s1651 + $0x51] sm:$0xff]
  %v3588 = vld [vmem:[%s1651 + $0x61] sm:$0xff]
  %v3589 = vld [vmem:[%s1651 + $0x71] sm:$0xff]
  %v3590 = vld [vmem:[%s1651 + $0xa1] sm:$0xff]
  %v3591 = vld [vmem:[%s1651 + $0xb1] sm:$0xff]
  %v3592 = vld [vmem:[%s1651 + $0xc1] sm:$0xff]
  %v3593 = vld [vmem:[%s1651 + $0xd1] sm:$0xff]
  %v3594 = vld [vmem:[%s1651 + $0xe1] sm:$0xff]
  %v3595 = vld [vmem:[%s1651 + $0xf1] sm:$0xff]
  %v3596 = vld [vmem:[%s1651 + $0x101] sm:$0xff]
  %v3597 = vld [vmem:[%s1651 + $0x111] sm:$0xff]
  %s3598 = scalar_lea.vmem %s7, 32
  %v3599 = vld [vmem:[%s3598] sm:$0xff]
  %v3601 = vsel %vm38, %v3582, 0
  %v3604 = vsel %vm38, %v3583, 0
  %v3607 = vsel %vm38, %v3584, 0
  %v3610 = vsel %vm38, %v3585, 0
  %v3613 = vsel %vm38, %v3586, 0
  %v3616 = vsel %vm38, %v3587, 0
  %v3619 = vsel %vm38, %v3588, 0
  %v3622 = vsel %vm38, %v3589, 0
  %v3625 = vsel %vm38, %v3590, 0
  %v3628 = vsel %vm38, %v3591, 0
  %v3631 = vsel %vm38, %v3592, 0
  %v3634 = vsel %vm38, %v3593, 0
  %v3637 = vsel %vm38, %v3594, 0
  %v3640 = vsel %vm38, %v3595, 0
  %v3643 = vsel %vm38, %v3596, 0
  %v3646 = vsel %vm38, %v3597, 0
  %3648 = vmatpush.msra.mxu0 0.0
  %3649 = vmatpush.msra.mxu0 0.0
  %3650 = vmatpush.msra.mxu0 0.0
  %3651 = vmatpush.msra.mxu0 0.0
  %3652 = vmatpush.msra.mxu0 0.0
  %3653 = vmatpush.msra.mxu0 0.0
  %3654 = vmatpush.msra.mxu0 0.0
  %3655 = vmatpush.msra.mxu0 0.0
  %3656 = vmatpush.msra.mxu0 0.0
  %3657 = vmatpush.msra.mxu0 0.0
  %3658 = vmatpush.msra.mxu0 0.0
  %3659 = vmatpush.msra.mxu0 0.0
  %3660 = vmatpush.msra.mxu0 0.0
  %3661 = vmatpush.msra.mxu0 0.0
  %3662 = vmatpush.msra.mxu0 0.0
  %3663 = vmatpush.msra.mxu0 %v3599
  %3664 = vmatmul.f32.gmra.mxu0 %v3601
  %v3665 = vpop.f32.mrf.mxu0
  %v3666 = vadd.f32 0.0, %v3665
  %3667 = vmatmul.f32.gmra.mxu0 %v3604
  %v3668 = vpop.f32.mrf.mxu0
  %v3669 = vadd.f32 0.0, %v3668
  %3670 = vmatmul.f32.gmra.mxu0 %v3607
  %v3671 = vpop.f32.mrf.mxu0
  %v3672 = vadd.f32 0.0, %v3671
  %3673 = vmatmul.f32.gmra.mxu0 %v3610
  %v3674 = vpop.f32.mrf.mxu0
  %v3675 = vadd.f32 0.0, %v3674
  %3676 = vmatmul.f32.gmra.mxu0 %v3613
  %v3677 = vpop.f32.mrf.mxu0
  %v3678 = vadd.f32 0.0, %v3677
  %3679 = vmatmul.f32.gmra.mxu0 %v3616
  %v3680 = vpop.f32.mrf.mxu0
  %v3681 = vadd.f32 0.0, %v3680
  %3682 = vmatmul.f32.gmra.mxu0 %v3619
  %v3683 = vpop.f32.mrf.mxu0
  %v3684 = vadd.f32 0.0, %v3683
  %3685 = vmatmul.f32.gmra.mxu0 %v3622
  %v3686 = vpop.f32.mrf.mxu0
  %v3687 = vadd.f32 0.0, %v3686
  %3688 = vmatmul.f32.gmra.mxu0 %v3625
  %v3689 = vpop.f32.mrf.mxu0
  %v3690 = vadd.f32 0.0, %v3689
  %3691 = vmatmul.f32.gmra.mxu0 %v3628
  %v3692 = vpop.f32.mrf.mxu0
  %v3693 = vadd.f32 0.0, %v3692
  %3694 = vmatmul.f32.gmra.mxu0 %v3631
  %v3695 = vpop.f32.mrf.mxu0
  %v3696 = vadd.f32 0.0, %v3695
  %3697 = vmatmul.f32.gmra.mxu0 %v3634
  %v3698 = vpop.f32.mrf.mxu0
  %v3699 = vadd.f32 0.0, %v3698
  %3700 = vmatmul.f32.gmra.mxu0 %v3637
  %v3701 = vpop.f32.mrf.mxu0
  %v3702 = vadd.f32 0.0, %v3701
  %3703 = vmatmul.f32.gmra.mxu0 %v3640
  %v3704 = vpop.f32.mrf.mxu0
  %v3705 = vadd.f32 0.0, %v3704
  %3706 = vmatmul.f32.gmra.mxu0 %v3643
  %v3707 = vpop.f32.mrf.mxu0
  %v3708 = vadd.f32 0.0, %v3707
  %3709 = vmatmul.f32.gmra.mxu0 %v3646
  %v3710 = vpop.f32.mrf.mxu0
  %v3711 = vadd.f32 0.0, %v3710
  %3712 = vdwg.mxu0
  %v3713 = vadd.f32 %v3566, %v3666
  %v3714 = vadd.f32 %v3567, %v3669
  %v3715 = vadd.f32 %v3568, %v3672
  %v3716 = vadd.f32 %v3569, %v3675
  %v3717 = vadd.f32 %v3570, %v3678
  %v3718 = vadd.f32 %v3571, %v3681
  %v3719 = vadd.f32 %v3572, %v3684
  %v3720 = vadd.f32 %v3573, %v3687
  %v3721 = vadd.f32 %v3574, %v3690
  %v3722 = vadd.f32 %v3575, %v3693
  %v3723 = vadd.f32 %v3576, %v3696
  %v3724 = vadd.f32 %v3577, %v3699
  %v3725 = vadd.f32 %v3578, %v3702
  %v3726 = vadd.f32 %v3579, %v3705
  %v3727 = vadd.f32 %v3580, %v3708
  %v3728 = vadd.f32 %v3581, %v3711
  %v3729 = vld [vmem:[%s1651 + $0x2] sm:$0xff]
  %v3730 = vld [vmem:[%s1651 + $0x12] sm:$0xff]
  %v3731 = vld [vmem:[%s1651 + $0x22] sm:$0xff]
  %v3732 = vld [vmem:[%s1651 + $0x32] sm:$0xff]
  %v3733 = vld [vmem:[%s1651 + $0x42] sm:$0xff]
  %v3734 = vld [vmem:[%s1651 + $0x52] sm:$0xff]
  %v3735 = vld [vmem:[%s1651 + $0x62] sm:$0xff]
  %v3736 = vld [vmem:[%s1651 + $0x72] sm:$0xff]
  %v3737 = vld [vmem:[%s1651 + $0xa2] sm:$0xff]
  %v3738 = vld [vmem:[%s1651 + $0xb2] sm:$0xff]
  %v3739 = vld [vmem:[%s1651 + $0xc2] sm:$0xff]
  %v3740 = vld [vmem:[%s1651 + $0xd2] sm:$0xff]
  %v3741 = vld [vmem:[%s1651 + $0xe2] sm:$0xff]
  %v3742 = vld [vmem:[%s1651 + $0xf2] sm:$0xff]
  %v3743 = vld [vmem:[%s1651 + $0x102] sm:$0xff]
  %v3744 = vld [vmem:[%s1651 + $0x112] sm:$0xff]
  %s3745 = scalar_lea.vmem %s7, 40
  %v3746 = vld [vmem:[%s3745] sm:$0xff]
  %v3748 = vsel %vm38, %v3729, 0
  %v3751 = vsel %vm38, %v3730, 0
  %v3754 = vsel %vm38, %v3731, 0
  %v3757 = vsel %vm38, %v3732, 0
  %v3760 = vsel %vm38, %v3733, 0
  %v3763 = vsel %vm38, %v3734, 0
  %v3766 = vsel %vm38, %v3735, 0
  %v3769 = vsel %vm38, %v3736, 0
  %v3772 = vsel %vm38, %v3737, 0
  %v3775 = vsel %vm38, %v3738, 0
  %v3778 = vsel %vm38, %v3739, 0
  %v3781 = vsel %vm38, %v3740, 0
  %v3784 = vsel %vm38, %v3741, 0
  %v3787 = vsel %vm38, %v3742, 0
  %v3790 = vsel %vm38, %v3743, 0
  %v3793 = vsel %vm38, %v3744, 0
  %3795 = vmatpush.msra.mxu0 0.0
  %3796 = vmatpush.msra.mxu0 0.0
  %3797 = vmatpush.msra.mxu0 0.0
  %3798 = vmatpush.msra.mxu0 0.0
  %3799 = vmatpush.msra.mxu0 0.0
  %3800 = vmatpush.msra.mxu0 0.0
  %3801 = vmatpush.msra.mxu0 0.0
  %3802 = vmatpush.msra.mxu0 0.0
  %3803 = vmatpush.msra.mxu0 0.0
  %3804 = vmatpush.msra.mxu0 0.0
  %3805 = vmatpush.msra.mxu0 0.0
  %3806 = vmatpush.msra.mxu0 0.0
  %3807 = vmatpush.msra.mxu0 0.0
  %3808 = vmatpush.msra.mxu0 0.0
  %3809 = vmatpush.msra.mxu0 0.0
  %3810 = vmatpush.msra.mxu0 %v3746
  %3811 = vmatmul.f32.gmra.mxu0 %v3748
  %v3812 = vpop.f32.mrf.mxu0
  %v3813 = vadd.f32 0.0, %v3812
  %3814 = vmatmul.f32.gmra.mxu0 %v3751
  %v3815 = vpop.f32.mrf.mxu0
  %v3816 = vadd.f32 0.0, %v3815
  %3817 = vmatmul.f32.gmra.mxu0 %v3754
  %v3818 = vpop.f32.mrf.mxu0
  %v3819 = vadd.f32 0.0, %v3818
  %3820 = vmatmul.f32.gmra.mxu0 %v3757
  %v3821 = vpop.f32.mrf.mxu0
  %v3822 = vadd.f32 0.0, %v3821
  %3823 = vmatmul.f32.gmra.mxu0 %v3760
  %v3824 = vpop.f32.mrf.mxu0
  %v3825 = vadd.f32 0.0, %v3824
  %3826 = vmatmul.f32.gmra.mxu0 %v3763
  %v3827 = vpop.f32.mrf.mxu0
  %v3828 = vadd.f32 0.0, %v3827
  %3829 = vmatmul.f32.gmra.mxu0 %v3766
  %v3830 = vpop.f32.mrf.mxu0
  %v3831 = vadd.f32 0.0, %v3830
  %3832 = vmatmul.f32.gmra.mxu0 %v3769
  %v3833 = vpop.f32.mrf.mxu0
  %v3834 = vadd.f32 0.0, %v3833
  %3835 = vmatmul.f32.gmra.mxu0 %v3772
  %v3836 = vpop.f32.mrf.mxu0
  %v3837 = vadd.f32 0.0, %v3836
  %3838 = vmatmul.f32.gmra.mxu0 %v3775
  %v3839 = vpop.f32.mrf.mxu0
  %v3840 = vadd.f32 0.0, %v3839
  %3841 = vmatmul.f32.gmra.mxu0 %v3778
  %v3842 = vpop.f32.mrf.mxu0
  %v3843 = vadd.f32 0.0, %v3842
  %3844 = vmatmul.f32.gmra.mxu0 %v3781
  %v3845 = vpop.f32.mrf.mxu0
  %v3846 = vadd.f32 0.0, %v3845
  %3847 = vmatmul.f32.gmra.mxu0 %v3784
  %v3848 = vpop.f32.mrf.mxu0
  %v3849 = vadd.f32 0.0, %v3848
  %3850 = vmatmul.f32.gmra.mxu0 %v3787
  %v3851 = vpop.f32.mrf.mxu0
  %v3852 = vadd.f32 0.0, %v3851
  %3853 = vmatmul.f32.gmra.mxu0 %v3790
  %v3854 = vpop.f32.mrf.mxu0
  %v3855 = vadd.f32 0.0, %v3854
  %3856 = vmatmul.f32.gmra.mxu0 %v3793
  %v3857 = vpop.f32.mrf.mxu0
  %v3858 = vadd.f32 0.0, %v3857
  %3859 = vdwg.mxu0
  %v3860 = vadd.f32 %v3713, %v3813
  %v3861 = vadd.f32 %v3714, %v3816
  %v3862 = vadd.f32 %v3715, %v3819
  %v3863 = vadd.f32 %v3716, %v3822
  %v3864 = vadd.f32 %v3717, %v3825
  %v3865 = vadd.f32 %v3718, %v3828
  %v3866 = vadd.f32 %v3719, %v3831
  %v3867 = vadd.f32 %v3720, %v3834
  %v3868 = vadd.f32 %v3721, %v3837
  %v3869 = vadd.f32 %v3722, %v3840
  %v3870 = vadd.f32 %v3723, %v3843
  %v3871 = vadd.f32 %v3724, %v3846
  %v3872 = vadd.f32 %v3725, %v3849
  %v3873 = vadd.f32 %v3726, %v3852
  %v3874 = vadd.f32 %v3727, %v3855
  %v3875 = vadd.f32 %v3728, %v3858
  %v3876 = vld [vmem:[%s2517] sm:$0xff]
  %v3877 = vld [vmem:[%s2517 + $0x10] sm:$0xff]
  %v3878 = vld [vmem:[%s2517 + $0x20] sm:$0xff]
  %v3879 = vld [vmem:[%s2517 + $0x30] sm:$0xff]
  %v3880 = vld [vmem:[%s2517 + $0x40] sm:$0xff]
  %v3881 = vld [vmem:[%s2517 + $0x50] sm:$0xff]
  %v3882 = vld [vmem:[%s2517 + $0x60] sm:$0xff]
  %v3883 = vld [vmem:[%s2517 + $0x70] sm:$0xff]
  %v3884 = vld [vmem:[%s2517 + $0xa0] sm:$0xff]
  %v3885 = vld [vmem:[%s2517 + $0xb0] sm:$0xff]
  %v3886 = vld [vmem:[%s2517 + $0xc0] sm:$0xff]
  %v3887 = vld [vmem:[%s2517 + $0xd0] sm:$0xff]
  %v3888 = vld [vmem:[%s2517 + $0xe0] sm:$0xff]
  %v3889 = vld [vmem:[%s2517 + $0xf0] sm:$0xff]
  %v3890 = vld [vmem:[%s2517 + $0x100] sm:$0xff]
  %v3891 = vld [vmem:[%s2517 + $0x110] sm:$0xff]
  %s3892 = scalar_lea.vmem %s7, 48
  %v3893 = vld [vmem:[%s3892] sm:$0xff]
  %v3895 = vsel %vm38, %v3876, 0
  %v3898 = vsel %vm38, %v3877, 0
  %v3901 = vsel %vm38, %v3878, 0
  %v3904 = vsel %vm38, %v3879, 0
  %v3907 = vsel %vm38, %v3880, 0
  %v3910 = vsel %vm38, %v3881, 0
  %v3913 = vsel %vm38, %v3882, 0
  %v3916 = vsel %vm38, %v3883, 0
  %v3919 = vsel %vm38, %v3884, 0
  %v3922 = vsel %vm38, %v3885, 0
  %v3925 = vsel %vm38, %v3886, 0
  %v3928 = vsel %vm38, %v3887, 0
  %v3931 = vsel %vm38, %v3888, 0
  %v3934 = vsel %vm38, %v3889, 0
  %v3937 = vsel %vm38, %v3890, 0
  %v3940 = vsel %vm38, %v3891, 0
  %3942 = vmatpush.msra.mxu0 0.0
  %3943 = vmatpush.msra.mxu0 0.0
  %3944 = vmatpush.msra.mxu0 0.0
  %3945 = vmatpush.msra.mxu0 0.0
  %3946 = vmatpush.msra.mxu0 0.0
  %3947 = vmatpush.msra.mxu0 0.0
  %3948 = vmatpush.msra.mxu0 0.0
  %3949 = vmatpush.msra.mxu0 0.0
  %3950 = vmatpush.msra.mxu0 0.0
  %3951 = vmatpush.msra.mxu0 0.0
  %3952 = vmatpush.msra.mxu0 0.0
  %3953 = vmatpush.msra.mxu0 0.0
  %3954 = vmatpush.msra.mxu0 0.0
  %3955 = vmatpush.msra.mxu0 0.0
  %3956 = vmatpush.msra.mxu0 0.0
  %3957 = vmatpush.msra.mxu0 %v3893
  %3958 = vmatmul.f32.gmra.mxu0 %v3895
  %v3959 = vpop.f32.mrf.mxu0
  %v3960 = vadd.f32 0.0, %v3959
  %3961 = vmatmul.f32.gmra.mxu0 %v3898
  %v3962 = vpop.f32.mrf.mxu0
  %v3963 = vadd.f32 0.0, %v3962
  %3964 = vmatmul.f32.gmra.mxu0 %v3901
  %v3965 = vpop.f32.mrf.mxu0
  %v3966 = vadd.f32 0.0, %v3965
  %3967 = vmatmul.f32.gmra.mxu0 %v3904
  %v3968 = vpop.f32.mrf.mxu0
  %v3969 = vadd.f32 0.0, %v3968
  %3970 = vmatmul.f32.gmra.mxu0 %v3907
  %v3971 = vpop.f32.mrf.mxu0
  %v3972 = vadd.f32 0.0, %v3971
  %3973 = vmatmul.f32.gmra.mxu0 %v3910
  %v3974 = vpop.f32.mrf.mxu0
  %v3975 = vadd.f32 0.0, %v3974
  %3976 = vmatmul.f32.gmra.mxu0 %v3913
  %v3977 = vpop.f32.mrf.mxu0
  %v3978 = vadd.f32 0.0, %v3977
  %3979 = vmatmul.f32.gmra.mxu0 %v3916
  %v3980 = vpop.f32.mrf.mxu0
  %v3981 = vadd.f32 0.0, %v3980
  %3982 = vmatmul.f32.gmra.mxu0 %v3919
  %v3983 = vpop.f32.mrf.mxu0
  %v3984 = vadd.f32 0.0, %v3983
  %3985 = vmatmul.f32.gmra.mxu0 %v3922
  %v3986 = vpop.f32.mrf.mxu0
  %v3987 = vadd.f32 0.0, %v3986
  %3988 = vmatmul.f32.gmra.mxu0 %v3925
  %v3989 = vpop.f32.mrf.mxu0
  %v3990 = vadd.f32 0.0, %v3989
  %3991 = vmatmul.f32.gmra.mxu0 %v3928
  %v3992 = vpop.f32.mrf.mxu0
  %v3993 = vadd.f32 0.0, %v3992
  %3994 = vmatmul.f32.gmra.mxu0 %v3931
  %v3995 = vpop.f32.mrf.mxu0
  %v3996 = vadd.f32 0.0, %v3995
  %3997 = vmatmul.f32.gmra.mxu0 %v3934
  %v3998 = vpop.f32.mrf.mxu0
  %v3999 = vadd.f32 0.0, %v3998
  %4000 = vmatmul.f32.gmra.mxu0 %v3937
  %v4001 = vpop.f32.mrf.mxu0
  %v4002 = vadd.f32 0.0, %v4001
  %4003 = vmatmul.f32.gmra.mxu0 %v3940
  %v4004 = vpop.f32.mrf.mxu0
  %v4005 = vadd.f32 0.0, %v4004
  %4006 = vdwg.mxu0
  %v4007 = vadd.f32 %v3860, %v3960
  %v4008 = vadd.f32 %v3861, %v3963
  %v4009 = vadd.f32 %v3862, %v3966
  %v4010 = vadd.f32 %v3863, %v3969
  %v4011 = vadd.f32 %v3864, %v3972
  %v4012 = vadd.f32 %v3865, %v3975
  %v4013 = vadd.f32 %v3866, %v3978
  %v4014 = vadd.f32 %v3867, %v3981
  %v4015 = vadd.f32 %v3868, %v3984
  %v4016 = vadd.f32 %v3869, %v3987
  %v4017 = vadd.f32 %v3870, %v3990
  %v4018 = vadd.f32 %v3871, %v3993
  %v4019 = vadd.f32 %v3872, %v3996
  %v4020 = vadd.f32 %v3873, %v3999
  %v4021 = vadd.f32 %v3874, %v4002
  %v4022 = vadd.f32 %v3875, %v4005
  %v4023 = vld [vmem:[%s2517 + $0x1] sm:$0xff]
  %v4024 = vld [vmem:[%s2517 + $0x11] sm:$0xff]
  %v4025 = vld [vmem:[%s2517 + $0x21] sm:$0xff]
  %v4026 = vld [vmem:[%s2517 + $0x31] sm:$0xff]
  %v4027 = vld [vmem:[%s2517 + $0x41] sm:$0xff]
  %v4028 = vld [vmem:[%s2517 + $0x51] sm:$0xff]
  %v4029 = vld [vmem:[%s2517 + $0x61] sm:$0xff]
  %v4030 = vld [vmem:[%s2517 + $0x71] sm:$0xff]
  %v4031 = vld [vmem:[%s2517 + $0xa1] sm:$0xff]
  %v4032 = vld [vmem:[%s2517 + $0xb1] sm:$0xff]
  %v4033 = vld [vmem:[%s2517 + $0xc1] sm:$0xff]
  %v4034 = vld [vmem:[%s2517 + $0xd1] sm:$0xff]
  %v4035 = vld [vmem:[%s2517 + $0xe1] sm:$0xff]
  %v4036 = vld [vmem:[%s2517 + $0xf1] sm:$0xff]
  %v4037 = vld [vmem:[%s2517 + $0x101] sm:$0xff]
  %v4038 = vld [vmem:[%s2517 + $0x111] sm:$0xff]
  %s4039 = scalar_lea.vmem %s7, 56
  %v4040 = vld [vmem:[%s4039] sm:$0xff]
  %v4042 = vsel %vm38, %v4023, 0
  %v4045 = vsel %vm38, %v4024, 0
  %v4048 = vsel %vm38, %v4025, 0
  %v4051 = vsel %vm38, %v4026, 0
  %v4054 = vsel %vm38, %v4027, 0
  %v4057 = vsel %vm38, %v4028, 0
  %v4060 = vsel %vm38, %v4029, 0
  %v4063 = vsel %vm38, %v4030, 0
  %v4066 = vsel %vm38, %v4031, 0
  %v4069 = vsel %vm38, %v4032, 0
  %v4072 = vsel %vm38, %v4033, 0
  %v4075 = vsel %vm38, %v4034, 0
  %v4078 = vsel %vm38, %v4035, 0
  %v4081 = vsel %vm38, %v4036, 0
  %v4084 = vsel %vm38, %v4037, 0
  %v4087 = vsel %vm38, %v4038, 0
  %4089 = vmatpush.msra.mxu0 0.0
  %4090 = vmatpush.msra.mxu0 0.0
  %4091 = vmatpush.msra.mxu0 0.0
  %4092 = vmatpush.msra.mxu0 0.0
  %4093 = vmatpush.msra.mxu0 0.0
  %4094 = vmatpush.msra.mxu0 0.0
  %4095 = vmatpush.msra.mxu0 0.0
  %4096 = vmatpush.msra.mxu0 0.0
  %4097 = vmatpush.msra.mxu0 0.0
  %4098 = vmatpush.msra.mxu0 0.0
  %4099 = vmatpush.msra.mxu0 0.0
  %4100 = vmatpush.msra.mxu0 0.0
  %4101 = vmatpush.msra.mxu0 0.0
  %4102 = vmatpush.msra.mxu0 0.0
  %4103 = vmatpush.msra.mxu0 0.0
  %4104 = vmatpush.msra.mxu0 %v4040
  %4105 = vmatmul.f32.gmra.mxu0 %v4042
  %v4106 = vpop.f32.mrf.mxu0
  %v4107 = vadd.f32 0.0, %v4106
  %4108 = vmatmul.f32.gmra.mxu0 %v4045
  %v4109 = vpop.f32.mrf.mxu0
  %v4110 = vadd.f32 0.0, %v4109
  %4111 = vmatmul.f32.gmra.mxu0 %v4048
  %v4112 = vpop.f32.mrf.mxu0
  %v4113 = vadd.f32 0.0, %v4112
  %4114 = vmatmul.f32.gmra.mxu0 %v4051
  %v4115 = vpop.f32.mrf.mxu0
  %v4116 = vadd.f32 0.0, %v4115
  %4117 = vmatmul.f32.gmra.mxu0 %v4054
  %v4118 = vpop.f32.mrf.mxu0
  %v4119 = vadd.f32 0.0, %v4118
  %4120 = vmatmul.f32.gmra.mxu0 %v4057
  %v4121 = vpop.f32.mrf.mxu0
  %v4122 = vadd.f32 0.0, %v4121
  %4123 = vmatmul.f32.gmra.mxu0 %v4060
  %v4124 = vpop.f32.mrf.mxu0
  %v4125 = vadd.f32 0.0, %v4124
  %4126 = vmatmul.f32.gmra.mxu0 %v4063
  %v4127 = vpop.f32.mrf.mxu0
  %v4128 = vadd.f32 0.0, %v4127
  %4129 = vmatmul.f32.gmra.mxu0 %v4066
  %v4130 = vpop.f32.mrf.mxu0
  %v4131 = vadd.f32 0.0, %v4130
  %4132 = vmatmul.f32.gmra.mxu0 %v4069
  %v4133 = vpop.f32.mrf.mxu0
  %v4134 = vadd.f32 0.0, %v4133
  %4135 = vmatmul.f32.gmra.mxu0 %v4072
  %v4136 = vpop.f32.mrf.mxu0
  %v4137 = vadd.f32 0.0, %v4136
  %4138 = vmatmul.f32.gmra.mxu0 %v4075
  %v4139 = vpop.f32.mrf.mxu0
  %v4140 = vadd.f32 0.0, %v4139
  %4141 = vmatmul.f32.gmra.mxu0 %v4078
  %v4142 = vpop.f32.mrf.mxu0
  %v4143 = vadd.f32 0.0, %v4142
  %4144 = vmatmul.f32.gmra.mxu0 %v4081
  %v4145 = vpop.f32.mrf.mxu0
  %v4146 = vadd.f32 0.0, %v4145
  %4147 = vmatmul.f32.gmra.mxu0 %v4084
  %v4148 = vpop.f32.mrf.mxu0
  %v4149 = vadd.f32 0.0, %v4148
  %4150 = vmatmul.f32.gmra.mxu0 %v4087
  %v4151 = vpop.f32.mrf.mxu0
  %v4152 = vadd.f32 0.0, %v4151
  %4153 = vdwg.mxu0
  %v4154 = vadd.f32 %v4007, %v4107
  %v4155 = vadd.f32 %v4008, %v4110
  %v4156 = vadd.f32 %v4009, %v4113
  %v4157 = vadd.f32 %v4010, %v4116
  %v4158 = vadd.f32 %v4011, %v4119
  %v4159 = vadd.f32 %v4012, %v4122
  %v4160 = vadd.f32 %v4013, %v4125
  %v4161 = vadd.f32 %v4014, %v4128
  %v4162 = vadd.f32 %v4015, %v4131
  %v4163 = vadd.f32 %v4016, %v4134
  %v4164 = vadd.f32 %v4017, %v4137
  %v4165 = vadd.f32 %v4018, %v4140
  %v4166 = vadd.f32 %v4019, %v4143
  %v4167 = vadd.f32 %v4020, %v4146
  %v4168 = vadd.f32 %v4021, %v4149
  %v4169 = vadd.f32 %v4022, %v4152
  %v4170 = vld [vmem:[%s2517 + $0x2] sm:$0xff]
  %v4171 = vld [vmem:[%s2517 + $0x12] sm:$0xff]
  %v4172 = vld [vmem:[%s2517 + $0x22] sm:$0xff]
  %v4173 = vld [vmem:[%s2517 + $0x32] sm:$0xff]
  %v4174 = vld [vmem:[%s2517 + $0x42] sm:$0xff]
  %v4175 = vld [vmem:[%s2517 + $0x52] sm:$0xff]
  %v4176 = vld [vmem:[%s2517 + $0x62] sm:$0xff]
  %v4177 = vld [vmem:[%s2517 + $0x72] sm:$0xff]
  %v4178 = vld [vmem:[%s2517 + $0xa2] sm:$0xff]
  %v4179 = vld [vmem:[%s2517 + $0xb2] sm:$0xff]
  %v4180 = vld [vmem:[%s2517 + $0xc2] sm:$0xff]
  %v4181 = vld [vmem:[%s2517 + $0xd2] sm:$0xff]
  %v4182 = vld [vmem:[%s2517 + $0xe2] sm:$0xff]
  %v4183 = vld [vmem:[%s2517 + $0xf2] sm:$0xff]
  %v4184 = vld [vmem:[%s2517 + $0x102] sm:$0xff]
  %v4185 = vld [vmem:[%s2517 + $0x112] sm:$0xff]
  %s4186 = scalar_lea.vmem %s7, 64
  %v4187 = vld [vmem:[%s4186] sm:$0xff]
  %v4189 = vsel %vm38, %v4170, 0
  %v4192 = vsel %vm38, %v4171, 0
  %v4195 = vsel %vm38, %v4172, 0
  %v4198 = vsel %vm38, %v4173, 0
  %v4201 = vsel %vm38, %v4174, 0
  %v4204 = vsel %vm38, %v4175, 0
  %v4207 = vsel %vm38, %v4176, 0
  %v4210 = vsel %vm38, %v4177, 0
  %v4213 = vsel %vm38, %v4178, 0
  %v4216 = vsel %vm38, %v4179, 0
  %v4219 = vsel %vm38, %v4180, 0
  %v4222 = vsel %vm38, %v4181, 0
  %v4225 = vsel %vm38, %v4182, 0
  %v4228 = vsel %vm38, %v4183, 0
  %v4231 = vsel %vm38, %v4184, 0
  %v4234 = vsel %vm38, %v4185, 0
  %4236 = vmatpush.msra.mxu0 0.0
  %4237 = vmatpush.msra.mxu0 0.0
  %4238 = vmatpush.msra.mxu0 0.0
  %4239 = vmatpush.msra.mxu0 0.0
  %4240 = vmatpush.msra.mxu0 0.0
  %4241 = vmatpush.msra.mxu0 0.0
  %4242 = vmatpush.msra.mxu0 0.0
  %4243 = vmatpush.msra.mxu0 0.0
  %4244 = vmatpush.msra.mxu0 0.0
  %4245 = vmatpush.msra.mxu0 0.0
  %4246 = vmatpush.msra.mxu0 0.0
  %4247 = vmatpush.msra.mxu0 0.0
  %4248 = vmatpush.msra.mxu0 0.0
  %4249 = vmatpush.msra.mxu0 0.0
  %4250 = vmatpush.msra.mxu0 0.0
  %4251 = vmatpush.msra.mxu0 %v4187
  %4252 = vmatmul.f32.gmra.mxu0 %v4189
  %v4253 = vpop.f32.mrf.mxu0
  %v4254 = vadd.f32 0.0, %v4253
  %4255 = vmatmul.f32.gmra.mxu0 %v4192
  %v4256 = vpop.f32.mrf.mxu0
  %v4257 = vadd.f32 0.0, %v4256
  %4258 = vmatmul.f32.gmra.mxu0 %v4195
  %v4259 = vpop.f32.mrf.mxu0
  %v4260 = vadd.f32 0.0, %v4259
  %4261 = vmatmul.f32.gmra.mxu0 %v4198
  %v4262 = vpop.f32.mrf.mxu0
  %v4263 = vadd.f32 0.0, %v4262
  %4264 = vmatmul.f32.gmra.mxu0 %v4201
  %v4265 = vpop.f32.mrf.mxu0
  %v4266 = vadd.f32 0.0, %v4265
  %4267 = vmatmul.f32.gmra.mxu0 %v4204
  %v4268 = vpop.f32.mrf.mxu0
  %v4269 = vadd.f32 0.0, %v4268
  %4270 = vmatmul.f32.gmra.mxu0 %v4207
  %v4271 = vpop.f32.mrf.mxu0
  %v4272 = vadd.f32 0.0, %v4271
  %4273 = vmatmul.f32.gmra.mxu0 %v4210
  %v4274 = vpop.f32.mrf.mxu0
  %v4275 = vadd.f32 0.0, %v4274
  %4276 = vmatmul.f32.gmra.mxu0 %v4213
  %v4277 = vpop.f32.mrf.mxu0
  %v4278 = vadd.f32 0.0, %v4277
  %4279 = vmatmul.f32.gmra.mxu0 %v4216
  %v4280 = vpop.f32.mrf.mxu0
  %v4281 = vadd.f32 0.0, %v4280
  %4282 = vmatmul.f32.gmra.mxu0 %v4219
  %v4283 = vpop.f32.mrf.mxu0
  %v4284 = vadd.f32 0.0, %v4283
  %4285 = vmatmul.f32.gmra.mxu0 %v4222
  %v4286 = vpop.f32.mrf.mxu0
  %v4287 = vadd.f32 0.0, %v4286
  %4288 = vmatmul.f32.gmra.mxu0 %v4225
  %v4289 = vpop.f32.mrf.mxu0
  %v4290 = vadd.f32 0.0, %v4289
  %4291 = vmatmul.f32.gmra.mxu0 %v4228
  %v4292 = vpop.f32.mrf.mxu0
  %v4293 = vadd.f32 0.0, %v4292
  %4294 = vmatmul.f32.gmra.mxu0 %v4231
  %v4295 = vpop.f32.mrf.mxu0
  %v4296 = vadd.f32 0.0, %v4295
  %4297 = vmatmul.f32.gmra.mxu0 %v4234
  %v4298 = vpop.f32.mrf.mxu0
  %v4299 = vadd.f32 0.0, %v4298
  %4300 = vdwg.mxu0
  %v4301 = vadd.f32 %v4154, %v4254
  %v4302 = vadd.f32 %v4155, %v4257
  %v4303 = vadd.f32 %v4156, %v4260
  %v4304 = vadd.f32 %v4157, %v4263
  %v4305 = vadd.f32 %v4158, %v4266
  %v4306 = vadd.f32 %v4159, %v4269
  %v4307 = vadd.f32 %v4160, %v4272
  %v4308 = vadd.f32 %v4161, %v4275
  %v4309 = vadd.f32 %v4162, %v4278
  %v4310 = vadd.f32 %v4163, %v4281
  %v4311 = vadd.f32 %v4164, %v4284
  %v4312 = vadd.f32 %v4165, %v4287
  %v4313 = vadd.f32 %v4166, %v4290
  %v4314 = vadd.f32 %v4167, %v4293
  %v4315 = vadd.f32 %v4168, %v4296
  %v4316 = vadd.f32 %v4169, %v4299
  %v4317 = vld [vmem:[%s8] sm:$0x1]
  %v4319 = vperm.slane %v4317, 0
  %v4321 = vadd.f32 %v4301, %v4319
  %v4322 = vadd.f32 %v4302, %v4319
  %v4323 = vadd.f32 %v4303, %v4319
  %v4324 = vadd.f32 %v4304, %v4319
  %v4325 = vadd.f32 %v4305, %v4319
  %v4326 = vadd.f32 %v4306, %v4319
  %v4327 = vadd.f32 %v4307, %v4319
  %v4328 = vadd.f32 %v4308, %v4319
  %v4329 = vadd.f32 %v4309, %v4319
  %v4330 = vadd.f32 %v4310, %v4319
  %v4331 = vadd.f32 %v4311, %v4319
  %v4332 = vadd.f32 %v4312, %v4319
  %v4333 = vadd.f32 %v4313, %v4319
  %v4334 = vadd.f32 %v4314, %v4319
  %v4335 = vadd.f32 %v4315, %v4319
  %v4336 = vadd.f32 %v4316, %v4319
  %v4337 = vmax.f32 %v4321, 0.0
  %v4338 = vmax.f32 %v4322, 0.0
  %v4339 = vmax.f32 %v4323, 0.0
  %v4340 = vmax.f32 %v4324, 0.0
  %v4341 = vmax.f32 %v4325, 0.0
  %v4342 = vmax.f32 %v4326, 0.0
  %v4343 = vmax.f32 %v4327, 0.0
  %v4344 = vmax.f32 %v4328, 0.0
  %v4345 = vmax.f32 %v4329, 0.0
  %v4346 = vmax.f32 %v4330, 0.0
  %v4347 = vmax.f32 %v4331, 0.0
  %v4348 = vmax.f32 %v4332, 0.0
  %v4349 = vmax.f32 %v4333, 0.0
  %v4350 = vmax.f32 %v4334, 0.0
  %v4351 = vmax.f32 %v4335, 0.0
  %v4352 = vmax.f32 %v4336, 0.0
  %4353 = vst.msk [vmem:[%s1651 + $0x1] sm:$0xff] %vm38, %v4337
  %4354 = vst.msk [vmem:[%s1651 + $0x11] sm:$0xff] %vm38, %v4338
  %4355 = vst.msk [vmem:[%s1651 + $0x21] sm:$0xff] %vm38, %v4339
  %4356 = vst.msk [vmem:[%s1651 + $0x31] sm:$0xff] %vm38, %v4340
  %4357 = vst.msk [vmem:[%s1651 + $0x41] sm:$0xff] %vm38, %v4341
  %4358 = vst.msk [vmem:[%s1651 + $0x51] sm:$0xff] %vm38, %v4342
  %4359 = vst.msk [vmem:[%s1651 + $0x61] sm:$0xff] %vm38, %v4343
  %4360 = vst.msk [vmem:[%s1651 + $0x71] sm:$0xff] %vm38, %v4344
  %4361 = vst.msk [vmem:[%s1651 + $0xa1] sm:$0xff] %vm38, %v4345
  %4362 = vst.msk [vmem:[%s1651 + $0xb1] sm:$0xff] %vm38, %v4346
  %4363 = vst.msk [vmem:[%s1651 + $0xc1] sm:$0xff] %vm38, %v4347
  %4364 = vst.msk [vmem:[%s1651 + $0xd1] sm:$0xff] %vm38, %v4348
  %4365 = vst.msk [vmem:[%s1651 + $0xe1] sm:$0xff] %vm38, %v4349
  %4366 = vst.msk [vmem:[%s1651 + $0xf1] sm:$0xff] %vm38, %v4350
  %4367 = vst.msk [vmem:[%s1651 + $0x101] sm:$0xff] %vm38, %v4351
  %4368 = vst.msk [vmem:[%s1651 + $0x111] sm:$0xff] %vm38, %v4352
  %v4369 = vld [vmem:[#allocation2] sm:$0xff]
  %v4370 = vld [vmem:[#allocation2 + $0x10] sm:$0xff]
  %v4371 = vld [vmem:[#allocation2 + $0x20] sm:$0xff]
  %v4372 = vld [vmem:[#allocation2 + $0x30] sm:$0xff]
  %v4373 = vld [vmem:[#allocation2 + $0x40] sm:$0xff]
  %v4374 = vld [vmem:[#allocation2 + $0x50] sm:$0xff]
  %v4375 = vld [vmem:[#allocation2 + $0x60] sm:$0xff]
  %v4376 = vld [vmem:[#allocation2 + $0x70] sm:$0xff]
  %v4377 = vld [vmem:[#allocation2 + $0xa0] sm:$0xff]
  %v4378 = vld [vmem:[#allocation2 + $0xb0] sm:$0xff]
  %v4379 = vld [vmem:[#allocation2 + $0xc0] sm:$0xff]
  %v4380 = vld [vmem:[#allocation2 + $0xd0] sm:$0xff]
  %v4381 = vld [vmem:[#allocation2 + $0xe0] sm:$0xff]
  %v4382 = vld [vmem:[#allocation2 + $0xf0] sm:$0xff]
  %v4383 = vld [vmem:[#allocation2 + $0x100] sm:$0xff]
  %v4384 = vld [vmem:[#allocation2 + $0x110] sm:$0xff]
  %v4385 = vld [vmem:[%s9] sm:$0xff]
  %v4386 = vld [vmem:[#allocation2 + $0x1] sm:$0xff]
  %v4387 = vld [vmem:[#allocation2 + $0x11] sm:$0xff]
  %v4388 = vld [vmem:[#allocation2 + $0x21] sm:$0xff]
  %v4389 = vld [vmem:[#allocation2 + $0x31] sm:$0xff]
  %v4390 = vld [vmem:[#allocation2 + $0x41] sm:$0xff]
  %v4391 = vld [vmem:[#allocation2 + $0x51] sm:$0xff]
  %v4392 = vld [vmem:[#allocation2 + $0x61] sm:$0xff]
  %v4393 = vld [vmem:[#allocation2 + $0x71] sm:$0xff]
  %v4394 = vld [vmem:[#allocation2 + $0xa1] sm:$0xff]
  %v4395 = vld [vmem:[#allocation2 + $0xb1] sm:$0xff]
  %v4396 = vld [vmem:[#allocation2 + $0xc1] sm:$0xff]
  %v4397 = vld [vmem:[#allocation2 + $0xd1] sm:$0xff]
  %v4398 = vld [vmem:[#allocation2 + $0xe1] sm:$0xff]
  %v4399 = vld [vmem:[#allocation2 + $0xf1] sm:$0xff]
  %v4400 = vld [vmem:[#allocation2 + $0x101] sm:$0xff]
  %v4401 = vld [vmem:[#allocation2 + $0x111] sm:$0xff]
  %s4402 = scalar_lea.vmem %s9, 8
  %v4403 = vld [vmem:[%s4402] sm:$0xff]
  %v4405 = vsel %vm38, %v4386, 0
  %v4408 = vsel %vm38, %v4387, 0
  %v4411 = vsel %vm38, %v4388, 0
  %v4414 = vsel %vm38, %v4389, 0
  %v4417 = vsel %vm38, %v4390, 0
  %v4420 = vsel %vm38, %v4391, 0
  %v4423 = vsel %vm38, %v4392, 0
  %v4426 = vsel %vm38, %v4393, 0
  %v4429 = vsel %vm38, %v4394, 0
  %v4432 = vsel %vm38, %v4395, 0
  %v4435 = vsel %vm38, %v4396, 0
  %v4438 = vsel %vm38, %v4397, 0
  %v4441 = vsel %vm38, %v4398, 0
  %v4444 = vsel %vm38, %v4399, 0
  %v4447 = vsel %vm38, %v4400, 0
  %v4450 = vsel %vm38, %v4401, 0
  %4452 = vmatpush.msra.mxu0 0.0
  %4453 = vmatpush.msra.mxu0 0.0
  %4454 = vmatpush.msra.mxu0 0.0
  %4455 = vmatpush.msra.mxu0 0.0
  %4456 = vmatpush.msra.mxu0 0.0
  %4457 = vmatpush.msra.mxu0 0.0
  %4458 = vmatpush.msra.mxu0 0.0
  %4459 = vmatpush.msra.mxu0 0.0
  %4460 = vmatpush.msra.mxu0 0.0
  %4461 = vmatpush.msra.mxu0 0.0
  %4462 = vmatpush.msra.mxu0 0.0
  %4463 = vmatpush.msra.mxu0 0.0
  %4464 = vmatpush.msra.mxu0 0.0
  %4465 = vmatpush.msra.mxu0 0.0
  %4466 = vmatpush.msra.mxu0 0.0
  %4467 = vmatpush.msra.mxu0 %v4403
  %4468 = vmatmul.f32.gmra.mxu0 %v4405
  %v4469 = vpop.f32.mrf.mxu0
  %v4470 = vadd.f32 0.0, %v4469
  %4471 = vmatmul.f32.gmra.mxu0 %v4408
  %v4472 = vpop.f32.mrf.mxu0
  %v4473 = vadd.f32 0.0, %v4472
  %4474 = vmatmul.f32.gmra.mxu0 %v4411
  %v4475 = vpop.f32.mrf.mxu0
  %v4476 = vadd.f32 0.0, %v4475
  %4477 = vmatmul.f32.gmra.mxu0 %v4414
  %v4478 = vpop.f32.mrf.mxu0
  %v4479 = vadd.f32 0.0, %v4478
  %4480 = vmatmul.f32.gmra.mxu0 %v4417
  %v4481 = vpop.f32.mrf.mxu0
  %v4482 = vadd.f32 0.0, %v4481
  %4483 = vmatmul.f32.gmra.mxu0 %v4420
  %v4484 = vpop.f32.mrf.mxu0
  %v4485 = vadd.f32 0.0, %v4484
  %4486 = vmatmul.f32.gmra.mxu0 %v4423
  %v4487 = vpop.f32.mrf.mxu0
  %v4488 = vadd.f32 0.0, %v4487
  %4489 = vmatmul.f32.gmra.mxu0 %v4426
  %v4490 = vpop.f32.mrf.mxu0
  %v4491 = vadd.f32 0.0, %v4490
  %4492 = vmatmul.f32.gmra.mxu0 %v4429
  %v4493 = vpop.f32.mrf.mxu0
  %v4494 = vadd.f32 0.0, %v4493
  %4495 = vmatmul.f32.gmra.mxu0 %v4432
  %v4496 = vpop.f32.mrf.mxu0
  %v4497 = vadd.f32 0.0, %v4496
  %4498 = vmatmul.f32.gmra.mxu0 %v4435
  %v4499 = vpop.f32.mrf.mxu0
  %v4500 = vadd.f32 0.0, %v4499
  %4501 = vmatmul.f32.gmra.mxu0 %v4438
  %v4502 = vpop.f32.mrf.mxu0
  %v4503 = vadd.f32 0.0, %v4502
  %4504 = vmatmul.f32.gmra.mxu0 %v4441
  %v4505 = vpop.f32.mrf.mxu0
  %v4506 = vadd.f32 0.0, %v4505
  %4507 = vmatmul.f32.gmra.mxu0 %v4444
  %v4508 = vpop.f32.mrf.mxu0
  %v4509 = vadd.f32 0.0, %v4508
  %4510 = vmatmul.f32.gmra.mxu0 %v4447
  %v4511 = vpop.f32.mrf.mxu0
  %v4512 = vadd.f32 0.0, %v4511
  %4513 = vmatmul.f32.gmra.mxu0 %v4450
  %v4514 = vpop.f32.mrf.mxu0
  %v4515 = vadd.f32 0.0, %v4514
  %4516 = vdwg.mxu0
  %v4518 = vsel %vm38, %v4369, 0
  %v4521 = vsel %vm38, %v4370, 0
  %v4524 = vsel %vm38, %v4371, 0
  %v4527 = vsel %vm38, %v4372, 0
  %v4530 = vsel %vm38, %v4373, 0
  %v4533 = vsel %vm38, %v4374, 0
  %v4536 = vsel %vm38, %v4375, 0
  %v4539 = vsel %vm38, %v4376, 0
  %v4542 = vsel %vm38, %v4377, 0
  %v4545 = vsel %vm38, %v4378, 0
  %v4548 = vsel %vm38, %v4379, 0
  %v4551 = vsel %vm38, %v4380, 0
  %v4554 = vsel %vm38, %v4381, 0
  %v4557 = vsel %vm38, %v4382, 0
  %v4560 = vsel %vm38, %v4383, 0
  %v4563 = vsel %vm38, %v4384, 0
  %4565 = vmatpush.msra.mxu0 0.0
  %4566 = vmatpush.msra.mxu0 0.0
  %4567 = vmatpush.msra.mxu0 0.0
  %4568 = vmatpush.msra.mxu0 0.0
  %4569 = vmatpush.msra.mxu0 0.0
  %4570 = vmatpush.msra.mxu0 0.0
  %4571 = vmatpush.msra.mxu0 0.0
  %4572 = vmatpush.msra.mxu0 0.0
  %4573 = vmatpush.msra.mxu0 0.0
  %4574 = vmatpush.msra.mxu0 0.0
  %4575 = vmatpush.msra.mxu0 0.0
  %4576 = vmatpush.msra.mxu0 0.0
  %4577 = vmatpush.msra.mxu0 0.0
  %4578 = vmatpush.msra.mxu0 0.0
  %4579 = vmatpush.msra.mxu0 0.0
  %4580 = vmatpush.msra.mxu0 %v4385
  %4581 = vmatmul.f32.gmra.mxu0 %v4518
  %v4582 = vpop.f32.mrf.mxu0
  %v4583 = vadd.f32 %v4470, %v4582
  %4584 = vmatmul.f32.gmra.mxu0 %v4521
  %v4585 = vpop.f32.mrf.mxu0
  %v4586 = vadd.f32 %v4473, %v4585
  %4587 = vmatmul.f32.gmra.mxu0 %v4524
  %v4588 = vpop.f32.mrf.mxu0
  %v4589 = vadd.f32 %v4476, %v4588
  %4590 = vmatmul.f32.gmra.mxu0 %v4527
  %v4591 = vpop.f32.mrf.mxu0
  %v4592 = vadd.f32 %v4479, %v4591
  %4593 = vmatmul.f32.gmra.mxu0 %v4530
  %v4594 = vpop.f32.mrf.mxu0
  %v4595 = vadd.f32 %v4482, %v4594
  %4596 = vmatmul.f32.gmra.mxu0 %v4533
  %v4597 = vpop.f32.mrf.mxu0
  %v4598 = vadd.f32 %v4485, %v4597
  %4599 = vmatmul.f32.gmra.mxu0 %v4536
  %v4600 = vpop.f32.mrf.mxu0
  %v4601 = vadd.f32 %v4488, %v4600
  %4602 = vmatmul.f32.gmra.mxu0 %v4539
  %v4603 = vpop.f32.mrf.mxu0
  %v4604 = vadd.f32 %v4491, %v4603
  %4605 = vmatmul.f32.gmra.mxu0 %v4542
  %v4606 = vpop.f32.mrf.mxu0
  %v4607 = vadd.f32 %v4494, %v4606
  %4608 = vmatmul.f32.gmra.mxu0 %v4545
  %v4609 = vpop.f32.mrf.mxu0
  %v4610 = vadd.f32 %v4497, %v4609
  %4611 = vmatmul.f32.gmra.mxu0 %v4548
  %v4612 = vpop.f32.mrf.mxu0
  %v4613 = vadd.f32 %v4500, %v4612
  %4614 = vmatmul.f32.gmra.mxu0 %v4551
  %v4615 = vpop.f32.mrf.mxu0
  %v4616 = vadd.f32 %v4503, %v4615
  %4617 = vmatmul.f32.gmra.mxu0 %v4554
  %v4618 = vpop.f32.mrf.mxu0
  %v4619 = vadd.f32 %v4506, %v4618
  %4620 = vmatmul.f32.gmra.mxu0 %v4557
  %v4621 = vpop.f32.mrf.mxu0
  %v4622 = vadd.f32 %v4509, %v4621
  %4623 = vmatmul.f32.gmra.mxu0 %v4560
  %v4624 = vpop.f32.mrf.mxu0
  %v4625 = vadd.f32 %v4512, %v4624
  %4626 = vmatmul.f32.gmra.mxu0 %v4563
  %v4627 = vpop.f32.mrf.mxu0
  %v4628 = vadd.f32 %v4515, %v4627
  %4629 = vdwg.mxu0
  %v4630 = vld [vmem:[#allocation2 + $0x2] sm:$0xff]
  %v4631 = vld [vmem:[#allocation2 + $0x12] sm:$0xff]
  %v4632 = vld [vmem:[#allocation2 + $0x22] sm:$0xff]
  %v4633 = vld [vmem:[#allocation2 + $0x32] sm:$0xff]
  %v4634 = vld [vmem:[#allocation2 + $0x42] sm:$0xff]
  %v4635 = vld [vmem:[#allocation2 + $0x52] sm:$0xff]
  %v4636 = vld [vmem:[#allocation2 + $0x62] sm:$0xff]
  %v4637 = vld [vmem:[#allocation2 + $0x72] sm:$0xff]
  %v4638 = vld [vmem:[#allocation2 + $0xa2] sm:$0xff]
  %v4639 = vld [vmem:[#allocation2 + $0xb2] sm:$0xff]
  %v4640 = vld [vmem:[#allocation2 + $0xc2] sm:$0xff]
  %v4641 = vld [vmem:[#allocation2 + $0xd2] sm:$0xff]
  %v4642 = vld [vmem:[#allocation2 + $0xe2] sm:$0xff]
  %v4643 = vld [vmem:[#allocation2 + $0xf2] sm:$0xff]
  %v4644 = vld [vmem:[#allocation2 + $0x102] sm:$0xff]
  %v4645 = vld [vmem:[#allocation2 + $0x112] sm:$0xff]
  %s4646 = scalar_lea.vmem %s9, 16
  %v4647 = vld [vmem:[%s4646] sm:$0xff]
  %v4649 = vsel %vm38, %v4630, 0
  %v4652 = vsel %vm38, %v4631, 0
  %v4655 = vsel %vm38, %v4632, 0
  %v4658 = vsel %vm38, %v4633, 0
  %v4661 = vsel %vm38, %v4634, 0
  %v4664 = vsel %vm38, %v4635, 0
  %v4667 = vsel %vm38, %v4636, 0
  %v4670 = vsel %vm38, %v4637, 0
  %v4673 = vsel %vm38, %v4638, 0
  %v4676 = vsel %vm38, %v4639, 0
  %v4679 = vsel %vm38, %v4640, 0
  %v4682 = vsel %vm38, %v4641, 0
  %v4685 = vsel %vm38, %v4642, 0
  %v4688 = vsel %vm38, %v4643, 0
  %v4691 = vsel %vm38, %v4644, 0
  %v4694 = vsel %vm38, %v4645, 0
  %4696 = vmatpush.msra.mxu0 0.0
  %4697 = vmatpush.msra.mxu0 0.0
  %4698 = vmatpush.msra.mxu0 0.0
  %4699 = vmatpush.msra.mxu0 0.0
  %4700 = vmatpush.msra.mxu0 0.0
  %4701 = vmatpush.msra.mxu0 0.0
  %4702 = vmatpush.msra.mxu0 0.0
  %4703 = vmatpush.msra.mxu0 0.0
  %4704 = vmatpush.msra.mxu0 0.0
  %4705 = vmatpush.msra.mxu0 0.0
  %4706 = vmatpush.msra.mxu0 0.0
  %4707 = vmatpush.msra.mxu0 0.0
  %4708 = vmatpush.msra.mxu0 0.0
  %4709 = vmatpush.msra.mxu0 0.0
  %4710 = vmatpush.msra.mxu0 0.0
  %4711 = vmatpush.msra.mxu0 %v4647
  %4712 = vmatmul.f32.gmra.mxu0 %v4649
  %v4713 = vpop.f32.mrf.mxu0
  %v4714 = vadd.f32 0.0, %v4713
  %4715 = vmatmul.f32.gmra.mxu0 %v4652
  %v4716 = vpop.f32.mrf.mxu0
  %v4717 = vadd.f32 0.0, %v4716
  %4718 = vmatmul.f32.gmra.mxu0 %v4655
  %v4719 = vpop.f32.mrf.mxu0
  %v4720 = vadd.f32 0.0, %v4719
  %4721 = vmatmul.f32.gmra.mxu0 %v4658
  %v4722 = vpop.f32.mrf.mxu0
  %v4723 = vadd.f32 0.0, %v4722
  %4724 = vmatmul.f32.gmra.mxu0 %v4661
  %v4725 = vpop.f32.mrf.mxu0
  %v4726 = vadd.f32 0.0, %v4725
  %4727 = vmatmul.f32.gmra.mxu0 %v4664
  %v4728 = vpop.f32.mrf.mxu0
  %v4729 = vadd.f32 0.0, %v4728
  %4730 = vmatmul.f32.gmra.mxu0 %v4667
  %v4731 = vpop.f32.mrf.mxu0
  %v4732 = vadd.f32 0.0, %v4731
  %4733 = vmatmul.f32.gmra.mxu0 %v4670
  %v4734 = vpop.f32.mrf.mxu0
  %v4735 = vadd.f32 0.0, %v4734
  %4736 = vmatmul.f32.gmra.mxu0 %v4673
  %v4737 = vpop.f32.mrf.mxu0
  %v4738 = vadd.f32 0.0, %v4737
  %4739 = vmatmul.f32.gmra.mxu0 %v4676
  %v4740 = vpop.f32.mrf.mxu0
  %v4741 = vadd.f32 0.0, %v4740
  %4742 = vmatmul.f32.gmra.mxu0 %v4679
  %v4743 = vpop.f32.mrf.mxu0
  %v4744 = vadd.f32 0.0, %v4743
  %4745 = vmatmul.f32.gmra.mxu0 %v4682
  %v4746 = vpop.f32.mrf.mxu0
  %v4747 = vadd.f32 0.0, %v4746
  %4748 = vmatmul.f32.gmra.mxu0 %v4685
  %v4749 = vpop.f32.mrf.mxu0
  %v4750 = vadd.f32 0.0, %v4749
  %4751 = vmatmul.f32.gmra.mxu0 %v4688
  %v4752 = vpop.f32.mrf.mxu0
  %v4753 = vadd.f32 0.0, %v4752
  %4754 = vmatmul.f32.gmra.mxu0 %v4691
  %v4755 = vpop.f32.mrf.mxu0
  %v4756 = vadd.f32 0.0, %v4755
  %4757 = vmatmul.f32.gmra.mxu0 %v4694
  %v4758 = vpop.f32.mrf.mxu0
  %v4759 = vadd.f32 0.0, %v4758
  %4760 = vdwg.mxu0
  %v4761 = vadd.f32 %v4583, %v4714
  %v4762 = vadd.f32 %v4586, %v4717
  %v4763 = vadd.f32 %v4589, %v4720
  %v4764 = vadd.f32 %v4592, %v4723
  %v4765 = vadd.f32 %v4595, %v4726
  %v4766 = vadd.f32 %v4598, %v4729
  %v4767 = vadd.f32 %v4601, %v4732
  %v4768 = vadd.f32 %v4604, %v4735
  %v4769 = vadd.f32 %v4607, %v4738
  %v4770 = vadd.f32 %v4610, %v4741
  %v4771 = vadd.f32 %v4613, %v4744
  %v4772 = vadd.f32 %v4616, %v4747
  %v4773 = vadd.f32 %v4619, %v4750
  %v4774 = vadd.f32 %v4622, %v4753
  %v4775 = vadd.f32 %v4625, %v4756
  %v4776 = vadd.f32 %v4628, %v4759
  %v4777 = vld [vmem:[%s1651] sm:$0xff]
  %v4778 = vld [vmem:[%s1651 + $0x10] sm:$0xff]
  %v4779 = vld [vmem:[%s1651 + $0x20] sm:$0xff]
  %v4780 = vld [vmem:[%s1651 + $0x30] sm:$0xff]
  %v4781 = vld [vmem:[%s1651 + $0x40] sm:$0xff]
  %v4782 = vld [vmem:[%s1651 + $0x50] sm:$0xff]
  %v4783 = vld [vmem:[%s1651 + $0x60] sm:$0xff]
  %v4784 = vld [vmem:[%s1651 + $0x70] sm:$0xff]
  %v4785 = vld [vmem:[%s1651 + $0xa0] sm:$0xff]
  %v4786 = vld [vmem:[%s1651 + $0xb0] sm:$0xff]
  %v4787 = vld [vmem:[%s1651 + $0xc0] sm:$0xff]
  %v4788 = vld [vmem:[%s1651 + $0xd0] sm:$0xff]
  %v4789 = vld [vmem:[%s1651 + $0xe0] sm:$0xff]
  %v4790 = vld [vmem:[%s1651 + $0xf0] sm:$0xff]
  %v4791 = vld [vmem:[%s1651 + $0x100] sm:$0xff]
  %v4792 = vld [vmem:[%s1651 + $0x110] sm:$0xff]
  %s4793 = scalar_lea.vmem %s9, 24
  %v4794 = vld [vmem:[%s4793] sm:$0xff]
  %v4796 = vsel %vm38, %v4777, 0
  %v4799 = vsel %vm38, %v4778, 0
  %v4802 = vsel %vm38, %v4779, 0
  %v4805 = vsel %vm38, %v4780, 0
  %v4808 = vsel %vm38, %v4781, 0
  %v4811 = vsel %vm38, %v4782, 0
  %v4814 = vsel %vm38, %v4783, 0
  %v4817 = vsel %vm38, %v4784, 0
  %v4820 = vsel %vm38, %v4785, 0
  %v4823 = vsel %vm38, %v4786, 0
  %v4826 = vsel %vm38, %v4787, 0
  %v4829 = vsel %vm38, %v4788, 0
  %v4832 = vsel %vm38, %v4789, 0
  %v4835 = vsel %vm38, %v4790, 0
  %v4838 = vsel %vm38, %v4791, 0
  %v4841 = vsel %vm38, %v4792, 0
  %4843 = vmatpush.msra.mxu0 0.0
  %4844 = vmatpush.msra.mxu0 0.0
  %4845 = vmatpush.msra.mxu0 0.0
  %4846 = vmatpush.msra.mxu0 0.0
  %4847 = vmatpush.msra.mxu0 0.0
  %4848 = vmatpush.msra.mxu0 0.0
  %4849 = vmatpush.msra.mxu0 0.0
  %4850 = vmatpush.msra.mxu0 0.0
  %4851 = vmatpush.msra.mxu0 0.0
  %4852 = vmatpush.msra.mxu0 0.0
  %4853 = vmatpush.msra.mxu0 0.0
  %4854 = vmatpush.msra.mxu0 0.0
  %4855 = vmatpush.msra.mxu0 0.0
  %4856 = vmatpush.msra.mxu0 0.0
  %4857 = vmatpush.msra.mxu0 0.0
  %4858 = vmatpush.msra.mxu0 %v4794
  %4859 = vmatmul.f32.gmra.mxu0 %v4796
  %v4860 = vpop.f32.mrf.mxu0
  %v4861 = vadd.f32 0.0, %v4860
  %4862 = vmatmul.f32.gmra.mxu0 %v4799
  %v4863 = vpop.f32.mrf.mxu0
  %v4864 = vadd.f32 0.0, %v4863
  %4865 = vmatmul.f32.gmra.mxu0 %v4802
  %v4866 = vpop.f32.mrf.mxu0
  %v4867 = vadd.f32 0.0, %v4866
  %4868 = vmatmul.f32.gmra.mxu0 %v4805
  %v4869 = vpop.f32.mrf.mxu0
  %v4870 = vadd.f32 0.0, %v4869
  %4871 = vmatmul.f32.gmra.mxu0 %v4808
  %v4872 = vpop.f32.mrf.mxu0
  %v4873 = vadd.f32 0.0, %v4872
  %4874 = vmatmul.f32.gmra.mxu0 %v4811
  %v4875 = vpop.f32.mrf.mxu0
  %v4876 = vadd.f32 0.0, %v4875
  %4877 = vmatmul.f32.gmra.mxu0 %v4814
  %v4878 = vpop.f32.mrf.mxu0
  %v4879 = vadd.f32 0.0, %v4878
  %4880 = vmatmul.f32.gmra.mxu0 %v4817
  %v4881 = vpop.f32.mrf.mxu0
  %v4882 = vadd.f32 0.0, %v4881
  %4883 = vmatmul.f32.gmra.mxu0 %v4820
  %v4884 = vpop.f32.mrf.mxu0
  %v4885 = vadd.f32 0.0, %v4884
  %4886 = vmatmul.f32.gmra.mxu0 %v4823
  %v4887 = vpop.f32.mrf.mxu0
  %v4888 = vadd.f32 0.0, %v4887
  %4889 = vmatmul.f32.gmra.mxu0 %v4826
  %v4890 = vpop.f32.mrf.mxu0
  %v4891 = vadd.f32 0.0, %v4890
  %4892 = vmatmul.f32.gmra.mxu0 %v4829
  %v4893 = vpop.f32.mrf.mxu0
  %v4894 = vadd.f32 0.0, %v4893
  %4895 = vmatmul.f32.gmra.mxu0 %v4832
  %v4896 = vpop.f32.mrf.mxu0
  %v4897 = vadd.f32 0.0, %v4896
  %4898 = vmatmul.f32.gmra.mxu0 %v4835
  %v4899 = vpop.f32.mrf.mxu0
  %v4900 = vadd.f32 0.0, %v4899
  %4901 = vmatmul.f32.gmra.mxu0 %v4838
  %v4902 = vpop.f32.mrf.mxu0
  %v4903 = vadd.f32 0.0, %v4902
  %4904 = vmatmul.f32.gmra.mxu0 %v4841
  %v4905 = vpop.f32.mrf.mxu0
  %v4906 = vadd.f32 0.0, %v4905
  %4907 = vdwg.mxu0
  %v4908 = vadd.f32 %v4761, %v4861
  %v4909 = vadd.f32 %v4762, %v4864
  %v4910 = vadd.f32 %v4763, %v4867
  %v4911 = vadd.f32 %v4764, %v4870
  %v4912 = vadd.f32 %v4765, %v4873
  %v4913 = vadd.f32 %v4766, %v4876
  %v4914 = vadd.f32 %v4767, %v4879
  %v4915 = vadd.f32 %v4768, %v4882
  %v4916 = vadd.f32 %v4769, %v4885
  %v4917 = vadd.f32 %v4770, %v4888
  %v4918 = vadd.f32 %v4771, %v4891
  %v4919 = vadd.f32 %v4772, %v4894
  %v4920 = vadd.f32 %v4773, %v4897
  %v4921 = vadd.f32 %v4774, %v4900
  %v4922 = vadd.f32 %v4775, %v4903
  %v4923 = vadd.f32 %v4776, %v4906
  %v4924 = vld [vmem:[%s1651 + $0x1] sm:$0xff]
  %v4925 = vld [vmem:[%s1651 + $0x11] sm:$0xff]
  %v4926 = vld [vmem:[%s1651 + $0x21] sm:$0xff]
  %v4927 = vld [vmem:[%s1651 + $0x31] sm:$0xff]
  %v4928 = vld [vmem:[%s1651 + $0x41] sm:$0xff]
  %v4929 = vld [vmem:[%s1651 + $0x51] sm:$0xff]
  %v4930 = vld [vmem:[%s1651 + $0x61] sm:$0xff]
  %v4931 = vld [vmem:[%s1651 + $0x71] sm:$0xff]
  %v4932 = vld [vmem:[%s1651 + $0xa1] sm:$0xff]
  %v4933 = vld [vmem:[%s1651 + $0xb1] sm:$0xff]
  %v4934 = vld [vmem:[%s1651 + $0xc1] sm:$0xff]
  %v4935 = vld [vmem:[%s1651 + $0xd1] sm:$0xff]
  %v4936 = vld [vmem:[%s1651 + $0xe1] sm:$0xff]
  %v4937 = vld [vmem:[%s1651 + $0xf1] sm:$0xff]
  %v4938 = vld [vmem:[%s1651 + $0x101] sm:$0xff]
  %v4939 = vld [vmem:[%s1651 + $0x111] sm:$0xff]
  %s4940 = scalar_lea.vmem %s9, 32
  %v4941 = vld [vmem:[%s4940] sm:$0xff]
  %v4943 = vsel %vm38, %v4924, 0
  %v4946 = vsel %vm38, %v4925, 0
  %v4949 = vsel %vm38, %v4926, 0
  %v4952 = vsel %vm38, %v4927, 0
  %v4955 = vsel %vm38, %v4928, 0
  %v4958 = vsel %vm38, %v4929, 0
  %v4961 = vsel %vm38, %v4930, 0
  %v4964 = vsel %vm38, %v4931, 0
  %v4967 = vsel %vm38, %v4932, 0
  %v4970 = vsel %vm38, %v4933, 0
  %v4973 = vsel %vm38, %v4934, 0
  %v4976 = vsel %vm38, %v4935, 0
  %v4979 = vsel %vm38, %v4936, 0
  %v4982 = vsel %vm38, %v4937, 0
  %v4985 = vsel %vm38, %v4938, 0
  %v4988 = vsel %vm38, %v4939, 0
  %4990 = vmatpush.msra.mxu0 0.0
  %4991 = vmatpush.msra.mxu0 0.0
  %4992 = vmatpush.msra.mxu0 0.0
  %4993 = vmatpush.msra.mxu0 0.0
  %4994 = vmatpush.msra.mxu0 0.0
  %4995 = vmatpush.msra.mxu0 0.0
  %4996 = vmatpush.msra.mxu0 0.0
  %4997 = vmatpush.msra.mxu0 0.0
  %4998 = vmatpush.msra.mxu0 0.0
  %4999 = vmatpush.msra.mxu0 0.0
  %5000 = vmatpush.msra.mxu0 0.0
  %5001 = vmatpush.msra.mxu0 0.0
  %5002 = vmatpush.msra.mxu0 0.0
  %5003 = vmatpush.msra.mxu0 0.0
  %5004 = vmatpush.msra.mxu0 0.0
  %5005 = vmatpush.msra.mxu0 %v4941
  %5006 = vmatmul.f32.gmra.mxu0 %v4943
  %v5007 = vpop.f32.mrf.mxu0
  %v5008 = vadd.f32 0.0, %v5007
  %5009 = vmatmul.f32.gmra.mxu0 %v4946
  %v5010 = vpop.f32.mrf.mxu0
  %v5011 = vadd.f32 0.0, %v5010
  %5012 = vmatmul.f32.gmra.mxu0 %v4949
  %v5013 = vpop.f32.mrf.mxu0
  %v5014 = vadd.f32 0.0, %v5013
  %5015 = vmatmul.f32.gmra.mxu0 %v4952
  %v5016 = vpop.f32.mrf.mxu0
  %v5017 = vadd.f32 0.0, %v5016
  %5018 = vmatmul.f32.gmra.mxu0 %v4955
  %v5019 = vpop.f32.mrf.mxu0
  %v5020 = vadd.f32 0.0, %v5019
  %5021 = vmatmul.f32.gmra.mxu0 %v4958
  %v5022 = vpop.f32.mrf.mxu0
  %v5023 = vadd.f32 0.0, %v5022
  %5024 = vmatmul.f32.gmra.mxu0 %v4961
  %v5025 = vpop.f32.mrf.mxu0
  %v5026 = vadd.f32 0.0, %v5025
  %5027 = vmatmul.f32.gmra.mxu0 %v4964
  %v5028 = vpop.f32.mrf.mxu0
  %v5029 = vadd.f32 0.0, %v5028
  %5030 = vmatmul.f32.gmra.mxu0 %v4967
  %v5031 = vpop.f32.mrf.mxu0
  %v5032 = vadd.f32 0.0, %v5031
  %5033 = vmatmul.f32.gmra.mxu0 %v4970
  %v5034 = vpop.f32.mrf.mxu0
  %v5035 = vadd.f32 0.0, %v5034
  %5036 = vmatmul.f32.gmra.mxu0 %v4973
  %v5037 = vpop.f32.mrf.mxu0
  %v5038 = vadd.f32 0.0, %v5037
  %5039 = vmatmul.f32.gmra.mxu0 %v4976
  %v5040 = vpop.f32.mrf.mxu0
  %v5041 = vadd.f32 0.0, %v5040
  %5042 = vmatmul.f32.gmra.mxu0 %v4979
  %v5043 = vpop.f32.mrf.mxu0
  %v5044 = vadd.f32 0.0, %v5043
  %5045 = vmatmul.f32.gmra.mxu0 %v4982
  %v5046 = vpop.f32.mrf.mxu0
  %v5047 = vadd.f32 0.0, %v5046
  %5048 = vmatmul.f32.gmra.mxu0 %v4985
  %v5049 = vpop.f32.mrf.mxu0
  %v5050 = vadd.f32 0.0, %v5049
  %5051 = vmatmul.f32.gmra.mxu0 %v4988
  %v5052 = vpop.f32.mrf.mxu0
  %v5053 = vadd.f32 0.0, %v5052
  %5054 = vdwg.mxu0
  %v5055 = vadd.f32 %v4908, %v5008
  %v5056 = vadd.f32 %v4909, %v5011
  %v5057 = vadd.f32 %v4910, %v5014
  %v5058 = vadd.f32 %v4911, %v5017
  %v5059 = vadd.f32 %v4912, %v5020
  %v5060 = vadd.f32 %v4913, %v5023
  %v5061 = vadd.f32 %v4914, %v5026
  %v5062 = vadd.f32 %v4915, %v5029
  %v5063 = vadd.f32 %v4916, %v5032
  %v5064 = vadd.f32 %v4917, %v5035
  %v5065 = vadd.f32 %v4918, %v5038
  %v5066 = vadd.f32 %v4919, %v5041
  %v5067 = vadd.f32 %v4920, %v5044
  %v5068 = vadd.f32 %v4921, %v5047
  %v5069 = vadd.f32 %v4922, %v5050
  %v5070 = vadd.f32 %v4923, %v5053
  %v5071 = vld [vmem:[%s1651 + $0x2] sm:$0xff]
  %v5072 = vld [vmem:[%s1651 + $0x12] sm:$0xff]
  %v5073 = vld [vmem:[%s1651 + $0x22] sm:$0xff]
  %v5074 = vld [vmem:[%s1651 + $0x32] sm:$0xff]
  %v5075 = vld [vmem:[%s1651 + $0x42] sm:$0xff]
  %v5076 = vld [vmem:[%s1651 + $0x52] sm:$0xff]
  %v5077 = vld [vmem:[%s1651 + $0x62] sm:$0xff]
  %v5078 = vld [vmem:[%s1651 + $0x72] sm:$0xff]
  %v5079 = vld [vmem:[%s1651 + $0xa2] sm:$0xff]
  %v5080 = vld [vmem:[%s1651 + $0xb2] sm:$0xff]
  %v5081 = vld [vmem:[%s1651 + $0xc2] sm:$0xff]
  %v5082 = vld [vmem:[%s1651 + $0xd2] sm:$0xff]
  %v5083 = vld [vmem:[%s1651 + $0xe2] sm:$0xff]
  %v5084 = vld [vmem:[%s1651 + $0xf2] sm:$0xff]
  %v5085 = vld [vmem:[%s1651 + $0x102] sm:$0xff]
  %v5086 = vld [vmem:[%s1651 + $0x112] sm:$0xff]
  %s5087 = scalar_lea.vmem %s9, 40
  %v5088 = vld [vmem:[%s5087] sm:$0xff]
  %v5090 = vsel %vm38, %v5071, 0
  %v5093 = vsel %vm38, %v5072, 0
  %v5096 = vsel %vm38, %v5073, 0
  %v5099 = vsel %vm38, %v5074, 0
  %v5102 = vsel %vm38, %v5075, 0
  %v5105 = vsel %vm38, %v5076, 0
  %v5108 = vsel %vm38, %v5077, 0
  %v5111 = vsel %vm38, %v5078, 0
  %v5114 = vsel %vm38, %v5079, 0
  %v5117 = vsel %vm38, %v5080, 0
  %v5120 = vsel %vm38, %v5081, 0
  %v5123 = vsel %vm38, %v5082, 0
  %v5126 = vsel %vm38, %v5083, 0
  %v5129 = vsel %vm38, %v5084, 0
  %v5132 = vsel %vm38, %v5085, 0
  %v5135 = vsel %vm38, %v5086, 0
  %5137 = vmatpush.msra.mxu0 0.0
  %5138 = vmatpush.msra.mxu0 0.0
  %5139 = vmatpush.msra.mxu0 0.0
  %5140 = vmatpush.msra.mxu0 0.0
  %5141 = vmatpush.msra.mxu0 0.0
  %5142 = vmatpush.msra.mxu0 0.0
  %5143 = vmatpush.msra.mxu0 0.0
  %5144 = vmatpush.msra.mxu0 0.0
  %5145 = vmatpush.msra.mxu0 0.0
  %5146 = vmatpush.msra.mxu0 0.0
  %5147 = vmatpush.msra.mxu0 0.0
  %5148 = vmatpush.msra.mxu0 0.0
  %5149 = vmatpush.msra.mxu0 0.0
  %5150 = vmatpush.msra.mxu0 0.0
  %5151 = vmatpush.msra.mxu0 0.0
  %5152 = vmatpush.msra.mxu0 %v5088
  %5153 = vmatmul.f32.gmra.mxu0 %v5090
  %v5154 = vpop.f32.mrf.mxu0
  %v5155 = vadd.f32 0.0, %v5154
  %5156 = vmatmul.f32.gmra.mxu0 %v5093
  %v5157 = vpop.f32.mrf.mxu0
  %v5158 = vadd.f32 0.0, %v5157
  %5159 = vmatmul.f32.gmra.mxu0 %v5096
  %v5160 = vpop.f32.mrf.mxu0
  %v5161 = vadd.f32 0.0, %v5160
  %5162 = vmatmul.f32.gmra.mxu0 %v5099
  %v5163 = vpop.f32.mrf.mxu0
  %v5164 = vadd.f32 0.0, %v5163
  %5165 = vmatmul.f32.gmra.mxu0 %v5102
  %v5166 = vpop.f32.mrf.mxu0
  %v5167 = vadd.f32 0.0, %v5166
  %5168 = vmatmul.f32.gmra.mxu0 %v5105
  %v5169 = vpop.f32.mrf.mxu0
  %v5170 = vadd.f32 0.0, %v5169
  %5171 = vmatmul.f32.gmra.mxu0 %v5108
  %v5172 = vpop.f32.mrf.mxu0
  %v5173 = vadd.f32 0.0, %v5172
  %5174 = vmatmul.f32.gmra.mxu0 %v5111
  %v5175 = vpop.f32.mrf.mxu0
  %v5176 = vadd.f32 0.0, %v5175
  %5177 = vmatmul.f32.gmra.mxu0 %v5114
  %v5178 = vpop.f32.mrf.mxu0
  %v5179 = vadd.f32 0.0, %v5178
  %5180 = vmatmul.f32.gmra.mxu0 %v5117
  %v5181 = vpop.f32.mrf.mxu0
  %v5182 = vadd.f32 0.0, %v5181
  %5183 = vmatmul.f32.gmra.mxu0 %v5120
  %v5184 = vpop.f32.mrf.mxu0
  %v5185 = vadd.f32 0.0, %v5184
  %5186 = vmatmul.f32.gmra.mxu0 %v5123
  %v5187 = vpop.f32.mrf.mxu0
  %v5188 = vadd.f32 0.0, %v5187
  %5189 = vmatmul.f32.gmra.mxu0 %v5126
  %v5190 = vpop.f32.mrf.mxu0
  %v5191 = vadd.f32 0.0, %v5190
  %5192 = vmatmul.f32.gmra.mxu0 %v5129
  %v5193 = vpop.f32.mrf.mxu0
  %v5194 = vadd.f32 0.0, %v5193
  %5195 = vmatmul.f32.gmra.mxu0 %v5132
  %v5196 = vpop.f32.mrf.mxu0
  %v5197 = vadd.f32 0.0, %v5196
  %5198 = vmatmul.f32.gmra.mxu0 %v5135
  %v5199 = vpop.f32.mrf.mxu0
  %v5200 = vadd.f32 0.0, %v5199
  %5201 = vdwg.mxu0
  %v5202 = vadd.f32 %v5055, %v5155
  %v5203 = vadd.f32 %v5056, %v5158
  %v5204 = vadd.f32 %v5057, %v5161
  %v5205 = vadd.f32 %v5058, %v5164
  %v5206 = vadd.f32 %v5059, %v5167
  %v5207 = vadd.f32 %v5060, %v5170
  %v5208 = vadd.f32 %v5061, %v5173
  %v5209 = vadd.f32 %v5062, %v5176
  %v5210 = vadd.f32 %v5063, %v5179
  %v5211 = vadd.f32 %v5064, %v5182
  %v5212 = vadd.f32 %v5065, %v5185
  %v5213 = vadd.f32 %v5066, %v5188
  %v5214 = vadd.f32 %v5067, %v5191
  %v5215 = vadd.f32 %v5068, %v5194
  %v5216 = vadd.f32 %v5069, %v5197
  %v5217 = vadd.f32 %v5070, %v5200
  %v5218 = vld [vmem:[%s2517] sm:$0xff]
  %v5219 = vld [vmem:[%s2517 + $0x10] sm:$0xff]
  %v5220 = vld [vmem:[%s2517 + $0x20] sm:$0xff]
  %v5221 = vld [vmem:[%s2517 + $0x30] sm:$0xff]
  %v5222 = vld [vmem:[%s2517 + $0x40] sm:$0xff]
  %v5223 = vld [vmem:[%s2517 + $0x50] sm:$0xff]
  %v5224 = vld [vmem:[%s2517 + $0x60] sm:$0xff]
  %v5225 = vld [vmem:[%s2517 + $0x70] sm:$0xff]
  %v5226 = vld [vmem:[%s2517 + $0xa0] sm:$0xff]
  %v5227 = vld [vmem:[%s2517 + $0xb0] sm:$0xff]
  %v5228 = vld [vmem:[%s2517 + $0xc0] sm:$0xff]
  %v5229 = vld [vmem:[%s2517 + $0xd0] sm:$0xff]
  %v5230 = vld [vmem:[%s2517 + $0xe0] sm:$0xff]
  %v5231 = vld [vmem:[%s2517 + $0xf0] sm:$0xff]
  %v5232 = vld [vmem:[%s2517 + $0x100] sm:$0xff]
  %v5233 = vld [vmem:[%s2517 + $0x110] sm:$0xff]
  %s5234 = scalar_lea.vmem %s9, 48
  %v5235 = vld [vmem:[%s5234] sm:$0xff]
  %v5237 = vsel %vm38, %v5218, 0
  %v5240 = vsel %vm38, %v5219, 0
  %v5243 = vsel %vm38, %v5220, 0
  %v5246 = vsel %vm38, %v5221, 0
  %v5249 = vsel %vm38, %v5222, 0
  %v5252 = vsel %vm38, %v5223, 0
  %v5255 = vsel %vm38, %v5224, 0
  %v5258 = vsel %vm38, %v5225, 0
  %v5261 = vsel %vm38, %v5226, 0
  %v5264 = vsel %vm38, %v5227, 0
  %v5267 = vsel %vm38, %v5228, 0
  %v5270 = vsel %vm38, %v5229, 0
  %v5273 = vsel %vm38, %v5230, 0
  %v5276 = vsel %vm38, %v5231, 0
  %v5279 = vsel %vm38, %v5232, 0
  %v5282 = vsel %vm38, %v5233, 0
  %5284 = vmatpush.msra.mxu0 0.0
  %5285 = vmatpush.msra.mxu0 0.0
  %5286 = vmatpush.msra.mxu0 0.0
  %5287 = vmatpush.msra.mxu0 0.0
  %5288 = vmatpush.msra.mxu0 0.0
  %5289 = vmatpush.msra.mxu0 0.0
  %5290 = vmatpush.msra.mxu0 0.0
  %5291 = vmatpush.msra.mxu0 0.0
  %5292 = vmatpush.msra.mxu0 0.0
  %5293 = vmatpush.msra.mxu0 0.0
  %5294 = vmatpush.msra.mxu0 0.0
  %5295 = vmatpush.msra.mxu0 0.0
  %5296 = vmatpush.msra.mxu0 0.0
  %5297 = vmatpush.msra.mxu0 0.0
  %5298 = vmatpush.msra.mxu0 0.0
  %5299 = vmatpush.msra.mxu0 %v5235
  %5300 = vmatmul.f32.gmra.mxu0 %v5237
  %v5301 = vpop.f32.mrf.mxu0
  %v5302 = vadd.f32 0.0, %v5301
  %5303 = vmatmul.f32.gmra.mxu0 %v5240
  %v5304 = vpop.f32.mrf.mxu0
  %v5305 = vadd.f32 0.0, %v5304
  %5306 = vmatmul.f32.gmra.mxu0 %v5243
  %v5307 = vpop.f32.mrf.mxu0
  %v5308 = vadd.f32 0.0, %v5307
  %5309 = vmatmul.f32.gmra.mxu0 %v5246
  %v5310 = vpop.f32.mrf.mxu0
  %v5311 = vadd.f32 0.0, %v5310
  %5312 = vmatmul.f32.gmra.mxu0 %v5249
  %v5313 = vpop.f32.mrf.mxu0
  %v5314 = vadd.f32 0.0, %v5313
  %5315 = vmatmul.f32.gmra.mxu0 %v5252
  %v5316 = vpop.f32.mrf.mxu0
  %v5317 = vadd.f32 0.0, %v5316
  %5318 = vmatmul.f32.gmra.mxu0 %v5255
  %v5319 = vpop.f32.mrf.mxu0
  %v5320 = vadd.f32 0.0, %v5319
  %5321 = vmatmul.f32.gmra.mxu0 %v5258
  %v5322 = vpop.f32.mrf.mxu0
  %v5323 = vadd.f32 0.0, %v5322
  %5324 = vmatmul.f32.gmra.mxu0 %v5261
  %v5325 = vpop.f32.mrf.mxu0
  %v5326 = vadd.f32 0.0, %v5325
  %5327 = vmatmul.f32.gmra.mxu0 %v5264
  %v5328 = vpop.f32.mrf.mxu0
  %v5329 = vadd.f32 0.0, %v5328
  %5330 = vmatmul.f32.gmra.mxu0 %v5267
  %v5331 = vpop.f32.mrf.mxu0
  %v5332 = vadd.f32 0.0, %v5331
  %5333 = vmatmul.f32.gmra.mxu0 %v5270
  %v5334 = vpop.f32.mrf.mxu0
  %v5335 = vadd.f32 0.0, %v5334
  %5336 = vmatmul.f32.gmra.mxu0 %v5273
  %v5337 = vpop.f32.mrf.mxu0
  %v5338 = vadd.f32 0.0, %v5337
  %5339 = vmatmul.f32.gmra.mxu0 %v5276
  %v5340 = vpop.f32.mrf.mxu0
  %v5341 = vadd.f32 0.0, %v5340
  %5342 = vmatmul.f32.gmra.mxu0 %v5279
  %v5343 = vpop.f32.mrf.mxu0
  %v5344 = vadd.f32 0.0, %v5343
  %5345 = vmatmul.f32.gmra.mxu0 %v5282
  %v5346 = vpop.f32.mrf.mxu0
  %v5347 = vadd.f32 0.0, %v5346
  %5348 = vdwg.mxu0
  %v5349 = vadd.f32 %v5202, %v5302
  %v5350 = vadd.f32 %v5203, %v5305
  %v5351 = vadd.f32 %v5204, %v5308
  %v5352 = vadd.f32 %v5205, %v5311
  %v5353 = vadd.f32 %v5206, %v5314
  %v5354 = vadd.f32 %v5207, %v5317
  %v5355 = vadd.f32 %v5208, %v5320
  %v5356 = vadd.f32 %v5209, %v5323
  %v5357 = vadd.f32 %v5210, %v5326
  %v5358 = vadd.f32 %v5211, %v5329
  %v5359 = vadd.f32 %v5212, %v5332
  %v5360 = vadd.f32 %v5213, %v5335
  %v5361 = vadd.f32 %v5214, %v5338
  %v5362 = vadd.f32 %v5215, %v5341
  %v5363 = vadd.f32 %v5216, %v5344
  %v5364 = vadd.f32 %v5217, %v5347
  %v5365 = vld [vmem:[%s2517 + $0x1] sm:$0xff]
  %v5366 = vld [vmem:[%s2517 + $0x11] sm:$0xff]
  %v5367 = vld [vmem:[%s2517 + $0x21] sm:$0xff]
  %v5368 = vld [vmem:[%s2517 + $0x31] sm:$0xff]
  %v5369 = vld [vmem:[%s2517 + $0x41] sm:$0xff]
  %v5370 = vld [vmem:[%s2517 + $0x51] sm:$0xff]
  %v5371 = vld [vmem:[%s2517 + $0x61] sm:$0xff]
  %v5372 = vld [vmem:[%s2517 + $0x71] sm:$0xff]
  %v5373 = vld [vmem:[%s2517 + $0xa1] sm:$0xff]
  %v5374 = vld [vmem:[%s2517 + $0xb1] sm:$0xff]
  %v5375 = vld [vmem:[%s2517 + $0xc1] sm:$0xff]
  %v5376 = vld [vmem:[%s2517 + $0xd1] sm:$0xff]
  %v5377 = vld [vmem:[%s2517 + $0xe1] sm:$0xff]
  %v5378 = vld [vmem:[%s2517 + $0xf1] sm:$0xff]
  %v5379 = vld [vmem:[%s2517 + $0x101] sm:$0xff]
  %v5380 = vld [vmem:[%s2517 + $0x111] sm:$0xff]
  %s5381 = scalar_lea.vmem %s9, 56
  %v5382 = vld [vmem:[%s5381] sm:$0xff]
  %v5384 = vsel %vm38, %v5365, 0
  %v5387 = vsel %vm38, %v5366, 0
  %v5390 = vsel %vm38, %v5367, 0
  %v5393 = vsel %vm38, %v5368, 0
  %v5396 = vsel %vm38, %v5369, 0
  %v5399 = vsel %vm38, %v5370, 0
  %v5402 = vsel %vm38, %v5371, 0
  %v5405 = vsel %vm38, %v5372, 0
  %v5408 = vsel %vm38, %v5373, 0
  %v5411 = vsel %vm38, %v5374, 0
  %v5414 = vsel %vm38, %v5375, 0
  %v5417 = vsel %vm38, %v5376, 0
  %v5420 = vsel %vm38, %v5377, 0
  %v5423 = vsel %vm38, %v5378, 0
  %v5426 = vsel %vm38, %v5379, 0
  %v5429 = vsel %vm38, %v5380, 0
  %5431 = vmatpush.msra.mxu0 0.0
  %5432 = vmatpush.msra.mxu0 0.0
  %5433 = vmatpush.msra.mxu0 0.0
  %5434 = vmatpush.msra.mxu0 0.0
  %5435 = vmatpush.msra.mxu0 0.0
  %5436 = vmatpush.msra.mxu0 0.0
  %5437 = vmatpush.msra.mxu0 0.0
  %5438 = vmatpush.msra.mxu0 0.0
  %5439 = vmatpush.msra.mxu0 0.0
  %5440 = vmatpush.msra.mxu0 0.0
  %5441 = vmatpush.msra.mxu0 0.0
  %5442 = vmatpush.msra.mxu0 0.0
  %5443 = vmatpush.msra.mxu0 0.0
  %5444 = vmatpush.msra.mxu0 0.0
  %5445 = vmatpush.msra.mxu0 0.0
  %5446 = vmatpush.msra.mxu0 %v5382
  %5447 = vmatmul.f32.gmra.mxu0 %v5384
  %v5448 = vpop.f32.mrf.mxu0
  %v5449 = vadd.f32 0.0, %v5448
  %5450 = vmatmul.f32.gmra.mxu0 %v5387
  %v5451 = vpop.f32.mrf.mxu0
  %v5452 = vadd.f32 0.0, %v5451
  %5453 = vmatmul.f32.gmra.mxu0 %v5390
  %v5454 = vpop.f32.mrf.mxu0
  %v5455 = vadd.f32 0.0, %v5454
  %5456 = vmatmul.f32.gmra.mxu0 %v5393
  %v5457 = vpop.f32.mrf.mxu0
  %v5458 = vadd.f32 0.0, %v5457
  %5459 = vmatmul.f32.gmra.mxu0 %v5396
  %v5460 = vpop.f32.mrf.mxu0
  %v5461 = vadd.f32 0.0, %v5460
  %5462 = vmatmul.f32.gmra.mxu0 %v5399
  %v5463 = vpop.f32.mrf.mxu0
  %v5464 = vadd.f32 0.0, %v5463
  %5465 = vmatmul.f32.gmra.mxu0 %v5402
  %v5466 = vpop.f32.mrf.mxu0
  %v5467 = vadd.f32 0.0, %v5466
  %5468 = vmatmul.f32.gmra.mxu0 %v5405
  %v5469 = vpop.f32.mrf.mxu0
  %v5470 = vadd.f32 0.0, %v5469
  %5471 = vmatmul.f32.gmra.mxu0 %v5408
  %v5472 = vpop.f32.mrf.mxu0
  %v5473 = vadd.f32 0.0, %v5472
  %5474 = vmatmul.f32.gmra.mxu0 %v5411
  %v5475 = vpop.f32.mrf.mxu0
  %v5476 = vadd.f32 0.0, %v5475
  %5477 = vmatmul.f32.gmra.mxu0 %v5414
  %v5478 = vpop.f32.mrf.mxu0
  %v5479 = vadd.f32 0.0, %v5478
  %5480 = vmatmul.f32.gmra.mxu0 %v5417
  %v5481 = vpop.f32.mrf.mxu0
  %v5482 = vadd.f32 0.0, %v5481
  %5483 = vmatmul.f32.gmra.mxu0 %v5420
  %v5484 = vpop.f32.mrf.mxu0
  %v5485 = vadd.f32 0.0, %v5484
  %5486 = vmatmul.f32.gmra.mxu0 %v5423
  %v5487 = vpop.f32.mrf.mxu0
  %v5488 = vadd.f32 0.0, %v5487
  %5489 = vmatmul.f32.gmra.mxu0 %v5426
  %v5490 = vpop.f32.mrf.mxu0
  %v5491 = vadd.f32 0.0, %v5490
  %5492 = vmatmul.f32.gmra.mxu0 %v5429
  %v5493 = vpop.f32.mrf.mxu0
  %v5494 = vadd.f32 0.0, %v5493
  %5495 = vdwg.mxu0
  %v5496 = vadd.f32 %v5349, %v5449
  %v5497 = vadd.f32 %v5350, %v5452
  %v5498 = vadd.f32 %v5351, %v5455
  %v5499 = vadd.f32 %v5352, %v5458
  %v5500 = vadd.f32 %v5353, %v5461
  %v5501 = vadd.f32 %v5354, %v5464
  %v5502 = vadd.f32 %v5355, %v5467
  %v5503 = vadd.f32 %v5356, %v5470
  %v5504 = vadd.f32 %v5357, %v5473
  %v5505 = vadd.f32 %v5358, %v5476
  %v5506 = vadd.f32 %v5359, %v5479
  %v5507 = vadd.f32 %v5360, %v5482
  %v5508 = vadd.f32 %v5361, %v5485
  %v5509 = vadd.f32 %v5362, %v5488
  %v5510 = vadd.f32 %v5363, %v5491
  %v5511 = vadd.f32 %v5364, %v5494
  %v5512 = vld [vmem:[%s2517 + $0x2] sm:$0xff]
  %v5513 = vld [vmem:[%s2517 + $0x12] sm:$0xff]
  %v5514 = vld [vmem:[%s2517 + $0x22] sm:$0xff]
  %v5515 = vld [vmem:[%s2517 + $0x32] sm:$0xff]
  %v5516 = vld [vmem:[%s2517 + $0x42] sm:$0xff]
  %v5517 = vld [vmem:[%s2517 + $0x52] sm:$0xff]
  %v5518 = vld [vmem:[%s2517 + $0x62] sm:$0xff]
  %v5519 = vld [vmem:[%s2517 + $0x72] sm:$0xff]
  %v5520 = vld [vmem:[%s2517 + $0xa2] sm:$0xff]
  %v5521 = vld [vmem:[%s2517 + $0xb2] sm:$0xff]
  %v5522 = vld [vmem:[%s2517 + $0xc2] sm:$0xff]
  %v5523 = vld [vmem:[%s2517 + $0xd2] sm:$0xff]
  %v5524 = vld [vmem:[%s2517 + $0xe2] sm:$0xff]
  %v5525 = vld [vmem:[%s2517 + $0xf2] sm:$0xff]
  %v5526 = vld [vmem:[%s2517 + $0x102] sm:$0xff]
  %v5527 = vld [vmem:[%s2517 + $0x112] sm:$0xff]
  %s5528 = scalar_lea.vmem %s9, 64
  %v5529 = vld [vmem:[%s5528] sm:$0xff]
  %v5531 = vsel %vm38, %v5512, 0
  %v5534 = vsel %vm38, %v5513, 0
  %v5537 = vsel %vm38, %v5514, 0
  %v5540 = vsel %vm38, %v5515, 0
  %v5543 = vsel %vm38, %v5516, 0
  %v5546 = vsel %vm38, %v5517, 0
  %v5549 = vsel %vm38, %v5518, 0
  %v5552 = vsel %vm38, %v5519, 0
  %v5555 = vsel %vm38, %v5520, 0
  %v5558 = vsel %vm38, %v5521, 0
  %v5561 = vsel %vm38, %v5522, 0
  %v5564 = vsel %vm38, %v5523, 0
  %v5567 = vsel %vm38, %v5524, 0
  %v5570 = vsel %vm38, %v5525, 0
  %v5573 = vsel %vm38, %v5526, 0
  %v5576 = vsel %vm38, %v5527, 0
  %5578 = vmatpush.msra.mxu0 0.0
  %5579 = vmatpush.msra.mxu0 0.0
  %5580 = vmatpush.msra.mxu0 0.0
  %5581 = vmatpush.msra.mxu0 0.0
  %5582 = vmatpush.msra.mxu0 0.0
  %5583 = vmatpush.msra.mxu0 0.0
  %5584 = vmatpush.msra.mxu0 0.0
  %5585 = vmatpush.msra.mxu0 0.0
  %5586 = vmatpush.msra.mxu0 0.0
  %5587 = vmatpush.msra.mxu0 0.0
  %5588 = vmatpush.msra.mxu0 0.0
  %5589 = vmatpush.msra.mxu0 0.0
  %5590 = vmatpush.msra.mxu0 0.0
  %5591 = vmatpush.msra.mxu0 0.0
  %5592 = vmatpush.msra.mxu0 0.0
  %5593 = vmatpush.msra.mxu0 %v5529
  %5594 = vmatmul.f32.gmra.mxu0 %v5531
  %v5595 = vpop.f32.mrf.mxu0
  %v5596 = vadd.f32 0.0, %v5595
  %5597 = vmatmul.f32.gmra.mxu0 %v5534
  %v5598 = vpop.f32.mrf.mxu0
  %v5599 = vadd.f32 0.0, %v5598
  %5600 = vmatmul.f32.gmra.mxu0 %v5537
  %v5601 = vpop.f32.mrf.mxu0
  %v5602 = vadd.f32 0.0, %v5601
  %5603 = vmatmul.f32.gmra.mxu0 %v5540
  %v5604 = vpop.f32.mrf.mxu0
  %v5605 = vadd.f32 0.0, %v5604
  %5606 = vmatmul.f32.gmra.mxu0 %v5543
  %v5607 = vpop.f32.mrf.mxu0
  %v5608 = vadd.f32 0.0, %v5607
  %5609 = vmatmul.f32.gmra.mxu0 %v5546
  %v5610 = vpop.f32.mrf.mxu0
  %v5611 = vadd.f32 0.0, %v5610
  %5612 = vmatmul.f32.gmra.mxu0 %v5549
  %v5613 = vpop.f32.mrf.mxu0
  %v5614 = vadd.f32 0.0, %v5613
  %5615 = vmatmul.f32.gmra.mxu0 %v5552
  %v5616 = vpop.f32.mrf.mxu0
  %v5617 = vadd.f32 0.0, %v5616
  %5618 = vmatmul.f32.gmra.mxu0 %v5555
  %v5619 = vpop.f32.mrf.mxu0
  %v5620 = vadd.f32 0.0, %v5619
  %5621 = vmatmul.f32.gmra.mxu0 %v5558
  %v5622 = vpop.f32.mrf.mxu0
  %v5623 = vadd.f32 0.0, %v5622
  %5624 = vmatmul.f32.gmra.mxu0 %v5561
  %v5625 = vpop.f32.mrf.mxu0
  %v5626 = vadd.f32 0.0, %v5625
  %5627 = vmatmul.f32.gmra.mxu0 %v5564
  %v5628 = vpop.f32.mrf.mxu0
  %v5629 = vadd.f32 0.0, %v5628
  %5630 = vmatmul.f32.gmra.mxu0 %v5567
  %v5631 = vpop.f32.mrf.mxu0
  %v5632 = vadd.f32 0.0, %v5631
  %5633 = vmatmul.f32.gmra.mxu0 %v5570
  %v5634 = vpop.f32.mrf.mxu0
  %v5635 = vadd.f32 0.0, %v5634
  %5636 = vmatmul.f32.gmra.mxu0 %v5573
  %v5637 = vpop.f32.mrf.mxu0
  %v5638 = vadd.f32 0.0, %v5637
  %5639 = vmatmul.f32.gmra.mxu0 %v5576
  %v5640 = vpop.f32.mrf.mxu0
  %v5641 = vadd.f32 0.0, %v5640
  %5642 = vdwg.mxu0
  %v5643 = vadd.f32 %v5496, %v5596
  %v5644 = vadd.f32 %v5497, %v5599
  %v5645 = vadd.f32 %v5498, %v5602
  %v5646 = vadd.f32 %v5499, %v5605
  %v5647 = vadd.f32 %v5500, %v5608
  %v5648 = vadd.f32 %v5501, %v5611
  %v5649 = vadd.f32 %v5502, %v5614
  %v5650 = vadd.f32 %v5503, %v5617
  %v5651 = vadd.f32 %v5504, %v5620
  %v5652 = vadd.f32 %v5505, %v5623
  %v5653 = vadd.f32 %v5506, %v5626
  %v5654 = vadd.f32 %v5507, %v5629
  %v5655 = vadd.f32 %v5508, %v5632
  %v5656 = vadd.f32 %v5509, %v5635
  %v5657 = vadd.f32 %v5510, %v5638
  %v5658 = vadd.f32 %v5511, %v5641
  %v5659 = vld [vmem:[%s10] sm:$0x1]
  %v5661 = vperm.slane %v5659, 0
  %v5663 = vadd.f32 %v5643, %v5661
  %v5664 = vadd.f32 %v5644, %v5661
  %v5665 = vadd.f32 %v5645, %v5661
  %v5666 = vadd.f32 %v5646, %v5661
  %v5667 = vadd.f32 %v5647, %v5661
  %v5668 = vadd.f32 %v5648, %v5661
  %v5669 = vadd.f32 %v5649, %v5661
  %v5670 = vadd.f32 %v5650, %v5661
  %v5671 = vadd.f32 %v5651, %v5661
  %v5672 = vadd.f32 %v5652, %v5661
  %v5673 = vadd.f32 %v5653, %v5661
  %v5674 = vadd.f32 %v5654, %v5661
  %v5675 = vadd.f32 %v5655, %v5661
  %v5676 = vadd.f32 %v5656, %v5661
  %v5677 = vadd.f32 %v5657, %v5661
  %v5678 = vadd.f32 %v5658, %v5661
  %v5679 = vadd.f32 %v5663, %v2995
  %v5680 = vadd.f32 %v5664, %v2996
  %v5681 = vadd.f32 %v5665, %v2997
  %v5682 = vadd.f32 %v5666, %v2998
  %v5683 = vadd.f32 %v5667, %v2999
  %v5684 = vadd.f32 %v5668, %v3000
  %v5685 = vadd.f32 %v5669, %v3001
  %v5686 = vadd.f32 %v5670, %v3002
  %v5687 = vadd.f32 %v5671, %v3003
  %v5688 = vadd.f32 %v5672, %v3004
  %v5689 = vadd.f32 %v5673, %v3005
  %v5690 = vadd.f32 %v5674, %v3006
  %v5691 = vadd.f32 %v5675, %v3007
  %v5692 = vadd.f32 %v5676, %v3008
  %v5693 = vadd.f32 %v5677, %v3009
  %v5694 = vadd.f32 %v5678, %v3010
  %v5695 = vmax.f32 %v5679, 0.0
  %v5696 = vmax.f32 %v5680, 0.0
  %v5697 = vmax.f32 %v5681, 0.0
  %v5698 = vmax.f32 %v5682, 0.0
  %v5699 = vmax.f32 %v5683, 0.0
  %v5700 = vmax.f32 %v5684, 0.0
  %v5701 = vmax.f32 %v5685, 0.0
  %v5702 = vmax.f32 %v5686, 0.0
  %v5703 = vmax.f32 %v5687, 0.0
  %v5704 = vmax.f32 %v5688, 0.0
  %v5705 = vmax.f32 %v5689, 0.0
  %v5706 = vmax.f32 %v5690, 0.0
  %v5707 = vmax.f32 %v5691, 0.0
  %v5708 = vmax.f32 %v5692, 0.0
  %v5709 = vmax.f32 %v5693, 0.0
  %v5710 = vmax.f32 %v5694, 0.0
  %5711 = vxpose.xlu0.b32.start [1/16] %v5695, 128
  %5712 = vxpose.xlu0.b32.cont [2/16] %v5696, 128
  %5713 = vxpose.xlu0.b32.cont [3/16] %v5697, 128
  %5714 = vxpose.xlu0.b32.cont [4/16] %v5698, 128
  %5715 = vxpose.xlu0.b32.cont [5/16] %v5699, 128
  %5716 = vxpose.xlu0.b32.cont [6/16] %v5700, 128
  %5717 = vxpose.xlu0.b32.cont [7/16] %v5701, 128
  %5718 = vxpose.xlu0.b32.cont [8/16] %v5702, 128
  %5719 = vxpose.xlu0.b32.cont [9/16] %v5703, 128
  %5720 = vxpose.xlu0.b32.cont [10/16] %v5704, 128
  %5721 = vxpose.xlu0.b32.cont [11/16] %v5705, 128
  %5722 = vxpose.xlu0.b32.cont [12/16] %v5706, 128
  %5723 = vxpose.xlu0.b32.cont [13/16] %v5707, 128
  %5724 = vxpose.xlu0.b32.cont [14/16] %v5708, 128
  %5725 = vxpose.xlu0.b32.cont [15/16] %v5709, 128
  %5726 = vxpose.xlu0.b32.end [16/16] %v5710, 128
  %v5727 = vpop.trf.xlu0
  %v5728 = vpop.trf.xlu0
  %v5729 = vpop.trf.xlu0
  %v5730 = vpop.trf.xlu0
  %v5731 = vpop.trf.xlu0
  %v5732 = vpop.trf.xlu0
  %v5733 = vpop.trf.xlu0
  %v5734 = vpop.trf.xlu0
  %v5735 = vpop.trf.xlu0
  %v5736 = vpop.trf.xlu0
  %v5737 = vpop.trf.xlu0
  %v5738 = vpop.trf.xlu0
  %v5739 = vpop.trf.xlu0
  %v5740 = vpop.trf.xlu0
  %v5741 = vpop.trf.xlu0
  %v5742 = vpop.trf.xlu0
  %5743 = vst [vmem:[%s11] sm:$0xff] %v5727
  // Predicated region
  $region46: #{_lambda_.1} parent=0 // pred_check
    _
  $region47: #{_lambda_.1} parent=0 // pred_check_branch
    %5745 = sbr.rel (0) target = $region49
  $region48: #{_lambda_.1} parent=0 // pred_region
    _
  $region49: #{_lambda_.1} parent=0 // pred_fallthru
    _
  // Predicated region
  $region50: #{_lambda_.1} parent=0 // pred_check
    _
  $region51: #{_lambda_.1} parent=0 // pred_check_branch
    %5747 = sbr.rel (0) target = $region53
  $region52: #{_lambda_.1} parent=0 // pred_region
    _
  $region53: #{_lambda_.1} parent=0 // pred_fallthru
    _

</llo_original>
